<compile_context>
chip_gen: v6e
topology: v6e:2x2x1
jax: 0.10.0
libtpu: 0.0.40
codegen_flags: <defaults>
</compile_context>

<pallas_src>
import functools

import jax
import jax.numpy as jnp
from jax.experimental import pallas as pl
from jax.experimental.pallas import tpu as pltpu

FC1_DIMS = 1024
FC2_DIMS = 512
LANE = 128      # TPU lane width; tiny fc3 output dim is padded to this.
SUBLANE = 8     # sublane granule; batch is padded to a multiple of this.


def _mlp_kernel(x_ref, w1_ref, b1_ref, w2_ref, b2_ref, w3_ref, b3_ref, o_ref):
    # Weights arrive as bf16 (prepared once); biases are f32.  Cast activations
    # to bf16 so every matmul runs in the MXU's native bf16 mode with f32 acc.
    x = x_ref[...].astype(jnp.bfloat16)

    # fc1 + ReLU  (K=4 is heavily zero-padded on the MXU; negligible cost.)
    h1 = jnp.dot(x, w1_ref[...], preferred_element_type=jnp.float32)
    h1 = jnp.maximum(h1 + b1_ref[...], 0.0)

    # fc2 + ReLU
    h2 = jnp.dot(h1.astype(jnp.bfloat16), w2_ref[...],
                 preferred_element_type=jnp.float32)
    h2 = jnp.maximum(h2 + b2_ref[...], 0.0)

    # fc3 (no activation); output columns are padded to 128 lanes so the final
    # store is an unmasked, lane-dense vst.
    out = jnp.dot(h2.astype(jnp.bfloat16), w3_ref[...],
                  preferred_element_type=jnp.float32)
    o_ref[...] = (out + b3_ref[...]).astype(o_ref.dtype)


def prepare_params(params):
    """One-time parameter preparation (call once, reuse every forward).

    Weights -> bf16, fc3 weight/bias zero-padded to a 128-lane output.
    Biases stay f32.  Input layout: w* are (in_features, out_features),
    b* are (1, out_features).
    """
    num_actions = params["w3"].shape[1]
    n_pad = LANE * pl.cdiv(num_actions, LANE)
    prep = {
        "w1": params["w1"].astype(jnp.bfloat16),
        "b1": params["b1"].astype(jnp.float32),
        "w2": params["w2"].astype(jnp.bfloat16),
        "b2": params["b2"].astype(jnp.float32),
        "w3": jnp.pad(params["w3"].astype(jnp.bfloat16),
                      ((0, 0), (0, n_pad - num_actions))),
        "b3": jnp.pad(params["b3"].astype(jnp.float32),
                      ((0, 0), (0, n_pad - num_actions))),
    }
    return prep, num_actions


def _choose_tile(batch, max_tb):
    """Pick (padded_batch, batch_tile).

    * batch padded to the 8-row sublane granule only (no 128-row waste).
    * tile targets >= 2 grid steps so v7x's two TensorCores both get work.
    * tile capped at max_tb (default 512 -> ~3 MiB live activations per tile)
      so the same choice fits v5e/v6e (128 MiB VMEM) and v7x (64 MiB).
    """
    pb = SUBLANE * pl.cdiv(batch, SUBLANE)
    if pb <= SUBLANE:                      # tiny batch: one 8-row tile
        return pb, pb
    tb = min(max_tb, SUBLANE * pl.cdiv(pl.cdiv(pb, 2), SUBLANE))
    n_tiles = pl.cdiv(pb, tb)
    return n_tiles * tb, tb


@functools.partial(jax.jit, static_argnames=("num_actions", "max_block_batch"))
def _forward_impl(x, prep, *, num_actions, max_block_batch=512):
    batch, in_dim = x.shape
    n_pad = prep["w3"].shape[1]            # fc3 out-dim, already 128-padded

    padded_batch, tb = _choose_tile(batch, max_block_batch)
    if padded_batch != batch:
        x = jnp.pad(x, ((0, padded_batch - batch), (0, 0)))
    n_tiles = padded_batch // tb

    # Batch-tiled x / out; grid-invariant (VMEM-resident) weights and biases.
    x_spec = pl.BlockSpec((tb, in_dim), lambda i: (i, 0))
    o_spec = pl.BlockSpec((tb, n_pad), lambda i: (i, 0))
    const = lambda shape: pl.BlockSpec(shape, lambda i: (0, 0))

    out_padded = pl.pallas_call(
        _mlp_kernel,
        out_shape=jax.ShapeDtypeStruct((padded_batch, n_pad), jnp.float32),
        grid=(n_tiles,),
        in_specs=[
            x_spec,
            const((in_dim, FC1_DIMS)), const((1, FC1_DIMS)),
            const((FC1_DIMS, FC2_DIMS)), const((1, FC2_DIMS)),
            const((FC2_DIMS, n_pad)), const((1, n_pad)),
        ],
        out_specs=o_spec,
        compiler_params=pltpu.CompilerParams(
            dimension_semantics=("parallel",),   # megacore: shard batch tiles
            vmem_limit_bytes=32 << 20,           # footprint <= ~9 MiB at tb=512
        ),
    )(x, prep["w1"], prep["b1"], prep["w2"], prep["b2"],
      prep["w3"], prep["b3"])

    # NOTE: for best latency, fuse downstream consumers (argmax / TD targets)
    # into the same jit so this slice does not become a standalone XLA op.
    return out_padded[:batch, :num_actions]


def network_forward(x, prepared_params, num_actions, *, max_block_batch=512):
    """Forward pass.  `prepared_params` must come from prepare_params()."""
    return _forward_impl(x, prepared_params, num_actions=num_actions,
                         max_block_batch=max_block_batch)


def init_params(key, in_dim, num_actions):
    """Deterministic init matching PyTorch nn.Linear default:
    uniform(-1/sqrt(fan_in), 1/sqrt(fan_in)) for both weights and biases."""
    ks = jax.random.split(key, 6)

    def linear(kw, kb, fan_in, fan_out):
        bound = 1.0 / jnp.sqrt(jnp.float32(fan_in))
        w = jax.random.uniform(kw, (fan_in, fan_out), jnp.float32, -bound, bound)
        b = jax.random.uniform(kb, (1, fan_out), jnp.float32, -bound, bound)
        return w, b

    w1, b1 = linear(ks[0], ks[1], in_dim, FC1_DIMS)
    w2, b2 = linear(ks[2], ks[3], FC1_DIMS, FC2_DIMS)
    w3, b3 = linear(ks[4], ks[5], FC2_DIMS, num_actions)
    return dict(w1=w1, b1=b1, w2=w2, b2=b2, w3=w3, b3=b3)


# TODO(synk): optimizer (Adam) and MSELoss from the PyTorch module are training
# infrastructure, not part of the forward pass, and are not implemented here.

if __name__ == "__main__":
    # CartPole: observation dim 4, 2 actions.
    in_dim, num_actions = 4, 2

    key = jax.random.PRNGKey(0)
    k_params, k_x = jax.random.split(key)
    params = init_params(k_params, in_dim, num_actions)
    prep, _ = prepare_params(params)   # one-time weight prep (cached)

    # Reference in plain JAX, emulating the bf16 weight/activation rounding
    # with f32 accumulation (kernel uses bf16 MXU mode, f32 biases).
    def ref_forward(xv):
        f32 = lambda a: a.astype(jnp.float32)
        b16 = lambda a: a.astype(jnp.bfloat16)
        w1, w2, w3 = (f32(b16(params[k])) for k in ("w1", "w2", "w3"))
        b1, b2, b3 = (f32(params[k]) for k in ("b1", "b2", "b3"))
        h1 = jnp.maximum(f32(b16(xv)) @ w1 + b1, 0.0)
        h2 = jnp.maximum(f32(b16(h1)) @ w2 + b2, 0.0)
        return f32(b16(h2)) @ w3 + b3

    # batch=256 exercises the multi-tile (2-step grid) path; batch=3 exercises
    # the pad-to-8 small-inference path.
    for batch in (256, 3):
        xv = jax.random.normal(jax.random.fold_in(k_x, batch),
                               (batch, in_dim), jnp.float32)
        out = jax.block_until_ready(network_forward(xv, prep, num_actions))
        ref = ref_forward(xv)
        assert out.shape == (batch, num_actions)
        assert jnp.allclose(out, ref, atol=1e-2, rtol=1e-2), (
            batch, float(jnp.max(jnp.abs(out - ref))))

    print("KERNEL_OK")
</pallas_src>

<mosaic_0001>
module attributes {stable_mosaic.version = 11 : i64} {
  func.func @_mlp_kernel(%arg0: i32, %arg1: memref<128x4xf32, #tpu.memory_space<vmem>>, %arg2: memref<4x1024xbf16, #tpu.memory_space<vmem>>, %arg3: memref<1x1024xf32, #tpu.memory_space<vmem>>, %arg4: memref<1024x512xbf16, #tpu.memory_space<vmem>>, %arg5: memref<1x512xf32, #tpu.memory_space<vmem>>, %arg6: memref<512x128xbf16, #tpu.memory_space<vmem>>, %arg7: memref<1x128xf32, #tpu.memory_space<vmem>>, %arg8: memref<128x128xf32, #tpu.memory_space<vmem>>) attributes {dimension_semantics = [#tpu.dimension_semantics<parallel>], iteration_bounds = array<i64: 2>, scalar_prefetch = 0 : i64, scratch_operands = 0 : i64, tpu.core_type = #tpu.core_type<tc>, window_params = [{transform_indices = @transform_0, window_bounds = array<i64: 128, 4>}, {pipeline_mode = #tpu.pipeline_mode<synchronous>, transform_indices = @transform_1, window_bounds = array<i64: 4, 1024>}, {pipeline_mode = #tpu.pipeline_mode<synchronous>, transform_indices = @transform_2, window_bounds = array<i64: 1, 1024>}, {pipeline_mode = #tpu.pipeline_mode<synchronous>, transform_indices = @transform_3, window_bounds = array<i64: 1024, 512>}, {pipeline_mode = #tpu.pipeline_mode<synchronous>, transform_indices = @transform_4, window_bounds = array<i64: 1, 512>}, {pipeline_mode = #tpu.pipeline_mode<synchronous>, transform_indices = @transform_5, window_bounds = array<i64: 512, 128>}, {pipeline_mode = #tpu.pipeline_mode<synchronous>, transform_indices = @transform_6, window_bounds = array<i64: 1, 128>}, {transform_indices = @transform_7, window_bounds = array<i64: 128, 128>}]} {
    %c0 = arith.constant 0 : index
    %c0_0 = arith.constant 0 : index
    %0 = vector.load %arg1[%c0, %c0_0] : memref<128x4xf32, #tpu.memory_space<vmem>>, vector<128x4xf32>
    %1 = arith.truncf %0 : vector<128x4xf32> to vector<128x4xbf16>
    %c0_1 = arith.constant 0 : index
    %c0_2 = arith.constant 0 : index
    %2 = vector.load %arg2[%c0_1, %c0_2] : memref<4x1024xbf16, #tpu.memory_space<vmem>>, vector<4x1024xbf16>
    %cst = arith.constant dense<0.000000e+00> : vector<128x1024xf32>
    %3 = tpu.matmul %1, %2, %cst {dimension_numbers = #tpu.dot_dimension_numbers<[1], [0], [0], [1], [0, 0, 1, 1], [], []>} : vector<128x4xbf16>, vector<4x1024xbf16>, vector<128x1024xf32> -> vector<128x1024xf32>
    %c0_3 = arith.constant 0 : index
    %c0_4 = arith.constant 0 : index
    %4 = vector.load %arg3[%c0_3, %c0_4] : memref<1x1024xf32, #tpu.memory_space<vmem>>, vector<1x1024xf32>
    %5 = vector.broadcast %4 : vector<1x1024xf32> to vector<128x1024xf32>
    %6 = arith.addf %3, %5 : vector<128x1024xf32>
    %cst_5 = arith.constant 0.000000e+00 : f32
    %7 = vector.broadcast %cst_5 : f32 to vector<128x1024xf32>
    %8 = arith.maximumf %6, %7 : vector<128x1024xf32>
    %9 = arith.truncf %8 : vector<128x1024xf32> to vector<128x1024xbf16>
    %c0_6 = arith.constant 0 : index
    %c0_7 = arith.constant 0 : index
    %10 = vector.load %arg4[%c0_6, %c0_7] : memref<1024x512xbf16, #tpu.memory_space<vmem>>, vector<1024x512xbf16>
    %cst_8 = arith.constant dense<0.000000e+00> : vector<128x512xf32>
    %11 = tpu.matmul %9, %10, %cst_8 {dimension_numbers = #tpu.dot_dimension_numbers<[1], [0], [0], [1], [0, 0, 1, 1], [], []>} : vector<128x1024xbf16>, vector<1024x512xbf16>, vector<128x512xf32> -> vector<128x512xf32>
    %c0_9 = arith.constant 0 : index
    %c0_10 = arith.constant 0 : index
    %12 = vector.load %arg5[%c0_9, %c0_10] : memref<1x512xf32, #tpu.memory_space<vmem>>, vector<1x512xf32>
    %13 = vector.broadcast %12 : vector<1x512xf32> to vector<128x512xf32>
    %14 = arith.addf %11, %13 : vector<128x512xf32>
    %cst_11 = arith.constant 0.000000e+00 : f32
    %15 = vector.broadcast %cst_11 : f32 to vector<128x512xf32>
    %16 = arith.maximumf %14, %15 : vector<128x512xf32>
    %17 = arith.truncf %16 : vector<128x512xf32> to vector<128x512xbf16>
    %c0_12 = arith.constant 0 : index
    %c0_13 = arith.constant 0 : index
    %18 = vector.load %arg6[%c0_12, %c0_13] : memref<512x128xbf16, #tpu.memory_space<vmem>>, vector<512x128xbf16>
    %cst_14 = arith.constant dense<0.000000e+00> : vector<128x128xf32>
    %19 = tpu.matmul %17, %18, %cst_14 {dimension_numbers = #tpu.dot_dimension_numbers<[1], [0], [0], [1], [0, 0, 1, 1], [], []>} : vector<128x512xbf16>, vector<512x128xbf16>, vector<128x128xf32> -> vector<128x128xf32>
    %c0_15 = arith.constant 0 : index
    %c0_16 = arith.constant 0 : index
    %20 = vector.load %arg7[%c0_15, %c0_16] : memref<1x128xf32, #tpu.memory_space<vmem>>, vector<1x128xf32>
    %21 = vector.broadcast %20 : vector<1x128xf32> to vector<128x128xf32>
    %22 = arith.addf %19, %21 : vector<128x128xf32>
    %c0_17 = arith.constant 0 : index
    %c0_18 = arith.constant 0 : index
    %23 = vector.load %arg8[%c0_17, %c0_18] : memref<128x128xf32, #tpu.memory_space<vmem>>, vector<128x128xf32>
    tpu.vector_store %arg8[%c0_17, %c0_18], %22 {strides = array<i32>} : memref<128x128xf32, #tpu.memory_space<vmem>>, vector<128x128xf32>,
    return
  }
  func.func @transform_0(%arg0: i32) -> (i32, i32) {
    %c0_i32 = arith.constant 0 : i32
    %c0_i32_0 = arith.constant 0 : i32
    return %arg0, %c0_i32 : i32, i32
  }
  func.func @transform_1(%arg0: i32) -> (i32, i32) {
    %c0_i32 = arith.constant 0 : i32
    %c0_i32_0 = arith.constant 0 : i32
    %c0_i32_1 = arith.constant 0 : i32
    return %c0_i32, %c0_i32_0 : i32, i32
  }
  func.func @transform_2(%arg0: i32) -> (i32, i32) {
    %c0_i32 = arith.constant 0 : i32
    %c0_i32_0 = arith.constant 0 : i32
    %c0_i32_1 = arith.constant 0 : i32
    return %c0_i32, %c0_i32_0 : i32, i32
  }
  func.func @transform_3(%arg0: i32) -> (i32, i32) {
    %c0_i32 = arith.constant 0 : i32
    %c0_i32_0 = arith.constant 0 : i32
    %c0_i32_1 = arith.constant 0 : i32
    return %c0_i32, %c0_i32_0 : i32, i32
  }
  func.func @transform_4(%arg0: i32) -> (i32, i32) {
    %c0_i32 = arith.constant 0 : i32
    %c0_i32_0 = arith.constant 0 : i32
    %c0_i32_1 = arith.constant 0 : i32
    return %c0_i32, %c0_i32_0 : i32, i32
  }
  func.func @transform_5(%arg0: i32) -> (i32, i32) {
    %c0_i32 = arith.constant 0 : i32
    %c0_i32_0 = arith.constant 0 : i32
    %c0_i32_1 = arith.constant 0 : i32
    return %c0_i32, %c0_i32_0 : i32, i32
  }
  func.func @transform_6(%arg0: i32) -> (i32, i32) {
    %c0_i32 = arith.constant 0 : i32
    %c0_i32_0 = arith.constant 0 : i32
    %c0_i32_1 = arith.constant 0 : i32
    return %c0_i32, %c0_i32_0 : i32, i32
  }
  func.func @transform_7(%arg0: i32) -> (i32, i32) {
    %c0_i32 = arith.constant 0 : i32
    %c0_i32_0 = arith.constant 0 : i32
    return %arg0, %c0_i32 : i32, i32
  }
}

</mosaic_0001>

<llo_original>
// kernel: _forward_impl.1
$region0: #{_forward_impl.1}
  #allocation0 [shape = 'u32[]', space=smem, size = 0x4, offset = 0x4, fixed_abs, tag = 'smem constant byte address 0x4 - core index']
  #allocation1 [shape = 'u32[144,128]{1,0:T(1,128)}', space=vmem, size = 0x12000, scoped, tag = 'internal scratch']
  %s0 = inlined_call_operand.vmem [shape: f32[256,4], index: 0, kind: input, shape index: {}]
  %s1 = inlined_call_operand.vmem [shape: bf16[4,1024], index: 1, kind: input, shape index: {}]
  %s2 = inlined_call_operand.hbm [shape: f32[1,1024], index: 2, kind: input, shape index: {}]
  %s3 = inlined_call_operand.hbm [shape: bf16[1024,512], index: 3, kind: input, shape index: {}]
  %s4 = inlined_call_operand.hbm [shape: f32[1,512], index: 4, kind: input, shape index: {}]
  %s5 = inlined_call_operand.vmem [shape: bf16[512,128], index: 5, kind: input, shape index: {}]
  %s6 = inlined_call_operand.vmem [shape: f32[1,128], index: 6, kind: input, shape index: {}]
  %s7 = inlined_call_operand.vmem [shape: f32[256,128], index: 7, kind: output, shape index: {}]
  %s8 = sld [smem:[#allocation0]]
  $region73: #{_forward_impl.1} parent=0
    _
  %s10 = ssub.s32 1, %s8
  %s11 = scalar_select 0, %s10, %s8
  $region1: #{_forward_impl.1} parent=0
    #allocation2 [shape = 'u8[4096]{0}', space=vmem, size = 0x1000, scoped, tag = 'input window, operand 2, single buffered']
    #allocation3 [shape = 's32[2]{0}', space=sflag, size = 0x8, scoped, tag = 'scoped memory for _forward_impl.1']
    #allocation4 [shape = 'u8[1048576]{0}', space=vmem, size = 0x100000, scoped, tag = 'input window, operand 3, single buffered']
    #allocation5 [shape = 's32[1]{0}', space=sflag, size = 0x4, scoped, tag = 'scoped memory for _forward_impl.1']
    #allocation6 [shape = 'u8[2048]{0}', space=vmem, size = 0x800, scoped, tag = 'input window, operand 4, single buffered']
    %12 = vsyncpa [#allocation3], 0
    %13 = vsyncpa [#allocation5], 0
    loop: start=0, step=1, limit=4
    $region2: #{_forward_impl.1} parent=1 // loop_pre_header
      _
    $region3: #{_forward_impl.1} parent=1 // loop_header
      %s15 = sphi 0, %s19
      %p16 = scmp.ge.s32.totalorder %s15, 4
      %s25 = sphi 0, %s27
      %s28 = sphi 0, %s25
      %s29 = sphi 0, %s28
      %s45 = sphi 0, %s29
      %s49 = sphi 0, %s49
      %s51 = sphi 0, %s49
      %s52 = sphi 0, %s51
      %s66 = sphi 0, %s52
      %s70 = sphi 0, %s70
      %s72 = sphi 0, %s70
      %s73 = sphi 0, %s72
      %s87 = sphi 0, %s73
      %s91 = sphi 0, %s91
      %s93 = sphi 0, %s91
      %s94 = sphi 0, %s93
      %s108 = sphi 0, %s94
      %s112 = sphi 0, %s112
      %s114 = sphi 0, %s112
      %s115 = sphi 0, %s114
      %s129 = sphi 0, %s115
      %s133 = sphi 0, %s133
      %s135 = sphi 0, %s133
      %s136 = sphi 0, %s135
      %s150 = sphi 0, %s136
      %s154 = sphi 0, %s154
      %s156 = sphi 0, %s154
      %s157 = sphi 0, %s156
      %s171 = sphi 0, %s157
      %s177 = sphi 0, %s179
      %s180 = sphi 0, %s177
      %s181 = sphi 0, %s180
      %s197 = sphi 0, %s181
    $region4: #{_forward_impl.1} parent=1 // loop_header_branch
      %18 = sbr.rel (%p16) target = $region8
    $region5: #{_forward_impl.1} parent=1 // loop_body
      %s20 = ssub.s32 %s15, 1
      %s21 = ssub.s32 %s15, 2
      %s22 = sadd.s32 %s15, 1
      %s23 = ssub.s32 %s15, %s22
      %p24 = scmp.eq.s32.totalorder %s23, 0
      %s26 = sadd.s32 %s25, 1
      %s27 = scalar_select %p24, %s25, %s26
      %p30 = pneg %p24
      %p31 = scmp.eq.s32.totalorder %s15, 1
      %p32 = por %p30, %p31
      %p33 = scmp.ne.s32.totalorder %s25, %s28
      %p34 = scmp.eq.s32.totalorder %s15, 0
      %p35 = por %p33, %p34
      %p36 = scmp.ne.s32.totalorder %s25, %s28
      %p37 = scmp.eq.s32.totalorder %s20, 1
      %p38 = por %p36, %p37
      %p39 = scmp.ne.s32.totalorder %s28, %s29
      %p40 = scmp.eq.s32.totalorder %s20, 0
      %p41 = por %p39, %p40
      %p42 = scmp.ne.s32.totalorder %s28, %s29
      %p43 = scmp.eq.s32.totalorder %s21, 1
      %p44 = por %p42, %p43
      %p46 = scmp.ne.s32.totalorder %s29, %s45
      %p47 = scmp.eq.s32.totalorder %s21, 0
      %p48 = por %p46, %p47
      %s50 = sadd.s32 %s49, 1
      %p53 = scmp.eq.s32.totalorder %s15, 1
      %p54 = scmp.ne.s32.totalorder %s49, %s51
      %p55 = scmp.eq.s32.totalorder %s15, 0
      %p56 = por %p54, %p55
      %p57 = scmp.ne.s32.totalorder %s49, %s51
      %p58 = scmp.eq.s32.totalorder %s20, 1
      %p59 = por %p57, %p58
      %p60 = scmp.ne.s32.totalorder %s51, %s52
      %p61 = scmp.eq.s32.totalorder %s20, 0
      %p62 = por %p60, %p61
      %p63 = scmp.ne.s32.totalorder %s51, %s52
      %p64 = scmp.eq.s32.totalorder %s21, 1
      %p65 = por %p63, %p64
      %p67 = scmp.ne.s32.totalorder %s52, %s66
      %p68 = scmp.eq.s32.totalorder %s21, 0
      %p69 = por %p67, %p68
      %s71 = sadd.s32 %s70, 1
      %p74 = scmp.eq.s32.totalorder %s15, 1
      %p75 = scmp.ne.s32.totalorder %s70, %s72
      %p76 = scmp.eq.s32.totalorder %s15, 0
      %p77 = por %p75, %p76
      %p78 = scmp.ne.s32.totalorder %s70, %s72
      %p79 = scmp.eq.s32.totalorder %s20, 1
      %p80 = por %p78, %p79
      %p81 = scmp.ne.s32.totalorder %s72, %s73
      %p82 = scmp.eq.s32.totalorder %s20, 0
      %p83 = por %p81, %p82
      %p84 = scmp.ne.s32.totalorder %s72, %s73
      %p85 = scmp.eq.s32.totalorder %s21, 1
      %p86 = por %p84, %p85
      %p88 = scmp.ne.s32.totalorder %s73, %s87
      %p89 = scmp.eq.s32.totalorder %s21, 0
      %p90 = por %p88, %p89
      %s92 = sadd.s32 %s91, 1
      %p95 = scmp.eq.s32.totalorder %s15, 1
      %p96 = scmp.ne.s32.totalorder %s91, %s93
      %p97 = scmp.eq.s32.totalorder %s15, 0
      %p98 = por %p96, %p97
      %p99 = scmp.ne.s32.totalorder %s91, %s93
      %p100 = scmp.eq.s32.totalorder %s20, 1
      %p101 = por %p99, %p100
      %p102 = scmp.ne.s32.totalorder %s93, %s94
      %p103 = scmp.eq.s32.totalorder %s20, 0
      %p104 = por %p102, %p103
      %p105 = scmp.ne.s32.totalorder %s93, %s94
      %p106 = scmp.eq.s32.totalorder %s21, 1
      %p107 = por %p105, %p106
      %p109 = scmp.ne.s32.totalorder %s94, %s108
      %p110 = scmp.eq.s32.totalorder %s21, 0
      %p111 = por %p109, %p110
      %s113 = sadd.s32 %s112, 1
      %p116 = scmp.eq.s32.totalorder %s15, 1
      %p117 = scmp.ne.s32.totalorder %s112, %s114
      %p118 = scmp.eq.s32.totalorder %s15, 0
      %p119 = por %p117, %p118
      %p120 = scmp.ne.s32.totalorder %s112, %s114
      %p121 = scmp.eq.s32.totalorder %s20, 1
      %p122 = por %p120, %p121
      %p123 = scmp.ne.s32.totalorder %s114, %s115
      %p124 = scmp.eq.s32.totalorder %s20, 0
      %p125 = por %p123, %p124
      %p126 = scmp.ne.s32.totalorder %s114, %s115
      %p127 = scmp.eq.s32.totalorder %s21, 1
      %p128 = por %p126, %p127
      %p130 = scmp.ne.s32.totalorder %s115, %s129
      %p131 = scmp.eq.s32.totalorder %s21, 0
      %p132 = por %p130, %p131
      %s134 = sadd.s32 %s133, 1
      %p137 = scmp.eq.s32.totalorder %s15, 1
      %p138 = scmp.ne.s32.totalorder %s133, %s135
      %p139 = scmp.eq.s32.totalorder %s15, 0
      %p140 = por %p138, %p139
      %p141 = scmp.ne.s32.totalorder %s133, %s135
      %p142 = scmp.eq.s32.totalorder %s20, 1
      %p143 = por %p141, %p142
      %p144 = scmp.ne.s32.totalorder %s135, %s136
      %p145 = scmp.eq.s32.totalorder %s20, 0
      %p146 = por %p144, %p145
      %p147 = scmp.ne.s32.totalorder %s135, %s136
      %p148 = scmp.eq.s32.totalorder %s21, 1
      %p149 = por %p147, %p148
      %p151 = scmp.ne.s32.totalorder %s136, %s150
      %p152 = scmp.eq.s32.totalorder %s21, 0
      %p153 = por %p151, %p152
      %s155 = sadd.s32 %s154, 1
      %p158 = scmp.eq.s32.totalorder %s15, 1
      %p159 = scmp.ne.s32.totalorder %s154, %s156
      %p160 = scmp.eq.s32.totalorder %s15, 0
      %p161 = por %p159, %p160
      %p162 = scmp.ne.s32.totalorder %s154, %s156
      %p163 = scmp.eq.s32.totalorder %s20, 1
      %p164 = por %p162, %p163
      %p165 = scmp.ne.s32.totalorder %s156, %s157
      %p166 = scmp.eq.s32.totalorder %s20, 0
      %p167 = por %p165, %p166
      %p168 = scmp.ne.s32.totalorder %s156, %s157
      %p169 = scmp.eq.s32.totalorder %s21, 1
      %p170 = por %p168, %p169
      %p172 = scmp.ne.s32.totalorder %s157, %s171
      %p173 = scmp.eq.s32.totalorder %s21, 0
      %p174 = por %p172, %p173
      %s175 = ssub.s32 %s15, %s22
      %p176 = scmp.eq.s32.totalorder %s175, 0
      %s178 = sadd.s32 %s177, 1
      %s179 = scalar_select %p176, %s177, %s178
      %p182 = pneg %p176
      %p183 = scmp.eq.s32.totalorder %s15, 1
      %p184 = por %p182, %p183
      %p185 = scmp.ne.s32.totalorder %s177, %s180
      %p186 = scmp.eq.s32.totalorder %s15, 0
      %p187 = por %p185, %p186
      %p188 = scmp.ne.s32.totalorder %s177, %s180
      %p189 = scmp.eq.s32.totalorder %s20, 1
      %p190 = por %p188, %p189
      %p191 = scmp.ne.s32.totalorder %s180, %s181
      %p192 = scmp.eq.s32.totalorder %s20, 0
      %p193 = por %p191, %p192
      %p194 = scmp.ne.s32.totalorder %s180, %s181
      %p195 = scmp.eq.s32.totalorder %s21, 1
      %p196 = por %p194, %p195
      %p198 = scmp.ne.s32.totalorder %s181, %s197
      %p199 = scmp.eq.s32.totalorder %s21, 0
      %p200 = por %p198, %p199
      %p201 = scmp.le.s32.totalorder 1, %s15
      %p202 = scmp.lt.s32.totalorder %s15, 3
      %p203 = pnand %p201, %p202
      %p204 = pneg %p203
      // Predicated region
      $region9: #{_forward_impl.1} parent=5 // pred_check
        _
      $region10: #{_forward_impl.1} parent=5 // pred_check_branch
        %206 = sbr.rel (%p203) target = $region12
      $region11: #{_forward_impl.1} parent=5 // pred_region
        %s207 = ssub.s32 %s15, 1
        // Predicated region
        $region13: #{_forward_impl.1} parent=11 // pred_check
          %p208 = pneg %p62
        $region14: #{_forward_impl.1} parent=11 // pred_check_branch
          %210 = sbr.rel (%p208) target = $region16
        $region15: #{_forward_impl.1} parent=11 // pred_region
          _
        $region16: #{_forward_impl.1} parent=11 // pred_fallthru
          _
        // Predicated region
        $region17: #{_forward_impl.1} parent=11 // pred_check
          %p211 = pneg %p83
        $region18: #{_forward_impl.1} parent=11 // pred_check_branch
          %213 = sbr.rel (%p211) target = $region20
        $region19: #{_forward_impl.1} parent=11 // pred_region
          %s215 = ssub.s32 128, 128
          %216 = vsyncadd [#allocation3], %s215
          %s218 = sshll.u32 [#allocation2], 4
          %s219 = int_to_ptr.vmem [resolvable:$true] %s218
          %221 = dma.hbm_to_vmem [thread:$0]  %s2, 128, %s219, [#allocation3]
        $region20: #{_forward_impl.1} parent=11 // pred_fallthru
          _
        // Predicated region
        $region21: #{_forward_impl.1} parent=11 // pred_check
          %p222 = pneg %p104
        $region22: #{_forward_impl.1} parent=11 // pred_check_branch
          %224 = sbr.rel (%p222) target = $region24
        $region23: #{_forward_impl.1} parent=11 // pred_region
          %s226 = ssub.s32 32768, 32768
          %227 = vsyncadd [#allocation5], %s226
          %s228 = sshll.u32 [#allocation4], 4
          %s229 = int_to_ptr.vmem [resolvable:$true] %s228
          %234 = dma.hbm_to_vmem [thread:$0]  %s3, 32768, %s229, [#allocation5], 256, 256, 16
        $region24: #{_forward_impl.1} parent=11 // pred_fallthru
          _
        // Predicated region
        $region25: #{_forward_impl.1} parent=11 // pred_check
          %p235 = pneg %p125
        $region26: #{_forward_impl.1} parent=11 // pred_check_branch
          %237 = sbr.rel (%p235) target = $region28
        $region27: #{_forward_impl.1} parent=11 // pred_region
          %s239 = ssub.s32 64, 64
          %240 = vsyncadd [#allocation5], %s239
          %s242 = sshll.u32 [#allocation6], 4
          %s243 = int_to_ptr.vmem [resolvable:$true] %s242
          %245 = dma.hbm_to_vmem [thread:$0]  %s4, 64, %s243, [#allocation5]
        $region28: #{_forward_impl.1} parent=11 // pred_fallthru
          _
        // Predicated region
        $region29: #{_forward_impl.1} parent=11 // pred_check
          %p246 = pneg %p146
        $region30: #{_forward_impl.1} parent=11 // pred_check_branch
          %248 = sbr.rel (%p246) target = $region32
        $region31: #{_forward_impl.1} parent=11 // pred_region
          _
        $region32: #{_forward_impl.1} parent=11 // pred_fallthru
          _
        // Predicated region
        $region33: #{_forward_impl.1} parent=11 // pred_check
          %p249 = pneg %p167
        $region34: #{_forward_impl.1} parent=11 // pred_check_branch
          %251 = sbr.rel (%p249) target = $region36
        $region35: #{_forward_impl.1} parent=11 // pred_region
          _
        $region36: #{_forward_impl.1} parent=11 // pred_fallthru
          _
      $region12: #{_forward_impl.1} parent=5 // pred_fallthru
        _
      %p252 = scmp.lt.s32.totalorder %s15, 2
      // Predicated region
      $region37: #{_forward_impl.1} parent=5 // pred_check
        %p253 = pneg %p252
      $region38: #{_forward_impl.1} parent=5 // pred_check_branch
        %255 = sbr.rel (%p253) target = $region40
      $region39: #{_forward_impl.1} parent=5 // pred_region
        // Predicated region
        $region41: #{_forward_impl.1} parent=39 // pred_check
          %p256 = pneg %p35
        $region42: #{_forward_impl.1} parent=39 // pred_check_branch
          %258 = sbr.rel (%p256) target = $region44
        $region43: #{_forward_impl.1} parent=39 // pred_region
          %s259 = smul.u32 16, %s15
          %p260 = scmp.lt.s32.totalorder %s259, 31
          %s261 = scalar_select %p260, %s259, 31
          %s262 = smul.addr %s261, 8
          %s263 = scalar_lea.vmem %s0, %s262
          %s264 = smul.u32 16, %s15
        $region44: #{_forward_impl.1} parent=39 // pred_fallthru
          _
      $region40: #{_forward_impl.1} parent=5 // pred_fallthru
        _
      %p265 = scmp.le.s32.totalorder 1, %s15
      %p266 = scmp.lt.s32.totalorder %s15, 3
      %p267 = pnand %p265, %p266
      %p268 = pneg %p267
      // Predicated region
      $region45: #{_forward_impl.1} parent=5 // pred_check
        _
      $region46: #{_forward_impl.1} parent=5 // pred_check_branch
        %270 = sbr.rel (%p267) target = $region48
      $region47: #{_forward_impl.1} parent=5 // pred_region
        %s271 = ssub.s32 %s15, 1
        // Predicated region
        $region49: #{_forward_impl.1} parent=47 // pred_check
          %p272 = pneg %p83
        $region50: #{_forward_impl.1} parent=47 // pred_check_branch
          %274 = sbr.rel (%p272) target = $region52
        $region51: #{_forward_impl.1} parent=47 // pred_region
          %275 = dma.done [#allocation3], 128
        $region52: #{_forward_impl.1} parent=47 // pred_fallthru
          _
        // Predicated region
        $region53: #{_forward_impl.1} parent=47 // pred_check
          %p276 = pneg %p104
        $region54: #{_forward_impl.1} parent=47 // pred_check_branch
          %278 = sbr.rel (%p276) target = $region56
        $region55: #{_forward_impl.1} parent=47 // pred_region
          %279 = dma.done [#allocation5], 32768
        $region56: #{_forward_impl.1} parent=47 // pred_fallthru
          _
        // Predicated region
        $region57: #{_forward_impl.1} parent=47 // pred_check
          %p280 = pneg %p125
        $region58: #{_forward_impl.1} parent=47 // pred_check_branch
          %282 = sbr.rel (%p280) target = $region60
        $region59: #{_forward_impl.1} parent=47 // pred_region
          %283 = dma.done [#allocation5], 64
        $region60: #{_forward_impl.1} parent=47 // pred_fallthru
          _
        %s284 = smul.u32 16, %s20
        %p285 = scmp.lt.s32.totalorder %s284, 31
        %s286 = scalar_select %p285, %s284, 31
        %s287 = smul.addr %s286, 8
        %s288 = scalar_lea.vmem %s0, %s287
        %p289 = pneg %p41
        %p290 = pneg %p38
        %p291 = pneg %p62
        %p292 = pneg %p59
        %p293 = pneg %p83
        %p294 = pneg %p80
        %p295 = pneg %p104
        %p296 = pneg %p101
        %p297 = pneg %p125
        %p298 = pneg %p122
        %p299 = pneg %p146
        %p300 = pneg %p143
        %p301 = pneg %p167
        %p302 = pneg %p164
        %p303 = pneg %p193
        %p304 = pneg %p190
        %s305 = smul.u32 16, %s20
        %p306 = scmp.lt.s32.totalorder %s305, 31
        %s307 = scalar_select %p306, %s305, 31
        %s308 = smul.addr %s307, 8
        %s309 = scalar_lea.vmem %s7, %s308
        %s310 = smul.u32 16, %s20
        %p311 = scmp.lt.s32.totalorder %s310, 31
        %s312 = scalar_select %p311, %s310, 31
        %s313 = smul.addr %s312, 8
        %s314 = scalar_lea.vmem %s0, %s313
        %s315 = smul.u32 16, %s20
        %s316 = smul.u32 16, %s20
        %p317 = scmp.lt.s32.totalorder %s316, 31
        %s318 = scalar_select %p317, %s316, 31
        %s319 = smul.addr %s318, 8
        %s320 = scalar_lea.vmem %s7, %s319
        %s321 = smul.u32 16, %s20
        %v323 = vld [vmem:[%s314] sm:$0xff]
        %v324 = vld [vmem:[%s314 + $0x8] sm:$0xff]
        %v325 = vld [vmem:[%s314 + $0x10] sm:$0xff]
        %v326 = vld [vmem:[%s314 + $0x18] sm:$0xff]
        %v327 = vld [vmem:[%s314 + $0x20] sm:$0xff]
        %v328 = vld [vmem:[%s314 + $0x28] sm:$0xff]
        %v329 = vld [vmem:[%s314 + $0x30] sm:$0xff]
        %v330 = vld [vmem:[%s314 + $0x38] sm:$0xff]
        %v331 = vld [vmem:[%s314 + $0x40] sm:$0xff]
        %v332 = vld [vmem:[%s314 + $0x48] sm:$0xff]
        %v333 = vld [vmem:[%s314 + $0x50] sm:$0xff]
        %v334 = vld [vmem:[%s314 + $0x58] sm:$0xff]
        %v335 = vld [vmem:[%s314 + $0x60] sm:$0xff]
        %v336 = vld [vmem:[%s314 + $0x68] sm:$0xff]
        %v337 = vld [vmem:[%s314 + $0x70] sm:$0xff]
        %v338 = vld [vmem:[%s314 + $0x78] sm:$0xff]
        %v339 = vpack.c.bf16 %v324, %v323
        %v340 = vpack.c.bf16 %v326, %v325
        %v341 = vpack.c.bf16 %v328, %v327
        %v342 = vpack.c.bf16 %v330, %v329
        %v343 = vpack.c.bf16 %v332, %v331
        %v344 = vpack.c.bf16 %v334, %v333
        %v345 = vpack.c.bf16 %v336, %v335
        %v346 = vpack.c.bf16 %v338, %v337
        %v347 = vld [vmem:[%s1] sm:$0xff]
        %v348 = vld [vmem:[%s1 + $0x8] sm:$0xff]
        %v349 = vld [vmem:[#allocation2] sm:$0xff]
        %v351 = vlaneseq
        %v352 = vshrl.u32 %v351, 7
        %v353 = vsub.s32 0, %v352
        %v354 = vrot.slane %v349, %v353
        %v355 = vlaneseq
        %v356 = vshrl.u32 %v355, 7
        %v357 = vsub.s32 1, %v356
        %v358 = vrot.slane %v349, %v357
        %v359 = vlaneseq
        %v360 = vshrl.u32 %v359, 7
        %v361 = vsub.s32 2, %v360
        %v362 = vrot.slane %v349, %v361
        %v363 = vlaneseq
        %v364 = vshrl.u32 %v363, 7
        %v365 = vsub.s32 3, %v364
        %v366 = vrot.slane %v349, %v365
        %v367 = vlaneseq
        %v368 = vshrl.u32 %v367, 7
        %v369 = vsub.s32 4, %v368
        %v370 = vrot.slane %v349, %v369
        %v371 = vlaneseq
        %v372 = vshrl.u32 %v371, 7
        %v373 = vsub.s32 5, %v372
        %v374 = vrot.slane %v349, %v373
        %v375 = vlaneseq
        %v376 = vshrl.u32 %v375, 7
        %v377 = vsub.s32 6, %v376
        %v378 = vrot.slane %v349, %v377
        %v379 = vlaneseq
        %v380 = vshrl.u32 %v379, 7
        %v381 = vsub.s32 7, %v380
        %v382 = vrot.slane %v349, %v381
        %v393 = vcombine.high %v347, %v347
        %v395 = vunpack.c.l.s4 1983009808
        %v396 = vunpack.c.0.s8 %v395
        %v397 = vlaneseq
        %v398 = vshrl.u32 %v397, 7
        %v399 = vsub.s32 %v396, %v398
        %v400 = vrot.slane %v347, %v399
        %v402 = vunpack.c.l.s4 1983009808
        %v403 = vunpack.c.0.s8 %v402
        %v404 = vlaneseq
        %v405 = vshrl.u32 %v404, 7
        %v406 = vsub.s32 %v403, %v405
        %v407 = vrot.slane %v393, %v406
        %v408 = vcombine.high %v400, %v400
        %v409 = vcombine.high %v407, %v407
        %v410 = vcombine.high %v348, %v348
        %v412 = vunpack.c.l.s4 1983009808
        %v413 = vunpack.c.0.s8 %v412
        %v414 = vlaneseq
        %v415 = vshrl.u32 %v414, 7
        %v416 = vsub.s32 %v413, %v415
        %v417 = vrot.slane %v348, %v416
        %v419 = vunpack.c.l.s4 1983009808
        %v420 = vunpack.c.0.s8 %v419
        %v421 = vlaneseq
        %v422 = vshrl.u32 %v421, 7
        %v423 = vsub.s32 %v420, %v422
        %v424 = vrot.slane %v410, %v423
        %v425 = vcombine.high %v417, %v417
        %v426 = vcombine.high %v424, %v424
        %vm427 = vcmask 31744
        %v429 = vsel %vm427, %v339, 0
        %v432 = vsel %vm427, %v340, 0
        %v435 = vsel %vm427, %v341, 0
        %v438 = vsel %vm427, %v342, 0
        %v441 = vsel %vm427, %v343, 0
        %v444 = vsel %vm427, %v344, 0
        %v447 = vsel %vm427, %v345, 0
        %v450 = vsel %vm427, %v346, 0
        %vm452 = vcmask 1041408
        %v454 = vsel %vm452, %v400, 0
        %v457 = vsel %vm452, %v408, 0
        %v460 = vsel %vm452, %v407, 0
        %v463 = vsel %vm452, %v409, 0
        %v466 = vsel %vm452, %v417, 0
        %v469 = vsel %vm452, %v425, 0
        %v472 = vsel %vm452, %v424, 0
        %v475 = vsel %vm452, %v426, 0
        %477 = vmatprep.subr.bf16.mxu0 0
        %478 = vmatpush1.bf16.msra.mxu0 0
        %479 = vmatprep.subr.bf16.mxu0 0
        %480 = vmatpush1.bf16.msra.mxu0 0
        %481 = vmatprep.subr.bf16.mxu0 0
        %482 = vmatpush1.bf16.msra.mxu0 0
        %483 = vmatprep.subr.bf16.mxu0 0
        %484 = vmatpush1.bf16.msra.mxu0 0
        %485 = vmatprep.subr.bf16.mxu0 0
        %486 = vmatpush1.bf16.msra.mxu0 0
        %487 = vmatprep.subr.bf16.mxu0 0
        %488 = vmatpush1.bf16.msra.mxu0 0
        %489 = vmatprep.subr.bf16.mxu0 0
        %490 = vmatpush1.bf16.msra.mxu0 0
        %491 = vmatprep.subr.bf16.mxu0 %v457
        %492 = vmatpush1.bf16.msra.mxu0 %v454
        %493 = vmatprep.subr.bf16.mxu0 0
        %494 = vmatpush2.bf16.msra.mxu0 0
        %495 = vmatprep.subr.bf16.mxu0 0
        %496 = vmatpush2.bf16.msra.mxu0 0
        %497 = vmatprep.subr.bf16.mxu0 0
        %498 = vmatpush2.bf16.msra.mxu0 0
        %499 = vmatprep.subr.bf16.mxu0 0
        %500 = vmatpush2.bf16.msra.mxu0 0
        %501 = vmatprep.subr.bf16.mxu0 0
        %502 = vmatpush2.bf16.msra.mxu0 0
        %503 = vmatprep.subr.bf16.mxu0 0
        %504 = vmatpush2.bf16.msra.mxu0 0
        %505 = vmatprep.subr.bf16.mxu0 0
        %506 = vmatpush2.bf16.msra.mxu0 0
        %507 = vmatprep.subr.bf16.mxu0 0
        %508 = vmatpush2.bf16.msra.mxu0 0
        %509 = vmatprep.mubr.bf16.mxu0 0
        %510 = vmatmul.mubr.bf16.gmra.mxu0 %v429
        %v511 = vpop.f32.mrf.mxu0
        %v512 = vadd.f32 %v354, %v511
        %v513 = vpop.f32.mrf.mxu0
        %v514 = vadd.f32 %v358, %v513
        %v515 = vpop.f32.mrf.mxu0
        %v516 = vadd.f32 %v354, %v515
        %v517 = vpop.f32.mrf.mxu0
        %v518 = vadd.f32 %v358, %v517
        %519 = vmatprep.mubr.bf16.mxu0 0
        %520 = vmatmul.mubr.bf16.gmra.mxu0 %v432
        %v521 = vpop.f32.mrf.mxu0
        %v522 = vadd.f32 %v354, %v521
        %v523 = vpop.f32.mrf.mxu0
        %v524 = vadd.f32 %v358, %v523
        %v525 = vpop.f32.mrf.mxu0
        %v526 = vadd.f32 %v354, %v525
        %v527 = vpop.f32.mrf.mxu0
        %v528 = vadd.f32 %v358, %v527
        %529 = vmatprep.mubr.bf16.mxu0 0
        %530 = vmatmul.mubr.bf16.gmra.mxu0 %v435
        %v531 = vpop.f32.mrf.mxu0
        %v532 = vadd.f32 %v354, %v531
        %v533 = vpop.f32.mrf.mxu0
        %v534 = vadd.f32 %v358, %v533
        %v535 = vpop.f32.mrf.mxu0
        %v536 = vadd.f32 %v354, %v535
        %v537 = vpop.f32.mrf.mxu0
        %v538 = vadd.f32 %v358, %v537
        %539 = vmatprep.mubr.bf16.mxu0 0
        %540 = vmatmul.mubr.bf16.gmra.mxu0 %v438
        %v541 = vpop.f32.mrf.mxu0
        %v542 = vadd.f32 %v354, %v541
        %v543 = vpop.f32.mrf.mxu0
        %v544 = vadd.f32 %v358, %v543
        %v545 = vpop.f32.mrf.mxu0
        %v546 = vadd.f32 %v354, %v545
        %v547 = vpop.f32.mrf.mxu0
        %v548 = vadd.f32 %v358, %v547
        %549 = vmatprep.mubr.bf16.mxu0 0
        %550 = vmatmul.mubr.bf16.gmra.mxu0 %v441
        %v551 = vpop.f32.mrf.mxu0
        %v552 = vadd.f32 %v354, %v551
        %v553 = vpop.f32.mrf.mxu0
        %v554 = vadd.f32 %v358, %v553
        %v555 = vpop.f32.mrf.mxu0
        %v556 = vadd.f32 %v354, %v555
        %v557 = vpop.f32.mrf.mxu0
        %v558 = vadd.f32 %v358, %v557
        %559 = vmatprep.mubr.bf16.mxu0 0
        %560 = vmatmul.mubr.bf16.gmra.mxu0 %v444
        %v561 = vpop.f32.mrf.mxu0
        %v562 = vadd.f32 %v354, %v561
        %v563 = vpop.f32.mrf.mxu0
        %v564 = vadd.f32 %v358, %v563
        %v565 = vpop.f32.mrf.mxu0
        %v566 = vadd.f32 %v354, %v565
        %v567 = vpop.f32.mrf.mxu0
        %v568 = vadd.f32 %v358, %v567
        %569 = vmatprep.mubr.bf16.mxu0 0
        %570 = vmatmul.mubr.bf16.gmra.mxu0 %v447
        %v571 = vpop.f32.mrf.mxu0
        %v572 = vadd.f32 %v354, %v571
        %v573 = vpop.f32.mrf.mxu0
        %v574 = vadd.f32 %v358, %v573
        %v575 = vpop.f32.mrf.mxu0
        %v576 = vadd.f32 %v354, %v575
        %v577 = vpop.f32.mrf.mxu0
        %v578 = vadd.f32 %v358, %v577
        %579 = vmatprep.mubr.bf16.mxu0 0
        %580 = vmatmul.mubr.bf16.gmra.mxu0 %v450
        %v581 = vpop.f32.mrf.mxu0
        %v582 = vadd.f32 %v354, %v581
        %v583 = vpop.f32.mrf.mxu0
        %v584 = vadd.f32 %v358, %v583
        %v585 = vpop.f32.mrf.mxu0
        %v586 = vadd.f32 %v354, %v585
        %v587 = vpop.f32.mrf.mxu0
        %v588 = vadd.f32 %v358, %v587
        %589 = vdwg.mxu0
        %590 = vmatprep.subr.bf16.mxu0 0
        %591 = vmatpush1.bf16.msra.mxu0 0
        %592 = vmatprep.subr.bf16.mxu0 0
        %593 = vmatpush1.bf16.msra.mxu0 0
        %594 = vmatprep.subr.bf16.mxu0 0
        %595 = vmatpush1.bf16.msra.mxu0 0
        %596 = vmatprep.subr.bf16.mxu0 0
        %597 = vmatpush1.bf16.msra.mxu0 0
        %598 = vmatprep.subr.bf16.mxu0 0
        %599 = vmatpush1.bf16.msra.mxu0 0
        %600 = vmatprep.subr.bf16.mxu0 0
        %601 = vmatpush1.bf16.msra.mxu0 0
        %602 = vmatprep.subr.bf16.mxu0 0
        %603 = vmatpush1.bf16.msra.mxu0 0
        %604 = vmatprep.subr.bf16.mxu0 %v463
        %605 = vmatpush1.bf16.msra.mxu0 %v460
        %606 = vmatprep.subr.bf16.mxu0 0
        %607 = vmatpush2.bf16.msra.mxu0 0
        %608 = vmatprep.subr.bf16.mxu0 0
        %609 = vmatpush2.bf16.msra.mxu0 0
        %610 = vmatprep.subr.bf16.mxu0 0
        %611 = vmatpush2.bf16.msra.mxu0 0
        %612 = vmatprep.subr.bf16.mxu0 0
        %613 = vmatpush2.bf16.msra.mxu0 0
        %614 = vmatprep.subr.bf16.mxu0 0
        %615 = vmatpush2.bf16.msra.mxu0 0
        %616 = vmatprep.subr.bf16.mxu0 0
        %617 = vmatpush2.bf16.msra.mxu0 0
        %618 = vmatprep.subr.bf16.mxu0 0
        %619 = vmatpush2.bf16.msra.mxu0 0
        %620 = vmatprep.subr.bf16.mxu0 0
        %621 = vmatpush2.bf16.msra.mxu0 0
        %622 = vmatprep.mubr.bf16.mxu0 0
        %623 = vmatmul.mubr.bf16.gmra.mxu0 %v429
        %v624 = vpop.f32.mrf.mxu0
        %v625 = vadd.f32 %v362, %v624
        %v626 = vpop.f32.mrf.mxu0
        %v627 = vadd.f32 %v366, %v626
        %v628 = vpop.f32.mrf.mxu0
        %v629 = vadd.f32 %v362, %v628
        %v630 = vpop.f32.mrf.mxu0
        %v631 = vadd.f32 %v366, %v630
        %632 = vmatprep.mubr.bf16.mxu0 0
        %633 = vmatmul.mubr.bf16.gmra.mxu0 %v432
        %v634 = vpop.f32.mrf.mxu0
        %v635 = vadd.f32 %v362, %v634
        %v636 = vpop.f32.mrf.mxu0
        %v637 = vadd.f32 %v366, %v636
        %v638 = vpop.f32.mrf.mxu0
        %v639 = vadd.f32 %v362, %v638
        %v640 = vpop.f32.mrf.mxu0
        %v641 = vadd.f32 %v366, %v640
        %642 = vmatprep.mubr.bf16.mxu0 0
        %643 = vmatmul.mubr.bf16.gmra.mxu0 %v435
        %v644 = vpop.f32.mrf.mxu0
        %v645 = vadd.f32 %v362, %v644
        %v646 = vpop.f32.mrf.mxu0
        %v647 = vadd.f32 %v366, %v646
        %v648 = vpop.f32.mrf.mxu0
        %v649 = vadd.f32 %v362, %v648
        %v650 = vpop.f32.mrf.mxu0
        %v651 = vadd.f32 %v366, %v650
        %652 = vmatprep.mubr.bf16.mxu0 0
        %653 = vmatmul.mubr.bf16.gmra.mxu0 %v438
        %v654 = vpop.f32.mrf.mxu0
        %v655 = vadd.f32 %v362, %v654
        %v656 = vpop.f32.mrf.mxu0
        %v657 = vadd.f32 %v366, %v656
        %v658 = vpop.f32.mrf.mxu0
        %v659 = vadd.f32 %v362, %v658
        %v660 = vpop.f32.mrf.mxu0
        %v661 = vadd.f32 %v366, %v660
        %662 = vmatprep.mubr.bf16.mxu0 0
        %663 = vmatmul.mubr.bf16.gmra.mxu0 %v441
        %v664 = vpop.f32.mrf.mxu0
        %v665 = vadd.f32 %v362, %v664
        %v666 = vpop.f32.mrf.mxu0
        %v667 = vadd.f32 %v366, %v666
        %v668 = vpop.f32.mrf.mxu0
        %v669 = vadd.f32 %v362, %v668
        %v670 = vpop.f32.mrf.mxu0
        %v671 = vadd.f32 %v366, %v670
        %672 = vmatprep.mubr.bf16.mxu0 0
        %673 = vmatmul.mubr.bf16.gmra.mxu0 %v444
        %v674 = vpop.f32.mrf.mxu0
        %v675 = vadd.f32 %v362, %v674
        %v676 = vpop.f32.mrf.mxu0
        %v677 = vadd.f32 %v366, %v676
        %v678 = vpop.f32.mrf.mxu0
        %v679 = vadd.f32 %v362, %v678
        %v680 = vpop.f32.mrf.mxu0
        %v681 = vadd.f32 %v366, %v680
        %682 = vmatprep.mubr.bf16.mxu0 0
        %683 = vmatmul.mubr.bf16.gmra.mxu0 %v447
        %v684 = vpop.f32.mrf.mxu0
        %v685 = vadd.f32 %v362, %v684
        %v686 = vpop.f32.mrf.mxu0
        %v687 = vadd.f32 %v366, %v686
        %v688 = vpop.f32.mrf.mxu0
        %v689 = vadd.f32 %v362, %v688
        %v690 = vpop.f32.mrf.mxu0
        %v691 = vadd.f32 %v366, %v690
        %692 = vmatprep.mubr.bf16.mxu0 0
        %693 = vmatmul.mubr.bf16.gmra.mxu0 %v450
        %v694 = vpop.f32.mrf.mxu0
        %v695 = vadd.f32 %v362, %v694
        %v696 = vpop.f32.mrf.mxu0
        %v697 = vadd.f32 %v366, %v696
        %v698 = vpop.f32.mrf.mxu0
        %v699 = vadd.f32 %v362, %v698
        %v700 = vpop.f32.mrf.mxu0
        %v701 = vadd.f32 %v366, %v700
        %702 = vdwg.mxu0
        %703 = vmatprep.subr.bf16.mxu0 0
        %704 = vmatpush1.bf16.msra.mxu0 0
        %705 = vmatprep.subr.bf16.mxu0 0
        %706 = vmatpush1.bf16.msra.mxu0 0
        %707 = vmatprep.subr.bf16.mxu0 0
        %708 = vmatpush1.bf16.msra.mxu0 0
        %709 = vmatprep.subr.bf16.mxu0 0
        %710 = vmatpush1.bf16.msra.mxu0 0
        %711 = vmatprep.subr.bf16.mxu0 0
        %712 = vmatpush1.bf16.msra.mxu0 0
        %713 = vmatprep.subr.bf16.mxu0 0
        %714 = vmatpush1.bf16.msra.mxu0 0
        %715 = vmatprep.subr.bf16.mxu0 0
        %716 = vmatpush1.bf16.msra.mxu0 0
        %717 = vmatprep.subr.bf16.mxu0 %v469
        %718 = vmatpush1.bf16.msra.mxu0 %v466
        %719 = vmatprep.subr.bf16.mxu0 0
        %720 = vmatpush2.bf16.msra.mxu0 0
        %721 = vmatprep.subr.bf16.mxu0 0
        %722 = vmatpush2.bf16.msra.mxu0 0
        %723 = vmatprep.subr.bf16.mxu0 0
        %724 = vmatpush2.bf16.msra.mxu0 0
        %725 = vmatprep.subr.bf16.mxu0 0
        %726 = vmatpush2.bf16.msra.mxu0 0
        %727 = vmatprep.subr.bf16.mxu0 0
        %728 = vmatpush2.bf16.msra.mxu0 0
        %729 = vmatprep.subr.bf16.mxu0 0
        %730 = vmatpush2.bf16.msra.mxu0 0
        %731 = vmatprep.subr.bf16.mxu0 0
        %732 = vmatpush2.bf16.msra.mxu0 0
        %733 = vmatprep.subr.bf16.mxu0 0
        %734 = vmatpush2.bf16.msra.mxu0 0
        %735 = vmatprep.mubr.bf16.mxu0 0
        %736 = vmatmul.mubr.bf16.gmra.mxu0 %v429
        %v737 = vpop.f32.mrf.mxu0
        %v738 = vadd.f32 %v370, %v737
        %v739 = vpop.f32.mrf.mxu0
        %v740 = vadd.f32 %v374, %v739
        %v741 = vpop.f32.mrf.mxu0
        %v742 = vadd.f32 %v370, %v741
        %v743 = vpop.f32.mrf.mxu0
        %v744 = vadd.f32 %v374, %v743
        %745 = vmatprep.mubr.bf16.mxu0 0
        %746 = vmatmul.mubr.bf16.gmra.mxu0 %v432
        %v747 = vpop.f32.mrf.mxu0
        %v748 = vadd.f32 %v370, %v747
        %v749 = vpop.f32.mrf.mxu0
        %v750 = vadd.f32 %v374, %v749
        %v751 = vpop.f32.mrf.mxu0
        %v752 = vadd.f32 %v370, %v751
        %v753 = vpop.f32.mrf.mxu0
        %v754 = vadd.f32 %v374, %v753
        %755 = vmatprep.mubr.bf16.mxu0 0
        %756 = vmatmul.mubr.bf16.gmra.mxu0 %v435
        %v757 = vpop.f32.mrf.mxu0
        %v758 = vadd.f32 %v370, %v757
        %v759 = vpop.f32.mrf.mxu0
        %v760 = vadd.f32 %v374, %v759
        %v761 = vpop.f32.mrf.mxu0
        %v762 = vadd.f32 %v370, %v761
        %v763 = vpop.f32.mrf.mxu0
        %v764 = vadd.f32 %v374, %v763
        %765 = vmatprep.mubr.bf16.mxu0 0
        %766 = vmatmul.mubr.bf16.gmra.mxu0 %v438
        %v767 = vpop.f32.mrf.mxu0
        %v768 = vadd.f32 %v370, %v767
        %v769 = vpop.f32.mrf.mxu0
        %v770 = vadd.f32 %v374, %v769
        %v771 = vpop.f32.mrf.mxu0
        %v772 = vadd.f32 %v370, %v771
        %v773 = vpop.f32.mrf.mxu0
        %v774 = vadd.f32 %v374, %v773
        %775 = vmatprep.mubr.bf16.mxu0 0
        %776 = vmatmul.mubr.bf16.gmra.mxu0 %v441
        %v777 = vpop.f32.mrf.mxu0
        %v778 = vadd.f32 %v370, %v777
        %v779 = vpop.f32.mrf.mxu0
        %v780 = vadd.f32 %v374, %v779
        %v781 = vpop.f32.mrf.mxu0
        %v782 = vadd.f32 %v370, %v781
        %v783 = vpop.f32.mrf.mxu0
        %v784 = vadd.f32 %v374, %v783
        %785 = vmatprep.mubr.bf16.mxu0 0
        %786 = vmatmul.mubr.bf16.gmra.mxu0 %v444
        %v787 = vpop.f32.mrf.mxu0
        %v788 = vadd.f32 %v370, %v787
        %v789 = vpop.f32.mrf.mxu0
        %v790 = vadd.f32 %v374, %v789
        %v791 = vpop.f32.mrf.mxu0
        %v792 = vadd.f32 %v370, %v791
        %v793 = vpop.f32.mrf.mxu0
        %v794 = vadd.f32 %v374, %v793
        %795 = vmatprep.mubr.bf16.mxu0 0
        %796 = vmatmul.mubr.bf16.gmra.mxu0 %v447
        %v797 = vpop.f32.mrf.mxu0
        %v798 = vadd.f32 %v370, %v797
        %v799 = vpop.f32.mrf.mxu0
        %v800 = vadd.f32 %v374, %v799
        %v801 = vpop.f32.mrf.mxu0
        %v802 = vadd.f32 %v370, %v801
        %v803 = vpop.f32.mrf.mxu0
        %v804 = vadd.f32 %v374, %v803
        %805 = vmatprep.mubr.bf16.mxu0 0
        %806 = vmatmul.mubr.bf16.gmra.mxu0 %v450
        %v807 = vpop.f32.mrf.mxu0
        %v808 = vadd.f32 %v370, %v807
        %v809 = vpop.f32.mrf.mxu0
        %v810 = vadd.f32 %v374, %v809
        %v811 = vpop.f32.mrf.mxu0
        %v812 = vadd.f32 %v370, %v811
        %v813 = vpop.f32.mrf.mxu0
        %v814 = vadd.f32 %v374, %v813
        %815 = vdwg.mxu0
        %816 = vmatprep.subr.bf16.mxu0 0
        %817 = vmatpush1.bf16.msra.mxu0 0
        %818 = vmatprep.subr.bf16.mxu0 0
        %819 = vmatpush1.bf16.msra.mxu0 0
        %820 = vmatprep.subr.bf16.mxu0 0
        %821 = vmatpush1.bf16.msra.mxu0 0
        %822 = vmatprep.subr.bf16.mxu0 0
        %823 = vmatpush1.bf16.msra.mxu0 0
        %824 = vmatprep.subr.bf16.mxu0 0
        %825 = vmatpush1.bf16.msra.mxu0 0
        %826 = vmatprep.subr.bf16.mxu0 0
        %827 = vmatpush1.bf16.msra.mxu0 0
        %828 = vmatprep.subr.bf16.mxu0 0
        %829 = vmatpush1.bf16.msra.mxu0 0
        %830 = vmatprep.subr.bf16.mxu0 %v475
        %831 = vmatpush1.bf16.msra.mxu0 %v472
        %832 = vmatprep.subr.bf16.mxu0 0
        %833 = vmatpush2.bf16.msra.mxu0 0
        %834 = vmatprep.subr.bf16.mxu0 0
        %835 = vmatpush2.bf16.msra.mxu0 0
        %836 = vmatprep.subr.bf16.mxu0 0
        %837 = vmatpush2.bf16.msra.mxu0 0
        %838 = vmatprep.subr.bf16.mxu0 0
        %839 = vmatpush2.bf16.msra.mxu0 0
        %840 = vmatprep.subr.bf16.mxu0 0
        %841 = vmatpush2.bf16.msra.mxu0 0
        %842 = vmatprep.subr.bf16.mxu0 0
        %843 = vmatpush2.bf16.msra.mxu0 0
        %844 = vmatprep.subr.bf16.mxu0 0
        %845 = vmatpush2.bf16.msra.mxu0 0
        %846 = vmatprep.subr.bf16.mxu0 0
        %847 = vmatpush2.bf16.msra.mxu0 0
        %848 = vmatprep.mubr.bf16.mxu0 0
        %849 = vmatmul.mubr.bf16.gmra.mxu0 %v429
        %v850 = vpop.f32.mrf.mxu0
        %v851 = vadd.f32 %v378, %v850
        %v852 = vpop.f32.mrf.mxu0
        %v853 = vadd.f32 %v382, %v852
        %v854 = vpop.f32.mrf.mxu0
        %v855 = vadd.f32 %v378, %v854
        %v856 = vpop.f32.mrf.mxu0
        %v857 = vadd.f32 %v382, %v856
        %858 = vmatprep.mubr.bf16.mxu0 0
        %859 = vmatmul.mubr.bf16.gmra.mxu0 %v432
        %v860 = vpop.f32.mrf.mxu0
        %v861 = vadd.f32 %v378, %v860
        %v862 = vpop.f32.mrf.mxu0
        %v863 = vadd.f32 %v382, %v862
        %v864 = vpop.f32.mrf.mxu0
        %v865 = vadd.f32 %v378, %v864
        %v866 = vpop.f32.mrf.mxu0
        %v867 = vadd.f32 %v382, %v866
        %868 = vmatprep.mubr.bf16.mxu0 0
        %869 = vmatmul.mubr.bf16.gmra.mxu0 %v435
        %v870 = vpop.f32.mrf.mxu0
        %v871 = vadd.f32 %v378, %v870
        %v872 = vpop.f32.mrf.mxu0
        %v873 = vadd.f32 %v382, %v872
        %v874 = vpop.f32.mrf.mxu0
        %v875 = vadd.f32 %v378, %v874
        %v876 = vpop.f32.mrf.mxu0
        %v877 = vadd.f32 %v382, %v876
        %878 = vmatprep.mubr.bf16.mxu0 0
        %879 = vmatmul.mubr.bf16.gmra.mxu0 %v438
        %v880 = vpop.f32.mrf.mxu0
        %v881 = vadd.f32 %v378, %v880
        %v882 = vpop.f32.mrf.mxu0
        %v883 = vadd.f32 %v382, %v882
        %v884 = vpop.f32.mrf.mxu0
        %v885 = vadd.f32 %v378, %v884
        %v886 = vpop.f32.mrf.mxu0
        %v887 = vadd.f32 %v382, %v886
        %888 = vmatprep.mubr.bf16.mxu0 0
        %889 = vmatmul.mubr.bf16.gmra.mxu0 %v441
        %v890 = vpop.f32.mrf.mxu0
        %v891 = vadd.f32 %v378, %v890
        %v892 = vpop.f32.mrf.mxu0
        %v893 = vadd.f32 %v382, %v892
        %v894 = vpop.f32.mrf.mxu0
        %v895 = vadd.f32 %v378, %v894
        %v896 = vpop.f32.mrf.mxu0
        %v897 = vadd.f32 %v382, %v896
        %898 = vmatprep.mubr.bf16.mxu0 0
        %899 = vmatmul.mubr.bf16.gmra.mxu0 %v444
        %v900 = vpop.f32.mrf.mxu0
        %v901 = vadd.f32 %v378, %v900
        %v902 = vpop.f32.mrf.mxu0
        %v903 = vadd.f32 %v382, %v902
        %v904 = vpop.f32.mrf.mxu0
        %v905 = vadd.f32 %v378, %v904
        %v906 = vpop.f32.mrf.mxu0
        %v907 = vadd.f32 %v382, %v906
        %908 = vmatprep.mubr.bf16.mxu0 0
        %909 = vmatmul.mubr.bf16.gmra.mxu0 %v447
        %v910 = vpop.f32.mrf.mxu0
        %v911 = vadd.f32 %v378, %v910
        %v912 = vpop.f32.mrf.mxu0
        %v913 = vadd.f32 %v382, %v912
        %v914 = vpop.f32.mrf.mxu0
        %v915 = vadd.f32 %v378, %v914
        %v916 = vpop.f32.mrf.mxu0
        %v917 = vadd.f32 %v382, %v916
        %918 = vmatprep.mubr.bf16.mxu0 0
        %919 = vmatmul.mubr.bf16.gmra.mxu0 %v450
        %v920 = vpop.f32.mrf.mxu0
        %v921 = vadd.f32 %v378, %v920
        %v922 = vpop.f32.mrf.mxu0
        %v923 = vadd.f32 %v382, %v922
        %v924 = vpop.f32.mrf.mxu0
        %v925 = vadd.f32 %v378, %v924
        %v926 = vpop.f32.mrf.mxu0
        %v927 = vadd.f32 %v382, %v926
        %928 = vdwg.mxu0
        %v929 = vmax.f32 %v512, 0.0
        %v930 = vmax.f32 %v514, 0.0
        %v931 = vmax.f32 %v625, 0.0
        %v932 = vmax.f32 %v627, 0.0
        %v933 = vmax.f32 %v738, 0.0
        %v934 = vmax.f32 %v740, 0.0
        %v935 = vmax.f32 %v851, 0.0
        %v936 = vmax.f32 %v853, 0.0
        %v937 = vmax.f32 %v516, 0.0
        %v938 = vmax.f32 %v518, 0.0
        %v939 = vmax.f32 %v629, 0.0
        %v940 = vmax.f32 %v631, 0.0
        %v941 = vmax.f32 %v742, 0.0
        %v942 = vmax.f32 %v744, 0.0
        %v943 = vmax.f32 %v855, 0.0
        %v944 = vmax.f32 %v857, 0.0
        %v945 = vmax.f32 %v522, 0.0
        %v946 = vmax.f32 %v524, 0.0
        %v947 = vmax.f32 %v635, 0.0
        %v948 = vmax.f32 %v637, 0.0
        %v949 = vmax.f32 %v748, 0.0
        %v950 = vmax.f32 %v750, 0.0
        %v951 = vmax.f32 %v861, 0.0
        %v952 = vmax.f32 %v863, 0.0
        %v953 = vmax.f32 %v526, 0.0
        %v954 = vmax.f32 %v528, 0.0
        %v955 = vmax.f32 %v639, 0.0
        %v956 = vmax.f32 %v641, 0.0
        %v957 = vmax.f32 %v752, 0.0
        %v958 = vmax.f32 %v754, 0.0
        %v959 = vmax.f32 %v865, 0.0
        %v960 = vmax.f32 %v867, 0.0
        %v961 = vmax.f32 %v532, 0.0
        %v962 = vmax.f32 %v534, 0.0
        %v963 = vmax.f32 %v645, 0.0
        %v964 = vmax.f32 %v647, 0.0
        %v965 = vmax.f32 %v758, 0.0
        %v966 = vmax.f32 %v760, 0.0
        %v967 = vmax.f32 %v871, 0.0
        %v968 = vmax.f32 %v873, 0.0
        %v969 = vmax.f32 %v536, 0.0
        %v970 = vmax.f32 %v538, 0.0
        %v971 = vmax.f32 %v649, 0.0
        %v972 = vmax.f32 %v651, 0.0
        %v973 = vmax.f32 %v762, 0.0
        %v974 = vmax.f32 %v764, 0.0
        %v975 = vmax.f32 %v875, 0.0
        %v976 = vmax.f32 %v877, 0.0
        %v977 = vmax.f32 %v542, 0.0
        %v978 = vmax.f32 %v544, 0.0
        %v979 = vmax.f32 %v655, 0.0
        %v980 = vmax.f32 %v657, 0.0
        %v981 = vmax.f32 %v768, 0.0
        %v982 = vmax.f32 %v770, 0.0
        %v983 = vmax.f32 %v881, 0.0
        %v984 = vmax.f32 %v883, 0.0
        %v985 = vmax.f32 %v546, 0.0
        %v986 = vmax.f32 %v548, 0.0
        %v987 = vmax.f32 %v659, 0.0
        %v988 = vmax.f32 %v661, 0.0
        %v989 = vmax.f32 %v772, 0.0
        %v990 = vmax.f32 %v774, 0.0
        %v991 = vmax.f32 %v885, 0.0
        %v992 = vmax.f32 %v887, 0.0
        %v993 = vmax.f32 %v552, 0.0
        %v994 = vmax.f32 %v554, 0.0
        %v995 = vmax.f32 %v665, 0.0
        %v996 = vmax.f32 %v667, 0.0
        %v997 = vmax.f32 %v778, 0.0
        %v998 = vmax.f32 %v780, 0.0
        %v999 = vmax.f32 %v891, 0.0
        %v1000 = vmax.f32 %v893, 0.0
        %v1001 = vmax.f32 %v556, 0.0
        %v1002 = vmax.f32 %v558, 0.0
        %v1003 = vmax.f32 %v669, 0.0
        %v1004 = vmax.f32 %v671, 0.0
        %v1005 = vmax.f32 %v782, 0.0
        %v1006 = vmax.f32 %v784, 0.0
        %v1007 = vmax.f32 %v895, 0.0
        %v1008 = vmax.f32 %v897, 0.0
        %v1009 = vmax.f32 %v562, 0.0
        %v1010 = vmax.f32 %v564, 0.0
        %v1011 = vmax.f32 %v675, 0.0
        %v1012 = vmax.f32 %v677, 0.0
        %v1013 = vmax.f32 %v788, 0.0
        %v1014 = vmax.f32 %v790, 0.0
        %v1015 = vmax.f32 %v901, 0.0
        %v1016 = vmax.f32 %v903, 0.0
        %v1017 = vmax.f32 %v566, 0.0
        %v1018 = vmax.f32 %v568, 0.0
        %v1019 = vmax.f32 %v679, 0.0
        %v1020 = vmax.f32 %v681, 0.0
        %v1021 = vmax.f32 %v792, 0.0
        %v1022 = vmax.f32 %v794, 0.0
        %v1023 = vmax.f32 %v905, 0.0
        %v1024 = vmax.f32 %v907, 0.0
        %v1025 = vmax.f32 %v572, 0.0
        %v1026 = vmax.f32 %v574, 0.0
        %v1027 = vmax.f32 %v685, 0.0
        %v1028 = vmax.f32 %v687, 0.0
        %v1029 = vmax.f32 %v798, 0.0
        %v1030 = vmax.f32 %v800, 0.0
        %v1031 = vmax.f32 %v911, 0.0
        %v1032 = vmax.f32 %v913, 0.0
        %v1033 = vmax.f32 %v576, 0.0
        %v1034 = vmax.f32 %v578, 0.0
        %v1035 = vmax.f32 %v689, 0.0
        %v1036 = vmax.f32 %v691, 0.0
        %v1037 = vmax.f32 %v802, 0.0
        %v1038 = vmax.f32 %v804, 0.0
        %v1039 = vmax.f32 %v915, 0.0
        %v1040 = vmax.f32 %v917, 0.0
        %v1041 = vmax.f32 %v582, 0.0
        %v1042 = vmax.f32 %v584, 0.0
        %v1043 = vmax.f32 %v695, 0.0
        %v1044 = vmax.f32 %v697, 0.0
        %v1045 = vmax.f32 %v808, 0.0
        %v1046 = vmax.f32 %v810, 0.0
        %v1047 = vmax.f32 %v921, 0.0
        %v1048 = vmax.f32 %v923, 0.0
        %v1049 = vmax.f32 %v586, 0.0
        %v1050 = vmax.f32 %v588, 0.0
        %v1051 = vmax.f32 %v699, 0.0
        %v1052 = vmax.f32 %v701, 0.0
        %v1053 = vmax.f32 %v812, 0.0
        %v1054 = vmax.f32 %v814, 0.0
        %v1055 = vmax.f32 %v925, 0.0
        %v1056 = vmax.f32 %v927, 0.0
        %v1057 = vpack.c.bf16 %v937, %v929
        %v1058 = vpack.c.bf16 %v938, %v930
        %v1059 = vpack.c.bf16 %v939, %v931
        %v1060 = vpack.c.bf16 %v940, %v932
        %v1061 = vpack.c.bf16 %v941, %v933
        %v1062 = vpack.c.bf16 %v942, %v934
        %v1063 = vpack.c.bf16 %v943, %v935
        %v1064 = vpack.c.bf16 %v944, %v936
        %v1065 = vpack.c.bf16 %v953, %v945
        %v1066 = vpack.c.bf16 %v954, %v946
        %v1067 = vpack.c.bf16 %v955, %v947
        %v1068 = vpack.c.bf16 %v956, %v948
        %v1069 = vpack.c.bf16 %v957, %v949
        %v1070 = vpack.c.bf16 %v958, %v950
        %v1071 = vpack.c.bf16 %v959, %v951
        %v1072 = vpack.c.bf16 %v960, %v952
        %v1073 = vpack.c.bf16 %v969, %v961
        %v1074 = vpack.c.bf16 %v970, %v962
        %v1075 = vpack.c.bf16 %v971, %v963
        %v1076 = vpack.c.bf16 %v972, %v964
        %v1077 = vpack.c.bf16 %v973, %v965
        %v1078 = vpack.c.bf16 %v974, %v966
        %v1079 = vpack.c.bf16 %v975, %v967
        %v1080 = vpack.c.bf16 %v976, %v968
        %v1081 = vpack.c.bf16 %v985, %v977
        %v1082 = vpack.c.bf16 %v986, %v978
        %v1083 = vpack.c.bf16 %v987, %v979
        %v1084 = vpack.c.bf16 %v988, %v980
        %v1085 = vpack.c.bf16 %v989, %v981
        %v1086 = vpack.c.bf16 %v990, %v982
        %v1087 = vpack.c.bf16 %v991, %v983
        %v1088 = vpack.c.bf16 %v992, %v984
        %v1089 = vpack.c.bf16 %v1001, %v993
        %v1090 = vpack.c.bf16 %v1002, %v994
        %v1091 = vpack.c.bf16 %v1003, %v995
        %v1092 = vpack.c.bf16 %v1004, %v996
        %v1093 = vpack.c.bf16 %v1005, %v997
        %v1094 = vpack.c.bf16 %v1006, %v998
        %v1095 = vpack.c.bf16 %v1007, %v999
        %v1096 = vpack.c.bf16 %v1008, %v1000
        %v1097 = vpack.c.bf16 %v1017, %v1009
        %v1098 = vpack.c.bf16 %v1018, %v1010
        %v1099 = vpack.c.bf16 %v1019, %v1011
        %v1100 = vpack.c.bf16 %v1020, %v1012
        %v1101 = vpack.c.bf16 %v1021, %v1013
        %v1102 = vpack.c.bf16 %v1022, %v1014
        %v1103 = vpack.c.bf16 %v1023, %v1015
        %v1104 = vpack.c.bf16 %v1024, %v1016
        %v1105 = vpack.c.bf16 %v1033, %v1025
        %v1106 = vpack.c.bf16 %v1034, %v1026
        %v1107 = vpack.c.bf16 %v1035, %v1027
        %v1108 = vpack.c.bf16 %v1036, %v1028
        %v1109 = vpack.c.bf16 %v1037, %v1029
        %v1110 = vpack.c.bf16 %v1038, %v1030
        %v1111 = vpack.c.bf16 %v1039, %v1031
        %v1112 = vpack.c.bf16 %v1040, %v1032
        %v1113 = vpack.c.bf16 %v1049, %v1041
        %v1114 = vpack.c.bf16 %v1050, %v1042
        %v1115 = vpack.c.bf16 %v1051, %v1043
        %v1116 = vpack.c.bf16 %v1052, %v1044
        %v1117 = vpack.c.bf16 %v1053, %v1045
        %v1118 = vpack.c.bf16 %v1054, %v1046
        %v1119 = vpack.c.bf16 %v1055, %v1047
        %v1120 = vpack.c.bf16 %v1056, %v1048
        %v1121 = vld [vmem:[#allocation4] sm:$0xff]
        %v1122 = vld [vmem:[#allocation4 + $0x8] sm:$0xff]
        %v1123 = vld [vmem:[#allocation4 + $0x10] sm:$0xff]
        %v1124 = vld [vmem:[#allocation4 + $0x18] sm:$0xff]
        %v1125 = vld [vmem:[#allocation4 + $0x20] sm:$0xff]
        %v1126 = vld [vmem:[#allocation4 + $0x28] sm:$0xff]
        %v1127 = vld [vmem:[#allocation4 + $0x30] sm:$0xff]
        %v1128 = vld [vmem:[#allocation4 + $0x38] sm:$0xff]
        %v1129 = vld [vmem:[#allocation4 + $0x40] sm:$0xff]
        %v1130 = vld [vmem:[#allocation4 + $0x48] sm:$0xff]
        %v1131 = vld [vmem:[#allocation4 + $0x50] sm:$0xff]
        %v1132 = vld [vmem:[#allocation4 + $0x58] sm:$0xff]
        %v1133 = vld [vmem:[#allocation4 + $0x60] sm:$0xff]
        %v1134 = vld [vmem:[#allocation4 + $0x68] sm:$0xff]
        %v1135 = vld [vmem:[#allocation4 + $0x70] sm:$0xff]
        %v1136 = vld [vmem:[#allocation4 + $0x78] sm:$0xff]
        %v1137 = vld [vmem:[#allocation4 + $0x80] sm:$0xff]
        %v1138 = vld [vmem:[#allocation4 + $0x88] sm:$0xff]
        %v1139 = vld [vmem:[#allocation4 + $0x90] sm:$0xff]
        %v1140 = vld [vmem:[#allocation4 + $0x98] sm:$0xff]
        %v1141 = vld [vmem:[#allocation4 + $0xa0] sm:$0xff]
        %v1142 = vld [vmem:[#allocation4 + $0xa8] sm:$0xff]
        %v1143 = vld [vmem:[#allocation4 + $0xb0] sm:$0xff]
        %v1144 = vld [vmem:[#allocation4 + $0xb8] sm:$0xff]
        %v1145 = vld [vmem:[#allocation4 + $0xc0] sm:$0xff]
        %v1146 = vld [vmem:[#allocation4 + $0xc8] sm:$0xff]
        %v1147 = vld [vmem:[#allocation4 + $0xd0] sm:$0xff]
        %v1148 = vld [vmem:[#allocation4 + $0xd8] sm:$0xff]
        %v1149 = vld [vmem:[#allocation4 + $0xe0] sm:$0xff]
        %v1150 = vld [vmem:[#allocation4 + $0xe8] sm:$0xff]
        %v1151 = vld [vmem:[#allocation4 + $0xf0] sm:$0xff]
        %v1152 = vld [vmem:[#allocation4 + $0xf8] sm:$0xff]
        %v1153 = vld [vmem:[#allocation4 + $0x100] sm:$0xff]
        %v1154 = vld [vmem:[#allocation4 + $0x108] sm:$0xff]
        %v1155 = vld [vmem:[#allocation4 + $0x110] sm:$0xff]
        %v1156 = vld [vmem:[#allocation4 + $0x118] sm:$0xff]
        %v1157 = vld [vmem:[#allocation4 + $0x120] sm:$0xff]
        %v1158 = vld [vmem:[#allocation4 + $0x128] sm:$0xff]
        %v1159 = vld [vmem:[#allocation4 + $0x130] sm:$0xff]
        %v1160 = vld [vmem:[#allocation4 + $0x138] sm:$0xff]
        %v1161 = vld [vmem:[#allocation4 + $0x140] sm:$0xff]
        %v1162 = vld [vmem:[#allocation4 + $0x148] sm:$0xff]
        %v1163 = vld [vmem:[#allocation4 + $0x150] sm:$0xff]
        %v1164 = vld [vmem:[#allocation4 + $0x158] sm:$0xff]
        %v1165 = vld [vmem:[#allocation4 + $0x160] sm:$0xff]
        %v1166 = vld [vmem:[#allocation4 + $0x168] sm:$0xff]
        %v1167 = vld [vmem:[#allocation4 + $0x170] sm:$0xff]
        %v1168 = vld [vmem:[#allocation4 + $0x178] sm:$0xff]
        %v1169 = vld [vmem:[#allocation4 + $0x180] sm:$0xff]
        %v1170 = vld [vmem:[#allocation4 + $0x188] sm:$0xff]
        %v1171 = vld [vmem:[#allocation4 + $0x190] sm:$0xff]
        %v1172 = vld [vmem:[#allocation4 + $0x198] sm:$0xff]
        %v1173 = vld [vmem:[#allocation4 + $0x1a0] sm:$0xff]
        %v1174 = vld [vmem:[#allocation4 + $0x1a8] sm:$0xff]
        %v1175 = vld [vmem:[#allocation4 + $0x1b0] sm:$0xff]
        %v1176 = vld [vmem:[#allocation4 + $0x1b8] sm:$0xff]
        %v1177 = vld [vmem:[#allocation4 + $0x1c0] sm:$0xff]
        %v1178 = vld [vmem:[#allocation4 + $0x1c8] sm:$0xff]
        %v1179 = vld [vmem:[#allocation4 + $0x1d0] sm:$0xff]
        %v1180 = vld [vmem:[#allocation4 + $0x1d8] sm:$0xff]
        %v1181 = vld [vmem:[#allocation4 + $0x1e0] sm:$0xff]
        %v1182 = vld [vmem:[#allocation4 + $0x1e8] sm:$0xff]
        %v1183 = vld [vmem:[#allocation4 + $0x1f0] sm:$0xff]
        %v1184 = vld [vmem:[#allocation4 + $0x1f8] sm:$0xff]
        %v1185 = vld [vmem:[#allocation4 + $0x200] sm:$0xff]
        %v1186 = vld [vmem:[#allocation4 + $0x208] sm:$0xff]
        %v1187 = vld [vmem:[#allocation4 + $0x210] sm:$0xff]
        %v1188 = vld [vmem:[#allocation4 + $0x218] sm:$0xff]
        %v1189 = vld [vmem:[#allocation4 + $0x220] sm:$0xff]
        %v1190 = vld [vmem:[#allocation4 + $0x228] sm:$0xff]
        %v1191 = vld [vmem:[#allocation4 + $0x230] sm:$0xff]
        %v1192 = vld [vmem:[#allocation4 + $0x238] sm:$0xff]
        %v1193 = vld [vmem:[#allocation4 + $0x240] sm:$0xff]
        %v1194 = vld [vmem:[#allocation4 + $0x248] sm:$0xff]
        %v1195 = vld [vmem:[#allocation4 + $0x250] sm:$0xff]
        %v1196 = vld [vmem:[#allocation4 + $0x258] sm:$0xff]
        %v1197 = vld [vmem:[#allocation4 + $0x260] sm:$0xff]
        %v1198 = vld [vmem:[#allocation4 + $0x268] sm:$0xff]
        %v1199 = vld [vmem:[#allocation4 + $0x270] sm:$0xff]
        %v1200 = vld [vmem:[#allocation4 + $0x278] sm:$0xff]
        %v1201 = vld [vmem:[#allocation4 + $0x280] sm:$0xff]
        %v1202 = vld [vmem:[#allocation4 + $0x288] sm:$0xff]
        %v1203 = vld [vmem:[#allocation4 + $0x290] sm:$0xff]
        %v1204 = vld [vmem:[#allocation4 + $0x298] sm:$0xff]
        %v1205 = vld [vmem:[#allocation4 + $0x2a0] sm:$0xff]
        %v1206 = vld [vmem:[#allocation4 + $0x2a8] sm:$0xff]
        %v1207 = vld [vmem:[#allocation4 + $0x2b0] sm:$0xff]
        %v1208 = vld [vmem:[#allocation4 + $0x2b8] sm:$0xff]
        %v1209 = vld [vmem:[#allocation4 + $0x2c0] sm:$0xff]
        %v1210 = vld [vmem:[#allocation4 + $0x2c8] sm:$0xff]
        %v1211 = vld [vmem:[#allocation4 + $0x2d0] sm:$0xff]
        %v1212 = vld [vmem:[#allocation4 + $0x2d8] sm:$0xff]
        %v1213 = vld [vmem:[#allocation4 + $0x2e0] sm:$0xff]
        %v1214 = vld [vmem:[#allocation4 + $0x2e8] sm:$0xff]
        %v1215 = vld [vmem:[#allocation4 + $0x2f0] sm:$0xff]
        %v1216 = vld [vmem:[#allocation4 + $0x2f8] sm:$0xff]
        %v1217 = vld [vmem:[#allocation4 + $0x300] sm:$0xff]
        %v1218 = vld [vmem:[#allocation4 + $0x308] sm:$0xff]
        %v1219 = vld [vmem:[#allocation4 + $0x310] sm:$0xff]
        %v1220 = vld [vmem:[#allocation4 + $0x318] sm:$0xff]
        %v1221 = vld [vmem:[#allocation4 + $0x320] sm:$0xff]
        %v1222 = vld [vmem:[#allocation4 + $0x328] sm:$0xff]
        %v1223 = vld [vmem:[#allocation4 + $0x330] sm:$0xff]
        %v1224 = vld [vmem:[#allocation4 + $0x338] sm:$0xff]
        %v1225 = vld [vmem:[#allocation4 + $0x340] sm:$0xff]
        %v1226 = vld [vmem:[#allocation4 + $0x348] sm:$0xff]
        %v1227 = vld [vmem:[#allocation4 + $0x350] sm:$0xff]
        %v1228 = vld [vmem:[#allocation4 + $0x358] sm:$0xff]
        %v1229 = vld [vmem:[#allocation4 + $0x360] sm:$0xff]
        %v1230 = vld [vmem:[#allocation4 + $0x368] sm:$0xff]
        %v1231 = vld [vmem:[#allocation4 + $0x370] sm:$0xff]
        %v1232 = vld [vmem:[#allocation4 + $0x378] sm:$0xff]
        %v1233 = vld [vmem:[#allocation4 + $0x380] sm:$0xff]
        %v1234 = vld [vmem:[#allocation4 + $0x388] sm:$0xff]
        %v1235 = vld [vmem:[#allocation4 + $0x390] sm:$0xff]
        %v1236 = vld [vmem:[#allocation4 + $0x398] sm:$0xff]
        %v1237 = vld [vmem:[#allocation4 + $0x3a0] sm:$0xff]
        %v1238 = vld [vmem:[#allocation4 + $0x3a8] sm:$0xff]
        %v1239 = vld [vmem:[#allocation4 + $0x3b0] sm:$0xff]
        %v1240 = vld [vmem:[#allocation4 + $0x3b8] sm:$0xff]
        %v1241 = vld [vmem:[#allocation4 + $0x3c0] sm:$0xff]
        %v1242 = vld [vmem:[#allocation4 + $0x3c8] sm:$0xff]
        %v1243 = vld [vmem:[#allocation4 + $0x3d0] sm:$0xff]
        %v1244 = vld [vmem:[#allocation4 + $0x3d8] sm:$0xff]
        %v1245 = vld [vmem:[#allocation4 + $0x3e0] sm:$0xff]
        %v1246 = vld [vmem:[#allocation4 + $0x3e8] sm:$0xff]
        %v1247 = vld [vmem:[#allocation4 + $0x3f0] sm:$0xff]
        %v1248 = vld [vmem:[#allocation4 + $0x3f8] sm:$0xff]
        %v1249 = vld [vmem:[#allocation4 + $0x400] sm:$0xff]
        %v1250 = vld [vmem:[#allocation4 + $0x408] sm:$0xff]
        %v1251 = vld [vmem:[#allocation4 + $0x410] sm:$0xff]
        %v1252 = vld [vmem:[#allocation4 + $0x418] sm:$0xff]
        %v1253 = vld [vmem:[#allocation4 + $0x420] sm:$0xff]
        %v1254 = vld [vmem:[#allocation4 + $0x428] sm:$0xff]
        %v1255 = vld [vmem:[#allocation4 + $0x430] sm:$0xff]
        %v1256 = vld [vmem:[#allocation4 + $0x438] sm:$0xff]
        %v1257 = vld [vmem:[#allocation4 + $0x440] sm:$0xff]
        %v1258 = vld [vmem:[#allocation4 + $0x448] sm:$0xff]
        %v1259 = vld [vmem:[#allocation4 + $0x450] sm:$0xff]
        %v1260 = vld [vmem:[#allocation4 + $0x458] sm:$0xff]
        %v1261 = vld [vmem:[#allocation4 + $0x460] sm:$0xff]
        %v1262 = vld [vmem:[#allocation4 + $0x468] sm:$0xff]
        %v1263 = vld [vmem:[#allocation4 + $0x470] sm:$0xff]
        %v1264 = vld [vmem:[#allocation4 + $0x478] sm:$0xff]
        %v1265 = vld [vmem:[#allocation4 + $0x480] sm:$0xff]
        %v1266 = vld [vmem:[#allocation4 + $0x488] sm:$0xff]
        %v1267 = vld [vmem:[#allocation4 + $0x490] sm:$0xff]
        %v1268 = vld [vmem:[#allocation4 + $0x498] sm:$0xff]
        %v1269 = vld [vmem:[#allocation4 + $0x4a0] sm:$0xff]
        %v1270 = vld [vmem:[#allocation4 + $0x4a8] sm:$0xff]
        %v1271 = vld [vmem:[#allocation4 + $0x4b0] sm:$0xff]
        %v1272 = vld [vmem:[#allocation4 + $0x4b8] sm:$0xff]
        %v1273 = vld [vmem:[#allocation4 + $0x4c0] sm:$0xff]
        %v1274 = vld [vmem:[#allocation4 + $0x4c8] sm:$0xff]
        %v1275 = vld [vmem:[#allocation4 + $0x4d0] sm:$0xff]
        %v1276 = vld [vmem:[#allocation4 + $0x4d8] sm:$0xff]
        %v1277 = vld [vmem:[#allocation4 + $0x4e0] sm:$0xff]
        %v1278 = vld [vmem:[#allocation4 + $0x4e8] sm:$0xff]
        %v1279 = vld [vmem:[#allocation4 + $0x4f0] sm:$0xff]
        %v1280 = vld [vmem:[#allocation4 + $0x4f8] sm:$0xff]
        %v1281 = vld [vmem:[#allocation4 + $0x500] sm:$0xff]
        %v1282 = vld [vmem:[#allocation4 + $0x508] sm:$0xff]
        %v1283 = vld [vmem:[#allocation4 + $0x510] sm:$0xff]
        %v1284 = vld [vmem:[#allocation4 + $0x518] sm:$0xff]
        %v1285 = vld [vmem:[#allocation4 + $0x520] sm:$0xff]
        %v1286 = vld [vmem:[#allocation4 + $0x528] sm:$0xff]
        %v1287 = vld [vmem:[#allocation4 + $0x530] sm:$0xff]
        %v1288 = vld [vmem:[#allocation4 + $0x538] sm:$0xff]
        %v1289 = vld [vmem:[#allocation4 + $0x540] sm:$0xff]
        %v1290 = vld [vmem:[#allocation4 + $0x548] sm:$0xff]
        %v1291 = vld [vmem:[#allocation4 + $0x550] sm:$0xff]
        %v1292 = vld [vmem:[#allocation4 + $0x558] sm:$0xff]
        %v1293 = vld [vmem:[#allocation4 + $0x560] sm:$0xff]
        %v1294 = vld [vmem:[#allocation4 + $0x568] sm:$0xff]
        %v1295 = vld [vmem:[#allocation4 + $0x570] sm:$0xff]
        %v1296 = vld [vmem:[#allocation4 + $0x578] sm:$0xff]
        %v1297 = vld [vmem:[#allocation4 + $0x580] sm:$0xff]
        %v1298 = vld [vmem:[#allocation4 + $0x588] sm:$0xff]
        %v1299 = vld [vmem:[#allocation4 + $0x590] sm:$0xff]
        %v1300 = vld [vmem:[#allocation4 + $0x598] sm:$0xff]
        %v1301 = vld [vmem:[#allocation4 + $0x5a0] sm:$0xff]
        %v1302 = vld [vmem:[#allocation4 + $0x5a8] sm:$0xff]
        %v1303 = vld [vmem:[#allocation4 + $0x5b0] sm:$0xff]
        %v1304 = vld [vmem:[#allocation4 + $0x5b8] sm:$0xff]
        %v1305 = vld [vmem:[#allocation4 + $0x5c0] sm:$0xff]
        %v1306 = vld [vmem:[#allocation4 + $0x5c8] sm:$0xff]
        %v1307 = vld [vmem:[#allocation4 + $0x5d0] sm:$0xff]
        %v1308 = vld [vmem:[#allocation4 + $0x5d8] sm:$0xff]
        %v1309 = vld [vmem:[#allocation4 + $0x5e0] sm:$0xff]
        %v1310 = vld [vmem:[#allocation4 + $0x5e8] sm:$0xff]
        %v1311 = vld [vmem:[#allocation4 + $0x5f0] sm:$0xff]
        %v1312 = vld [vmem:[#allocation4 + $0x5f8] sm:$0xff]
        %v1313 = vld [vmem:[#allocation4 + $0x600] sm:$0xff]
        %v1314 = vld [vmem:[#allocation4 + $0x608] sm:$0xff]
        %v1315 = vld [vmem:[#allocation4 + $0x610] sm:$0xff]
        %v1316 = vld [vmem:[#allocation4 + $0x618] sm:$0xff]
        %v1317 = vld [vmem:[#allocation4 + $0x620] sm:$0xff]
        %v1318 = vld [vmem:[#allocation4 + $0x628] sm:$0xff]
        %v1319 = vld [vmem:[#allocation4 + $0x630] sm:$0xff]
        %v1320 = vld [vmem:[#allocation4 + $0x638] sm:$0xff]
        %v1321 = vld [vmem:[#allocation4 + $0x640] sm:$0xff]
        %v1322 = vld [vmem:[#allocation4 + $0x648] sm:$0xff]
        %v1323 = vld [vmem:[#allocation4 + $0x650] sm:$0xff]
        %v1324 = vld [vmem:[#allocation4 + $0x658] sm:$0xff]
        %v1325 = vld [vmem:[#allocation4 + $0x660] sm:$0xff]
        %v1326 = vld [vmem:[#allocation4 + $0x668] sm:$0xff]
        %v1327 = vld [vmem:[#allocation4 + $0x670] sm:$0xff]
        %v1328 = vld [vmem:[#allocation4 + $0x678] sm:$0xff]
        %v1329 = vld [vmem:[#allocation4 + $0x680] sm:$0xff]
        %v1330 = vld [vmem:[#allocation4 + $0x688] sm:$0xff]
        %v1331 = vld [vmem:[#allocation4 + $0x690] sm:$0xff]
        %v1332 = vld [vmem:[#allocation4 + $0x698] sm:$0xff]
        %v1333 = vld [vmem:[#allocation4 + $0x6a0] sm:$0xff]
        %v1334 = vld [vmem:[#allocation4 + $0x6a8] sm:$0xff]
        %v1335 = vld [vmem:[#allocation4 + $0x6b0] sm:$0xff]
        %v1336 = vld [vmem:[#allocation4 + $0x6b8] sm:$0xff]
        %v1337 = vld [vmem:[#allocation4 + $0x6c0] sm:$0xff]
        %v1338 = vld [vmem:[#allocation4 + $0x6c8] sm:$0xff]
        %v1339 = vld [vmem:[#allocation4 + $0x6d0] sm:$0xff]
        %v1340 = vld [vmem:[#allocation4 + $0x6d8] sm:$0xff]
        %v1341 = vld [vmem:[#allocation4 + $0x6e0] sm:$0xff]
        %v1342 = vld [vmem:[#allocation4 + $0x6e8] sm:$0xff]
        %v1343 = vld [vmem:[#allocation4 + $0x6f0] sm:$0xff]
        %v1344 = vld [vmem:[#allocation4 + $0x6f8] sm:$0xff]
        %v1345 = vld [vmem:[#allocation4 + $0x700] sm:$0xff]
        %v1346 = vld [vmem:[#allocation4 + $0x708] sm:$0xff]
        %v1347 = vld [vmem:[#allocation4 + $0x710] sm:$0xff]
        %v1348 = vld [vmem:[#allocation4 + $0x718] sm:$0xff]
        %v1349 = vld [vmem:[#allocation4 + $0x720] sm:$0xff]
        %v1350 = vld [vmem:[#allocation4 + $0x728] sm:$0xff]
        %v1351 = vld [vmem:[#allocation4 + $0x730] sm:$0xff]
        %v1352 = vld [vmem:[#allocation4 + $0x738] sm:$0xff]
        %v1353 = vld [vmem:[#allocation4 + $0x740] sm:$0xff]
        %v1354 = vld [vmem:[#allocation4 + $0x748] sm:$0xff]
        %v1355 = vld [vmem:[#allocation4 + $0x750] sm:$0xff]
        %v1356 = vld [vmem:[#allocation4 + $0x758] sm:$0xff]
        %v1357 = vld [vmem:[#allocation4 + $0x760] sm:$0xff]
        %v1358 = vld [vmem:[#allocation4 + $0x768] sm:$0xff]
        %v1359 = vld [vmem:[#allocation4 + $0x770] sm:$0xff]
        %v1360 = vld [vmem:[#allocation4 + $0x778] sm:$0xff]
        %v1361 = vld [vmem:[#allocation4 + $0x780] sm:$0xff]
        %v1362 = vld [vmem:[#allocation4 + $0x788] sm:$0xff]
        %v1363 = vld [vmem:[#allocation4 + $0x790] sm:$0xff]
        %v1364 = vld [vmem:[#allocation4 + $0x798] sm:$0xff]
        %v1365 = vld [vmem:[#allocation4 + $0x7a0] sm:$0xff]
        %v1366 = vld [vmem:[#allocation4 + $0x7a8] sm:$0xff]
        %v1367 = vld [vmem:[#allocation4 + $0x7b0] sm:$0xff]
        %v1368 = vld [vmem:[#allocation4 + $0x7b8] sm:$0xff]
        %v1369 = vld [vmem:[#allocation4 + $0x7c0] sm:$0xff]
        %v1370 = vld [vmem:[#allocation4 + $0x7c8] sm:$0xff]
        %v1371 = vld [vmem:[#allocation4 + $0x7d0] sm:$0xff]
        %v1372 = vld [vmem:[#allocation4 + $0x7d8] sm:$0xff]
        %v1373 = vld [vmem:[#allocation4 + $0x7e0] sm:$0xff]
        %v1374 = vld [vmem:[#allocation4 + $0x7e8] sm:$0xff]
        %v1375 = vld [vmem:[#allocation4 + $0x7f0] sm:$0xff]
        %v1376 = vld [vmem:[#allocation4 + $0x7f8] sm:$0xff]
        %v1377 = vld [vmem:[#allocation6] sm:$0xf]
        %v1379 = vlaneseq
        %v1380 = vshrl.u32 %v1379, 7
        %v1381 = vsub.s32 0, %v1380
        %v1382 = vrot.slane %v1377, %v1381
        %v1383 = vlaneseq
        %v1384 = vshrl.u32 %v1383, 7
        %v1385 = vsub.s32 1, %v1384
        %v1386 = vrot.slane %v1377, %v1385
        %v1387 = vlaneseq
        %v1388 = vshrl.u32 %v1387, 7
        %v1389 = vsub.s32 2, %v1388
        %v1390 = vrot.slane %v1377, %v1389
        %v1391 = vlaneseq
        %v1392 = vshrl.u32 %v1391, 7
        %v1393 = vsub.s32 3, %v1392
        %v1394 = vrot.slane %v1377, %v1393
        %v1655 = vunpack.c.l.b16 %v1121
        %v1656 = vunpack.c.h.b16 %v1121
        %v1657 = vunpack.c.l.b16 %v1122
        %v1658 = vunpack.c.h.b16 %v1122
        %v1659 = vunpack.c.l.b16 %v1123
        %v1660 = vunpack.c.h.b16 %v1123
        %v1661 = vunpack.c.l.b16 %v1124
        %v1662 = vunpack.c.h.b16 %v1124
        %v1663 = vunpack.c.l.b16 %v1125
        %v1664 = vunpack.c.h.b16 %v1125
        %v1665 = vunpack.c.l.b16 %v1126
        %v1666 = vunpack.c.h.b16 %v1126
        %v1667 = vunpack.c.l.b16 %v1127
        %v1668 = vunpack.c.h.b16 %v1127
        %v1669 = vunpack.c.l.b16 %v1128
        %v1670 = vunpack.c.h.b16 %v1128
        %v1671 = vunpack.c.l.b16 %v1129
        %v1672 = vunpack.c.h.b16 %v1129
        %v1673 = vunpack.c.l.b16 %v1130
        %v1674 = vunpack.c.h.b16 %v1130
        %v1675 = vunpack.c.l.b16 %v1131
        %v1676 = vunpack.c.h.b16 %v1131
        %v1677 = vunpack.c.l.b16 %v1132
        %v1678 = vunpack.c.h.b16 %v1132
        %v1679 = vunpack.c.l.b16 %v1133
        %v1680 = vunpack.c.h.b16 %v1133
        %v1681 = vunpack.c.l.b16 %v1134
        %v1682 = vunpack.c.h.b16 %v1134
        %v1683 = vunpack.c.l.b16 %v1135
        %v1684 = vunpack.c.h.b16 %v1135
        %v1685 = vunpack.c.l.b16 %v1136
        %v1686 = vunpack.c.h.b16 %v1136
        %v1687 = vunpack.c.l.b16 %v1137
        %v1688 = vunpack.c.h.b16 %v1137
        %v1689 = vunpack.c.l.b16 %v1138
        %v1690 = vunpack.c.h.b16 %v1138
        %v1691 = vunpack.c.l.b16 %v1139
        %v1692 = vunpack.c.h.b16 %v1139
        %v1693 = vunpack.c.l.b16 %v1140
        %v1694 = vunpack.c.h.b16 %v1140
        %v1695 = vunpack.c.l.b16 %v1141
        %v1696 = vunpack.c.h.b16 %v1141
        %v1697 = vunpack.c.l.b16 %v1142
        %v1698 = vunpack.c.h.b16 %v1142
        %v1699 = vunpack.c.l.b16 %v1143
        %v1700 = vunpack.c.h.b16 %v1143
        %v1701 = vunpack.c.l.b16 %v1144
        %v1702 = vunpack.c.h.b16 %v1144
        %v1703 = vunpack.c.l.b16 %v1145
        %v1704 = vunpack.c.h.b16 %v1145
        %v1705 = vunpack.c.l.b16 %v1146
        %v1706 = vunpack.c.h.b16 %v1146
        %v1707 = vunpack.c.l.b16 %v1147
        %v1708 = vunpack.c.h.b16 %v1147
        %v1709 = vunpack.c.l.b16 %v1148
        %v1710 = vunpack.c.h.b16 %v1148
        %v1711 = vunpack.c.l.b16 %v1149
        %v1712 = vunpack.c.h.b16 %v1149
        %v1713 = vunpack.c.l.b16 %v1150
        %v1714 = vunpack.c.h.b16 %v1150
        %v1715 = vunpack.c.l.b16 %v1151
        %v1716 = vunpack.c.h.b16 %v1151
        %v1717 = vunpack.c.l.b16 %v1152
        %v1718 = vunpack.c.h.b16 %v1152
        %v1719 = vunpack.c.l.b16 %v1153
        %v1720 = vunpack.c.h.b16 %v1153
        %v1721 = vunpack.c.l.b16 %v1154
        %v1722 = vunpack.c.h.b16 %v1154
        %v1723 = vunpack.c.l.b16 %v1155
        %v1724 = vunpack.c.h.b16 %v1155
        %v1725 = vunpack.c.l.b16 %v1156
        %v1726 = vunpack.c.h.b16 %v1156
        %v1727 = vunpack.c.l.b16 %v1157
        %v1728 = vunpack.c.h.b16 %v1157
        %v1729 = vunpack.c.l.b16 %v1158
        %v1730 = vunpack.c.h.b16 %v1158
        %v1731 = vunpack.c.l.b16 %v1159
        %v1732 = vunpack.c.h.b16 %v1159
        %v1733 = vunpack.c.l.b16 %v1160
        %v1734 = vunpack.c.h.b16 %v1160
        %v1735 = vunpack.c.l.b16 %v1161
        %v1736 = vunpack.c.h.b16 %v1161
        %v1737 = vunpack.c.l.b16 %v1162
        %v1738 = vunpack.c.h.b16 %v1162
        %v1739 = vunpack.c.l.b16 %v1163
        %v1740 = vunpack.c.h.b16 %v1163
        %v1741 = vunpack.c.l.b16 %v1164
        %v1742 = vunpack.c.h.b16 %v1164
        %v1743 = vunpack.c.l.b16 %v1165
        %v1744 = vunpack.c.h.b16 %v1165
        %v1745 = vunpack.c.l.b16 %v1166
        %v1746 = vunpack.c.h.b16 %v1166
        %v1747 = vunpack.c.l.b16 %v1167
        %v1748 = vunpack.c.h.b16 %v1167
        %v1749 = vunpack.c.l.b16 %v1168
        %v1750 = vunpack.c.h.b16 %v1168
        %v1751 = vunpack.c.l.b16 %v1169
        %v1752 = vunpack.c.h.b16 %v1169
        %v1753 = vunpack.c.l.b16 %v1170
        %v1754 = vunpack.c.h.b16 %v1170
        %v1755 = vunpack.c.l.b16 %v1171
        %v1756 = vunpack.c.h.b16 %v1171
        %v1757 = vunpack.c.l.b16 %v1172
        %v1758 = vunpack.c.h.b16 %v1172
        %v1759 = vunpack.c.l.b16 %v1173
        %v1760 = vunpack.c.h.b16 %v1173
        %v1761 = vunpack.c.l.b16 %v1174
        %v1762 = vunpack.c.h.b16 %v1174
        %v1763 = vunpack.c.l.b16 %v1175
        %v1764 = vunpack.c.h.b16 %v1175
        %v1765 = vunpack.c.l.b16 %v1176
        %v1766 = vunpack.c.h.b16 %v1176
        %v1767 = vunpack.c.l.b16 %v1177
        %v1768 = vunpack.c.h.b16 %v1177
        %v1769 = vunpack.c.l.b16 %v1178
        %v1770 = vunpack.c.h.b16 %v1178
        %v1771 = vunpack.c.l.b16 %v1179
        %v1772 = vunpack.c.h.b16 %v1179
        %v1773 = vunpack.c.l.b16 %v1180
        %v1774 = vunpack.c.h.b16 %v1180
        %v1775 = vunpack.c.l.b16 %v1181
        %v1776 = vunpack.c.h.b16 %v1181
        %v1777 = vunpack.c.l.b16 %v1182
        %v1778 = vunpack.c.h.b16 %v1182
        %v1779 = vunpack.c.l.b16 %v1183
        %v1780 = vunpack.c.h.b16 %v1183
        %v1781 = vunpack.c.l.b16 %v1184
        %v1782 = vunpack.c.h.b16 %v1184
        %v1783 = vunpack.c.l.b16 %v1185
        %v1784 = vunpack.c.h.b16 %v1185
        %v1785 = vunpack.c.l.b16 %v1186
        %v1786 = vunpack.c.h.b16 %v1186
        %v1787 = vunpack.c.l.b16 %v1187
        %v1788 = vunpack.c.h.b16 %v1187
        %v1789 = vunpack.c.l.b16 %v1188
        %v1790 = vunpack.c.h.b16 %v1188
        %v1791 = vunpack.c.l.b16 %v1189
        %v1792 = vunpack.c.h.b16 %v1189
        %v1793 = vunpack.c.l.b16 %v1190
        %v1794 = vunpack.c.h.b16 %v1190
        %v1795 = vunpack.c.l.b16 %v1191
        %v1796 = vunpack.c.h.b16 %v1191
        %v1797 = vunpack.c.l.b16 %v1192
        %v1798 = vunpack.c.h.b16 %v1192
        %v1799 = vunpack.c.l.b16 %v1193
        %v1800 = vunpack.c.h.b16 %v1193
        %v1801 = vunpack.c.l.b16 %v1194
        %v1802 = vunpack.c.h.b16 %v1194
        %v1803 = vunpack.c.l.b16 %v1195
        %v1804 = vunpack.c.h.b16 %v1195
        %v1805 = vunpack.c.l.b16 %v1196
        %v1806 = vunpack.c.h.b16 %v1196
        %v1807 = vunpack.c.l.b16 %v1197
        %v1808 = vunpack.c.h.b16 %v1197
        %v1809 = vunpack.c.l.b16 %v1198
        %v1810 = vunpack.c.h.b16 %v1198
        %v1811 = vunpack.c.l.b16 %v1199
        %v1812 = vunpack.c.h.b16 %v1199
        %v1813 = vunpack.c.l.b16 %v1200
        %v1814 = vunpack.c.h.b16 %v1200
        %v1815 = vunpack.c.l.b16 %v1201
        %v1816 = vunpack.c.h.b16 %v1201
        %v1817 = vunpack.c.l.b16 %v1202
        %v1818 = vunpack.c.h.b16 %v1202
        %v1819 = vunpack.c.l.b16 %v1203
        %v1820 = vunpack.c.h.b16 %v1203
        %v1821 = vunpack.c.l.b16 %v1204
        %v1822 = vunpack.c.h.b16 %v1204
        %v1823 = vunpack.c.l.b16 %v1205
        %v1824 = vunpack.c.h.b16 %v1205
        %v1825 = vunpack.c.l.b16 %v1206
        %v1826 = vunpack.c.h.b16 %v1206
        %v1827 = vunpack.c.l.b16 %v1207
        %v1828 = vunpack.c.h.b16 %v1207
        %v1829 = vunpack.c.l.b16 %v1208
        %v1830 = vunpack.c.h.b16 %v1208
        %v1831 = vunpack.c.l.b16 %v1209
        %v1832 = vunpack.c.h.b16 %v1209
        %v1833 = vunpack.c.l.b16 %v1210
        %v1834 = vunpack.c.h.b16 %v1210
        %v1835 = vunpack.c.l.b16 %v1211
        %v1836 = vunpack.c.h.b16 %v1211
        %v1837 = vunpack.c.l.b16 %v1212
        %v1838 = vunpack.c.h.b16 %v1212
        %v1839 = vunpack.c.l.b16 %v1213
        %v1840 = vunpack.c.h.b16 %v1213
        %v1841 = vunpack.c.l.b16 %v1214
        %v1842 = vunpack.c.h.b16 %v1214
        %v1843 = vunpack.c.l.b16 %v1215
        %v1844 = vunpack.c.h.b16 %v1215
        %v1845 = vunpack.c.l.b16 %v1216
        %v1846 = vunpack.c.h.b16 %v1216
        %v1847 = vunpack.c.l.b16 %v1217
        %v1848 = vunpack.c.h.b16 %v1217
        %v1849 = vunpack.c.l.b16 %v1218
        %v1850 = vunpack.c.h.b16 %v1218
        %v1851 = vunpack.c.l.b16 %v1219
        %v1852 = vunpack.c.h.b16 %v1219
        %v1853 = vunpack.c.l.b16 %v1220
        %v1854 = vunpack.c.h.b16 %v1220
        %v1855 = vunpack.c.l.b16 %v1221
        %v1856 = vunpack.c.h.b16 %v1221
        %v1857 = vunpack.c.l.b16 %v1222
        %v1858 = vunpack.c.h.b16 %v1222
        %v1859 = vunpack.c.l.b16 %v1223
        %v1860 = vunpack.c.h.b16 %v1223
        %v1861 = vunpack.c.l.b16 %v1224
        %v1862 = vunpack.c.h.b16 %v1224
        %v1863 = vunpack.c.l.b16 %v1225
        %v1864 = vunpack.c.h.b16 %v1225
        %v1865 = vunpack.c.l.b16 %v1226
        %v1866 = vunpack.c.h.b16 %v1226
        %v1867 = vunpack.c.l.b16 %v1227
        %v1868 = vunpack.c.h.b16 %v1227
        %v1869 = vunpack.c.l.b16 %v1228
        %v1870 = vunpack.c.h.b16 %v1228
        %v1871 = vunpack.c.l.b16 %v1229
        %v1872 = vunpack.c.h.b16 %v1229
        %v1873 = vunpack.c.l.b16 %v1230
        %v1874 = vunpack.c.h.b16 %v1230
        %v1875 = vunpack.c.l.b16 %v1231
        %v1876 = vunpack.c.h.b16 %v1231
        %v1877 = vunpack.c.l.b16 %v1232
        %v1878 = vunpack.c.h.b16 %v1232
        %v1879 = vunpack.c.l.b16 %v1233
        %v1880 = vunpack.c.h.b16 %v1233
        %v1881 = vunpack.c.l.b16 %v1234
        %v1882 = vunpack.c.h.b16 %v1234
        %v1883 = vunpack.c.l.b16 %v1235
        %v1884 = vunpack.c.h.b16 %v1235
        %v1885 = vunpack.c.l.b16 %v1236
        %v1886 = vunpack.c.h.b16 %v1236
        %v1887 = vunpack.c.l.b16 %v1237
        %v1888 = vunpack.c.h.b16 %v1237
        %v1889 = vunpack.c.l.b16 %v1238
        %v1890 = vunpack.c.h.b16 %v1238
        %v1891 = vunpack.c.l.b16 %v1239
        %v1892 = vunpack.c.h.b16 %v1239
        %v1893 = vunpack.c.l.b16 %v1240
        %v1894 = vunpack.c.h.b16 %v1240
        %v1895 = vunpack.c.l.b16 %v1241
        %v1896 = vunpack.c.h.b16 %v1241
        %v1897 = vunpack.c.l.b16 %v1242
        %v1898 = vunpack.c.h.b16 %v1242
        %v1899 = vunpack.c.l.b16 %v1243
        %v1900 = vunpack.c.h.b16 %v1243
        %v1901 = vunpack.c.l.b16 %v1244
        %v1902 = vunpack.c.h.b16 %v1244
        %v1903 = vunpack.c.l.b16 %v1245
        %v1904 = vunpack.c.h.b16 %v1245
        %v1905 = vunpack.c.l.b16 %v1246
        %v1906 = vunpack.c.h.b16 %v1246
        %v1907 = vunpack.c.l.b16 %v1247
        %v1908 = vunpack.c.h.b16 %v1247
        %v1909 = vunpack.c.l.b16 %v1248
        %v1910 = vunpack.c.h.b16 %v1248
        %v1911 = vunpack.c.l.b16 %v1249
        %v1912 = vunpack.c.h.b16 %v1249
        %v1913 = vunpack.c.l.b16 %v1250
        %v1914 = vunpack.c.h.b16 %v1250
        %v1915 = vunpack.c.l.b16 %v1251
        %v1916 = vunpack.c.h.b16 %v1251
        %v1917 = vunpack.c.l.b16 %v1252
        %v1918 = vunpack.c.h.b16 %v1252
        %v1919 = vunpack.c.l.b16 %v1253
        %v1920 = vunpack.c.h.b16 %v1253
        %v1921 = vunpack.c.l.b16 %v1254
        %v1922 = vunpack.c.h.b16 %v1254
        %v1923 = vunpack.c.l.b16 %v1255
        %v1924 = vunpack.c.h.b16 %v1255
        %v1925 = vunpack.c.l.b16 %v1256
        %v1926 = vunpack.c.h.b16 %v1256
        %v1927 = vunpack.c.l.b16 %v1257
        %v1928 = vunpack.c.h.b16 %v1257
        %v1929 = vunpack.c.l.b16 %v1258
        %v1930 = vunpack.c.h.b16 %v1258
        %v1931 = vunpack.c.l.b16 %v1259
        %v1932 = vunpack.c.h.b16 %v1259
        %v1933 = vunpack.c.l.b16 %v1260
        %v1934 = vunpack.c.h.b16 %v1260
        %v1935 = vunpack.c.l.b16 %v1261
        %v1936 = vunpack.c.h.b16 %v1261
        %v1937 = vunpack.c.l.b16 %v1262
        %v1938 = vunpack.c.h.b16 %v1262
        %v1939 = vunpack.c.l.b16 %v1263
        %v1940 = vunpack.c.h.b16 %v1263
        %v1941 = vunpack.c.l.b16 %v1264
        %v1942 = vunpack.c.h.b16 %v1264
        %v1943 = vunpack.c.l.b16 %v1265
        %v1944 = vunpack.c.h.b16 %v1265
        %v1945 = vunpack.c.l.b16 %v1266
        %v1946 = vunpack.c.h.b16 %v1266
        %v1947 = vunpack.c.l.b16 %v1267
        %v1948 = vunpack.c.h.b16 %v1267
        %v1949 = vunpack.c.l.b16 %v1268
        %v1950 = vunpack.c.h.b16 %v1268
        %v1951 = vunpack.c.l.b16 %v1269
        %v1952 = vunpack.c.h.b16 %v1269
        %v1953 = vunpack.c.l.b16 %v1270
        %v1954 = vunpack.c.h.b16 %v1270
        %v1955 = vunpack.c.l.b16 %v1271
        %v1956 = vunpack.c.h.b16 %v1271
        %v1957 = vunpack.c.l.b16 %v1272
        %v1958 = vunpack.c.h.b16 %v1272
        %v1959 = vunpack.c.l.b16 %v1273
        %v1960 = vunpack.c.h.b16 %v1273
        %v1961 = vunpack.c.l.b16 %v1274
        %v1962 = vunpack.c.h.b16 %v1274
        %v1963 = vunpack.c.l.b16 %v1275
        %v1964 = vunpack.c.h.b16 %v1275
        %v1965 = vunpack.c.l.b16 %v1276
        %v1966 = vunpack.c.h.b16 %v1276
        %v1967 = vunpack.c.l.b16 %v1277
        %v1968 = vunpack.c.h.b16 %v1277
        %v1969 = vunpack.c.l.b16 %v1278
        %v1970 = vunpack.c.h.b16 %v1278
        %v1971 = vunpack.c.l.b16 %v1279
        %v1972 = vunpack.c.h.b16 %v1279
        %v1973 = vunpack.c.l.b16 %v1280
        %v1974 = vunpack.c.h.b16 %v1280
        %v1975 = vunpack.c.l.b16 %v1281
        %v1976 = vunpack.c.h.b16 %v1281
        %v1977 = vunpack.c.l.b16 %v1282
        %v1978 = vunpack.c.h.b16 %v1282
        %v1979 = vunpack.c.l.b16 %v1283
        %v1980 = vunpack.c.h.b16 %v1283
        %v1981 = vunpack.c.l.b16 %v1284
        %v1982 = vunpack.c.h.b16 %v1284
        %v1983 = vunpack.c.l.b16 %v1285
        %v1984 = vunpack.c.h.b16 %v1285
        %v1985 = vunpack.c.l.b16 %v1286
        %v1986 = vunpack.c.h.b16 %v1286
        %v1987 = vunpack.c.l.b16 %v1287
        %v1988 = vunpack.c.h.b16 %v1287
        %v1989 = vunpack.c.l.b16 %v1288
        %v1990 = vunpack.c.h.b16 %v1288
        %v1991 = vunpack.c.l.b16 %v1289
        %v1992 = vunpack.c.h.b16 %v1289
        %v1993 = vunpack.c.l.b16 %v1290
        %v1994 = vunpack.c.h.b16 %v1290
        %v1995 = vunpack.c.l.b16 %v1291
        %v1996 = vunpack.c.h.b16 %v1291
        %v1997 = vunpack.c.l.b16 %v1292
        %v1998 = vunpack.c.h.b16 %v1292
        %v1999 = vunpack.c.l.b16 %v1293
        %v2000 = vunpack.c.h.b16 %v1293
        %v2001 = vunpack.c.l.b16 %v1294
        %v2002 = vunpack.c.h.b16 %v1294
        %v2003 = vunpack.c.l.b16 %v1295
        %v2004 = vunpack.c.h.b16 %v1295
        %v2005 = vunpack.c.l.b16 %v1296
        %v2006 = vunpack.c.h.b16 %v1296
        %v2007 = vunpack.c.l.b16 %v1297
        %v2008 = vunpack.c.h.b16 %v1297
        %v2009 = vunpack.c.l.b16 %v1298
        %v2010 = vunpack.c.h.b16 %v1298
        %v2011 = vunpack.c.l.b16 %v1299
        %v2012 = vunpack.c.h.b16 %v1299
        %v2013 = vunpack.c.l.b16 %v1300
        %v2014 = vunpack.c.h.b16 %v1300
        %v2015 = vunpack.c.l.b16 %v1301
        %v2016 = vunpack.c.h.b16 %v1301
        %v2017 = vunpack.c.l.b16 %v1302
        %v2018 = vunpack.c.h.b16 %v1302
        %v2019 = vunpack.c.l.b16 %v1303
        %v2020 = vunpack.c.h.b16 %v1303
        %v2021 = vunpack.c.l.b16 %v1304
        %v2022 = vunpack.c.h.b16 %v1304
        %v2023 = vunpack.c.l.b16 %v1305
        %v2024 = vunpack.c.h.b16 %v1305
        %v2025 = vunpack.c.l.b16 %v1306
        %v2026 = vunpack.c.h.b16 %v1306
        %v2027 = vunpack.c.l.b16 %v1307
        %v2028 = vunpack.c.h.b16 %v1307
        %v2029 = vunpack.c.l.b16 %v1308
        %v2030 = vunpack.c.h.b16 %v1308
        %v2031 = vunpack.c.l.b16 %v1309
        %v2032 = vunpack.c.h.b16 %v1309
        %v2033 = vunpack.c.l.b16 %v1310
        %v2034 = vunpack.c.h.b16 %v1310
        %v2035 = vunpack.c.l.b16 %v1311
        %v2036 = vunpack.c.h.b16 %v1311
        %v2037 = vunpack.c.l.b16 %v1312
        %v2038 = vunpack.c.h.b16 %v1312
        %v2039 = vunpack.c.l.b16 %v1313
        %v2040 = vunpack.c.h.b16 %v1313
        %v2041 = vunpack.c.l.b16 %v1314
        %v2042 = vunpack.c.h.b16 %v1314
        %v2043 = vunpack.c.l.b16 %v1315
        %v2044 = vunpack.c.h.b16 %v1315
        %v2045 = vunpack.c.l.b16 %v1316
        %v2046 = vunpack.c.h.b16 %v1316
        %v2047 = vunpack.c.l.b16 %v1317
        %v2048 = vunpack.c.h.b16 %v1317
        %v2049 = vunpack.c.l.b16 %v1318
        %v2050 = vunpack.c.h.b16 %v1318
        %v2051 = vunpack.c.l.b16 %v1319
        %v2052 = vunpack.c.h.b16 %v1319
        %v2053 = vunpack.c.l.b16 %v1320
        %v2054 = vunpack.c.h.b16 %v1320
        %v2055 = vunpack.c.l.b16 %v1321
        %v2056 = vunpack.c.h.b16 %v1321
        %v2057 = vunpack.c.l.b16 %v1322
        %v2058 = vunpack.c.h.b16 %v1322
        %v2059 = vunpack.c.l.b16 %v1323
        %v2060 = vunpack.c.h.b16 %v1323
        %v2061 = vunpack.c.l.b16 %v1324
        %v2062 = vunpack.c.h.b16 %v1324
        %v2063 = vunpack.c.l.b16 %v1325
        %v2064 = vunpack.c.h.b16 %v1325
        %v2065 = vunpack.c.l.b16 %v1326
        %v2066 = vunpack.c.h.b16 %v1326
        %v2067 = vunpack.c.l.b16 %v1327
        %v2068 = vunpack.c.h.b16 %v1327
        %v2069 = vunpack.c.l.b16 %v1328
        %v2070 = vunpack.c.h.b16 %v1328
        %v2071 = vunpack.c.l.b16 %v1329
        %v2072 = vunpack.c.h.b16 %v1329
        %v2073 = vunpack.c.l.b16 %v1330
        %v2074 = vunpack.c.h.b16 %v1330
        %v2075 = vunpack.c.l.b16 %v1331
        %v2076 = vunpack.c.h.b16 %v1331
        %v2077 = vunpack.c.l.b16 %v1332
        %v2078 = vunpack.c.h.b16 %v1332
        %v2079 = vunpack.c.l.b16 %v1333
        %v2080 = vunpack.c.h.b16 %v1333
        %v2081 = vunpack.c.l.b16 %v1334
        %v2082 = vunpack.c.h.b16 %v1334
        %v2083 = vunpack.c.l.b16 %v1335
        %v2084 = vunpack.c.h.b16 %v1335
        %v2085 = vunpack.c.l.b16 %v1336
        %v2086 = vunpack.c.h.b16 %v1336
        %v2087 = vunpack.c.l.b16 %v1337
        %v2088 = vunpack.c.h.b16 %v1337
        %v2089 = vunpack.c.l.b16 %v1338
        %v2090 = vunpack.c.h.b16 %v1338
        %v2091 = vunpack.c.l.b16 %v1339
        %v2092 = vunpack.c.h.b16 %v1339
        %v2093 = vunpack.c.l.b16 %v1340
        %v2094 = vunpack.c.h.b16 %v1340
        %v2095 = vunpack.c.l.b16 %v1341
        %v2096 = vunpack.c.h.b16 %v1341
        %v2097 = vunpack.c.l.b16 %v1342
        %v2098 = vunpack.c.h.b16 %v1342
        %v2099 = vunpack.c.l.b16 %v1343
        %v2100 = vunpack.c.h.b16 %v1343
        %v2101 = vunpack.c.l.b16 %v1344
        %v2102 = vunpack.c.h.b16 %v1344
        %v2103 = vunpack.c.l.b16 %v1345
        %v2104 = vunpack.c.h.b16 %v1345
        %v2105 = vunpack.c.l.b16 %v1346
        %v2106 = vunpack.c.h.b16 %v1346
        %v2107 = vunpack.c.l.b16 %v1347
        %v2108 = vunpack.c.h.b16 %v1347
        %v2109 = vunpack.c.l.b16 %v1348
        %v2110 = vunpack.c.h.b16 %v1348
        %v2111 = vunpack.c.l.b16 %v1349
        %v2112 = vunpack.c.h.b16 %v1349
        %v2113 = vunpack.c.l.b16 %v1350
        %v2114 = vunpack.c.h.b16 %v1350
        %v2115 = vunpack.c.l.b16 %v1351
        %v2116 = vunpack.c.h.b16 %v1351
        %v2117 = vunpack.c.l.b16 %v1352
        %v2118 = vunpack.c.h.b16 %v1352
        %v2119 = vunpack.c.l.b16 %v1353
        %v2120 = vunpack.c.h.b16 %v1353
        %v2121 = vunpack.c.l.b16 %v1354
        %v2122 = vunpack.c.h.b16 %v1354
        %v2123 = vunpack.c.l.b16 %v1355
        %v2124 = vunpack.c.h.b16 %v1355
        %v2125 = vunpack.c.l.b16 %v1356
        %v2126 = vunpack.c.h.b16 %v1356
        %v2127 = vunpack.c.l.b16 %v1357
        %v2128 = vunpack.c.h.b16 %v1357
        %v2129 = vunpack.c.l.b16 %v1358
        %v2130 = vunpack.c.h.b16 %v1358
        %v2131 = vunpack.c.l.b16 %v1359
        %v2132 = vunpack.c.h.b16 %v1359
        %v2133 = vunpack.c.l.b16 %v1360
        %v2134 = vunpack.c.h.b16 %v1360
        %v2135 = vunpack.c.l.b16 %v1361
        %v2136 = vunpack.c.h.b16 %v1361
        %v2137 = vunpack.c.l.b16 %v1362
        %v2138 = vunpack.c.h.b16 %v1362
        %v2139 = vunpack.c.l.b16 %v1363
        %v2140 = vunpack.c.h.b16 %v1363
        %v2141 = vunpack.c.l.b16 %v1364
        %v2142 = vunpack.c.h.b16 %v1364
        %v2143 = vunpack.c.l.b16 %v1365
        %v2144 = vunpack.c.h.b16 %v1365
        %v2145 = vunpack.c.l.b16 %v1366
        %v2146 = vunpack.c.h.b16 %v1366
        %v2147 = vunpack.c.l.b16 %v1367
        %v2148 = vunpack.c.h.b16 %v1367
        %v2149 = vunpack.c.l.b16 %v1368
        %v2150 = vunpack.c.h.b16 %v1368
        %v2151 = vunpack.c.l.b16 %v1369
        %v2152 = vunpack.c.h.b16 %v1369
        %v2153 = vunpack.c.l.b16 %v1370
        %v2154 = vunpack.c.h.b16 %v1370
        %v2155 = vunpack.c.l.b16 %v1371
        %v2156 = vunpack.c.h.b16 %v1371
        %v2157 = vunpack.c.l.b16 %v1372
        %v2158 = vunpack.c.h.b16 %v1372
        %v2159 = vunpack.c.l.b16 %v1373
        %v2160 = vunpack.c.h.b16 %v1373
        %v2161 = vunpack.c.l.b16 %v1374
        %v2162 = vunpack.c.h.b16 %v1374
        %v2163 = vunpack.c.l.b16 %v1375
        %v2164 = vunpack.c.h.b16 %v1375
        %v2165 = vunpack.c.l.b16 %v1376
        %v2166 = vunpack.c.h.b16 %v1376
        %v2167 = vpack.c.b16 %v1659, %v1655
        %v2168 = vpack.c.b16 %v1660, %v1656
        %v2169 = vpack.c.b16 %v1661, %v1657
        %v2170 = vpack.c.b16 %v1662, %v1658
        %v2171 = vpack.c.b16 %v1667, %v1663
        %v2172 = vpack.c.b16 %v1668, %v1664
        %v2173 = vpack.c.b16 %v1669, %v1665
        %v2174 = vpack.c.b16 %v1670, %v1666
        %v2175 = vpack.c.b16 %v1675, %v1671
        %v2176 = vpack.c.b16 %v1676, %v1672
        %v2177 = vpack.c.b16 %v1677, %v1673
        %v2178 = vpack.c.b16 %v1678, %v1674
        %v2179 = vpack.c.b16 %v1683, %v1679
        %v2180 = vpack.c.b16 %v1684, %v1680
        %v2181 = vpack.c.b16 %v1685, %v1681
        %v2182 = vpack.c.b16 %v1686, %v1682
        %v2183 = vpack.c.b16 %v1691, %v1687
        %v2184 = vpack.c.b16 %v1692, %v1688
        %v2185 = vpack.c.b16 %v1693, %v1689
        %v2186 = vpack.c.b16 %v1694, %v1690
        %v2187 = vpack.c.b16 %v1699, %v1695
        %v2188 = vpack.c.b16 %v1700, %v1696
        %v2189 = vpack.c.b16 %v1701, %v1697
        %v2190 = vpack.c.b16 %v1702, %v1698
        %v2191 = vpack.c.b16 %v1707, %v1703
        %v2192 = vpack.c.b16 %v1708, %v1704
        %v2193 = vpack.c.b16 %v1709, %v1705
        %v2194 = vpack.c.b16 %v1710, %v1706
        %v2195 = vpack.c.b16 %v1715, %v1711
        %v2196 = vpack.c.b16 %v1716, %v1712
        %v2197 = vpack.c.b16 %v1717, %v1713
        %v2198 = vpack.c.b16 %v1718, %v1714
        %v2199 = vpack.c.b16 %v1723, %v1719
        %v2200 = vpack.c.b16 %v1724, %v1720
        %v2201 = vpack.c.b16 %v1725, %v1721
        %v2202 = vpack.c.b16 %v1726, %v1722
        %v2203 = vpack.c.b16 %v1731, %v1727
        %v2204 = vpack.c.b16 %v1732, %v1728
        %v2205 = vpack.c.b16 %v1733, %v1729
        %v2206 = vpack.c.b16 %v1734, %v1730
        %v2207 = vpack.c.b16 %v1739, %v1735
        %v2208 = vpack.c.b16 %v1740, %v1736
        %v2209 = vpack.c.b16 %v1741, %v1737
        %v2210 = vpack.c.b16 %v1742, %v1738
        %v2211 = vpack.c.b16 %v1747, %v1743
        %v2212 = vpack.c.b16 %v1748, %v1744
        %v2213 = vpack.c.b16 %v1749, %v1745
        %v2214 = vpack.c.b16 %v1750, %v1746
        %v2215 = vpack.c.b16 %v1755, %v1751
        %v2216 = vpack.c.b16 %v1756, %v1752
        %v2217 = vpack.c.b16 %v1757, %v1753
        %v2218 = vpack.c.b16 %v1758, %v1754
        %v2219 = vpack.c.b16 %v1763, %v1759
        %v2220 = vpack.c.b16 %v1764, %v1760
        %v2221 = vpack.c.b16 %v1765, %v1761
        %v2222 = vpack.c.b16 %v1766, %v1762
        %v2223 = vpack.c.b16 %v1771, %v1767
        %v2224 = vpack.c.b16 %v1772, %v1768
        %v2225 = vpack.c.b16 %v1773, %v1769
        %v2226 = vpack.c.b16 %v1774, %v1770
        %v2227 = vpack.c.b16 %v1779, %v1775
        %v2228 = vpack.c.b16 %v1780, %v1776
        %v2229 = vpack.c.b16 %v1781, %v1777
        %v2230 = vpack.c.b16 %v1782, %v1778
        %v2231 = vpack.c.b16 %v1787, %v1783
        %v2232 = vpack.c.b16 %v1788, %v1784
        %v2233 = vpack.c.b16 %v1789, %v1785
        %v2234 = vpack.c.b16 %v1790, %v1786
        %v2235 = vpack.c.b16 %v1795, %v1791
        %v2236 = vpack.c.b16 %v1796, %v1792
        %v2237 = vpack.c.b16 %v1797, %v1793
        %v2238 = vpack.c.b16 %v1798, %v1794
        %v2239 = vpack.c.b16 %v1803, %v1799
        %v2240 = vpack.c.b16 %v1804, %v1800
        %v2241 = vpack.c.b16 %v1805, %v1801
        %v2242 = vpack.c.b16 %v1806, %v1802
        %v2243 = vpack.c.b16 %v1811, %v1807
        %v2244 = vpack.c.b16 %v1812, %v1808
        %v2245 = vpack.c.b16 %v1813, %v1809
        %v2246 = vpack.c.b16 %v1814, %v1810
        %v2247 = vpack.c.b16 %v1819, %v1815
        %v2248 = vpack.c.b16 %v1820, %v1816
        %v2249 = vpack.c.b16 %v1821, %v1817
        %v2250 = vpack.c.b16 %v1822, %v1818
        %v2251 = vpack.c.b16 %v1827, %v1823
        %v2252 = vpack.c.b16 %v1828, %v1824
        %v2253 = vpack.c.b16 %v1829, %v1825
        %v2254 = vpack.c.b16 %v1830, %v1826
        %v2255 = vpack.c.b16 %v1835, %v1831
        %v2256 = vpack.c.b16 %v1836, %v1832
        %v2257 = vpack.c.b16 %v1837, %v1833
        %v2258 = vpack.c.b16 %v1838, %v1834
        %v2259 = vpack.c.b16 %v1843, %v1839
        %v2260 = vpack.c.b16 %v1844, %v1840
        %v2261 = vpack.c.b16 %v1845, %v1841
        %v2262 = vpack.c.b16 %v1846, %v1842
        %v2263 = vpack.c.b16 %v1851, %v1847
        %v2264 = vpack.c.b16 %v1852, %v1848
        %v2265 = vpack.c.b16 %v1853, %v1849
        %v2266 = vpack.c.b16 %v1854, %v1850
        %v2267 = vpack.c.b16 %v1859, %v1855
        %v2268 = vpack.c.b16 %v1860, %v1856
        %v2269 = vpack.c.b16 %v1861, %v1857
        %v2270 = vpack.c.b16 %v1862, %v1858
        %v2271 = vpack.c.b16 %v1867, %v1863
        %v2272 = vpack.c.b16 %v1868, %v1864
        %v2273 = vpack.c.b16 %v1869, %v1865
        %v2274 = vpack.c.b16 %v1870, %v1866
        %v2275 = vpack.c.b16 %v1875, %v1871
        %v2276 = vpack.c.b16 %v1876, %v1872
        %v2277 = vpack.c.b16 %v1877, %v1873
        %v2278 = vpack.c.b16 %v1878, %v1874
        %v2279 = vpack.c.b16 %v1883, %v1879
        %v2280 = vpack.c.b16 %v1884, %v1880
        %v2281 = vpack.c.b16 %v1885, %v1881
        %v2282 = vpack.c.b16 %v1886, %v1882
        %v2283 = vpack.c.b16 %v1891, %v1887
        %v2284 = vpack.c.b16 %v1892, %v1888
        %v2285 = vpack.c.b16 %v1893, %v1889
        %v2286 = vpack.c.b16 %v1894, %v1890
        %v2287 = vpack.c.b16 %v1899, %v1895
        %v2288 = vpack.c.b16 %v1900, %v1896
        %v2289 = vpack.c.b16 %v1901, %v1897
        %v2290 = vpack.c.b16 %v1902, %v1898
        %v2291 = vpack.c.b16 %v1907, %v1903
        %v2292 = vpack.c.b16 %v1908, %v1904
        %v2293 = vpack.c.b16 %v1909, %v1905
        %v2294 = vpack.c.b16 %v1910, %v1906
        %v2295 = vpack.c.b16 %v1915, %v1911
        %v2296 = vpack.c.b16 %v1916, %v1912
        %v2297 = vpack.c.b16 %v1917, %v1913
        %v2298 = vpack.c.b16 %v1918, %v1914
        %v2299 = vpack.c.b16 %v1923, %v1919
        %v2300 = vpack.c.b16 %v1924, %v1920
        %v2301 = vpack.c.b16 %v1925, %v1921
        %v2302 = vpack.c.b16 %v1926, %v1922
        %v2303 = vpack.c.b16 %v1931, %v1927
        %v2304 = vpack.c.b16 %v1932, %v1928
        %v2305 = vpack.c.b16 %v1933, %v1929
        %v2306 = vpack.c.b16 %v1934, %v1930
        %v2307 = vpack.c.b16 %v1939, %v1935
        %v2308 = vpack.c.b16 %v1940, %v1936
        %v2309 = vpack.c.b16 %v1941, %v1937
        %v2310 = vpack.c.b16 %v1942, %v1938
        %v2311 = vpack.c.b16 %v1947, %v1943
        %v2312 = vpack.c.b16 %v1948, %v1944
        %v2313 = vpack.c.b16 %v1949, %v1945
        %v2314 = vpack.c.b16 %v1950, %v1946
        %v2315 = vpack.c.b16 %v1955, %v1951
        %v2316 = vpack.c.b16 %v1956, %v1952
        %v2317 = vpack.c.b16 %v1957, %v1953
        %v2318 = vpack.c.b16 %v1958, %v1954
        %v2319 = vpack.c.b16 %v1963, %v1959
        %v2320 = vpack.c.b16 %v1964, %v1960
        %v2321 = vpack.c.b16 %v1965, %v1961
        %v2322 = vpack.c.b16 %v1966, %v1962
        %v2323 = vpack.c.b16 %v1971, %v1967
        %v2324 = vpack.c.b16 %v1972, %v1968
        %v2325 = vpack.c.b16 %v1973, %v1969
        %v2326 = vpack.c.b16 %v1974, %v1970
        %v2327 = vpack.c.b16 %v1979, %v1975
        %v2328 = vpack.c.b16 %v1980, %v1976
        %v2329 = vpack.c.b16 %v1981, %v1977
        %v2330 = vpack.c.b16 %v1982, %v1978
        %v2331 = vpack.c.b16 %v1987, %v1983
        %v2332 = vpack.c.b16 %v1988, %v1984
        %v2333 = vpack.c.b16 %v1989, %v1985
        %v2334 = vpack.c.b16 %v1990, %v1986
        %v2335 = vpack.c.b16 %v1995, %v1991
        %v2336 = vpack.c.b16 %v1996, %v1992
        %v2337 = vpack.c.b16 %v1997, %v1993
        %v2338 = vpack.c.b16 %v1998, %v1994
        %v2339 = vpack.c.b16 %v2003, %v1999
        %v2340 = vpack.c.b16 %v2004, %v2000
        %v2341 = vpack.c.b16 %v2005, %v2001
        %v2342 = vpack.c.b16 %v2006, %v2002
        %v2343 = vpack.c.b16 %v2011, %v2007
        %v2344 = vpack.c.b16 %v2012, %v2008
        %v2345 = vpack.c.b16 %v2013, %v2009
        %v2346 = vpack.c.b16 %v2014, %v2010
        %v2347 = vpack.c.b16 %v2019, %v2015
        %v2348 = vpack.c.b16 %v2020, %v2016
        %v2349 = vpack.c.b16 %v2021, %v2017
        %v2350 = vpack.c.b16 %v2022, %v2018
        %v2351 = vpack.c.b16 %v2027, %v2023
        %v2352 = vpack.c.b16 %v2028, %v2024
        %v2353 = vpack.c.b16 %v2029, %v2025
        %v2354 = vpack.c.b16 %v2030, %v2026
        %v2355 = vpack.c.b16 %v2035, %v2031
        %v2356 = vpack.c.b16 %v2036, %v2032
        %v2357 = vpack.c.b16 %v2037, %v2033
        %v2358 = vpack.c.b16 %v2038, %v2034
        %v2359 = vpack.c.b16 %v2043, %v2039
        %v2360 = vpack.c.b16 %v2044, %v2040
        %v2361 = vpack.c.b16 %v2045, %v2041
        %v2362 = vpack.c.b16 %v2046, %v2042
        %v2363 = vpack.c.b16 %v2051, %v2047
        %v2364 = vpack.c.b16 %v2052, %v2048
        %v2365 = vpack.c.b16 %v2053, %v2049
        %v2366 = vpack.c.b16 %v2054, %v2050
        %v2367 = vpack.c.b16 %v2059, %v2055
        %v2368 = vpack.c.b16 %v2060, %v2056
        %v2369 = vpack.c.b16 %v2061, %v2057
        %v2370 = vpack.c.b16 %v2062, %v2058
        %v2371 = vpack.c.b16 %v2067, %v2063
        %v2372 = vpack.c.b16 %v2068, %v2064
        %v2373 = vpack.c.b16 %v2069, %v2065
        %v2374 = vpack.c.b16 %v2070, %v2066
        %v2375 = vpack.c.b16 %v2075, %v2071
        %v2376 = vpack.c.b16 %v2076, %v2072
        %v2377 = vpack.c.b16 %v2077, %v2073
        %v2378 = vpack.c.b16 %v2078, %v2074
        %v2379 = vpack.c.b16 %v2083, %v2079
        %v2380 = vpack.c.b16 %v2084, %v2080
        %v2381 = vpack.c.b16 %v2085, %v2081
        %v2382 = vpack.c.b16 %v2086, %v2082
        %v2383 = vpack.c.b16 %v2091, %v2087
        %v2384 = vpack.c.b16 %v2092, %v2088
        %v2385 = vpack.c.b16 %v2093, %v2089
        %v2386 = vpack.c.b16 %v2094, %v2090
        %v2387 = vpack.c.b16 %v2099, %v2095
        %v2388 = vpack.c.b16 %v2100, %v2096
        %v2389 = vpack.c.b16 %v2101, %v2097
        %v2390 = vpack.c.b16 %v2102, %v2098
        %v2391 = vpack.c.b16 %v2107, %v2103
        %v2392 = vpack.c.b16 %v2108, %v2104
        %v2393 = vpack.c.b16 %v2109, %v2105
        %v2394 = vpack.c.b16 %v2110, %v2106
        %v2395 = vpack.c.b16 %v2115, %v2111
        %v2396 = vpack.c.b16 %v2116, %v2112
        %v2397 = vpack.c.b16 %v2117, %v2113
        %v2398 = vpack.c.b16 %v2118, %v2114
        %v2399 = vpack.c.b16 %v2123, %v2119
        %v2400 = vpack.c.b16 %v2124, %v2120
        %v2401 = vpack.c.b16 %v2125, %v2121
        %v2402 = vpack.c.b16 %v2126, %v2122
        %v2403 = vpack.c.b16 %v2131, %v2127
        %v2404 = vpack.c.b16 %v2132, %v2128
        %v2405 = vpack.c.b16 %v2133, %v2129
        %v2406 = vpack.c.b16 %v2134, %v2130
        %v2407 = vpack.c.b16 %v2139, %v2135
        %v2408 = vpack.c.b16 %v2140, %v2136
        %v2409 = vpack.c.b16 %v2141, %v2137
        %v2410 = vpack.c.b16 %v2142, %v2138
        %v2411 = vpack.c.b16 %v2147, %v2143
        %v2412 = vpack.c.b16 %v2148, %v2144
        %v2413 = vpack.c.b16 %v2149, %v2145
        %v2414 = vpack.c.b16 %v2150, %v2146
        %v2415 = vpack.c.b16 %v2155, %v2151
        %v2416 = vpack.c.b16 %v2156, %v2152
        %v2417 = vpack.c.b16 %v2157, %v2153
        %v2418 = vpack.c.b16 %v2158, %v2154
        %v2419 = vpack.c.b16 %v2163, %v2159
        %v2420 = vpack.c.b16 %v2164, %v2160
        %v2421 = vpack.c.b16 %v2165, %v2161
        %v2422 = vpack.c.b16 %v2166, %v2162
        %2679 = vmatprep.subr.bf16.mxu0 %v2196
        %2680 = vmatpush1.bf16.msra.mxu0 %v2195
        %2681 = vmatprep.subr.bf16.mxu0 %v2192
        %2682 = vmatpush1.bf16.msra.mxu0 %v2191
        %2683 = vmatprep.subr.bf16.mxu0 %v2188
        %2684 = vmatpush1.bf16.msra.mxu0 %v2187
        %2685 = vmatprep.subr.bf16.mxu0 %v2184
        %2686 = vmatpush1.bf16.msra.mxu0 %v2183
        %2687 = vmatprep.subr.bf16.mxu0 %v2180
        %2688 = vmatpush1.bf16.msra.mxu0 %v2179
        %2689 = vmatprep.subr.bf16.mxu0 %v2176
        %2690 = vmatpush1.bf16.msra.mxu0 %v2175
        %2691 = vmatprep.subr.bf16.mxu0 %v2172
        %2692 = vmatpush1.bf16.msra.mxu0 %v2171
        %2693 = vmatprep.subr.bf16.mxu0 %v2168
        %2694 = vmatpush1.bf16.msra.mxu0 %v2167
        %2695 = vmatprep.subr.bf16.mxu0 %v2228
        %2696 = vmatpush2.bf16.msra.mxu0 %v2227
        %2697 = vmatprep.subr.bf16.mxu0 %v2224
        %2698 = vmatpush2.bf16.msra.mxu0 %v2223
        %2699 = vmatprep.subr.bf16.mxu0 %v2220
        %2700 = vmatpush2.bf16.msra.mxu0 %v2219
        %2701 = vmatprep.subr.bf16.mxu0 %v2216
        %2702 = vmatpush2.bf16.msra.mxu0 %v2215
        %2703 = vmatprep.subr.bf16.mxu0 %v2212
        %2704 = vmatpush2.bf16.msra.mxu0 %v2211
        %2705 = vmatprep.subr.bf16.mxu0 %v2208
        %2706 = vmatpush2.bf16.msra.mxu0 %v2207
        %2707 = vmatprep.subr.bf16.mxu0 %v2204
        %2708 = vmatpush2.bf16.msra.mxu0 %v2203
        %2709 = vmatprep.subr.bf16.mxu0 %v2200
        %2710 = vmatpush2.bf16.msra.mxu0 %v2199
        %2711 = vmatprep.mubr.bf16.mxu0 %v1058
        %2712 = vmatmul.mubr.bf16.gmra.mxu0 %v1057
        %v2713 = vpop.f32.mrf.mxu0
        %v2714 = vadd.f32 %v1382, %v2713
        %v2715 = vpop.f32.mrf.mxu0
        %v2716 = vadd.f32 %v1386, %v2715
        %v2717 = vpop.f32.mrf.mxu0
        %v2718 = vadd.f32 %v1382, %v2717
        %v2719 = vpop.f32.mrf.mxu0
        %v2720 = vadd.f32 %v1386, %v2719
        %2721 = vmatprep.mubr.bf16.mxu0 %v1066
        %2722 = vmatmul.mubr.bf16.gmra.mxu0 %v1065
        %v2723 = vpop.f32.mrf.mxu0
        %v2724 = vadd.f32 %v1382, %v2723
        %v2725 = vpop.f32.mrf.mxu0
        %v2726 = vadd.f32 %v1386, %v2725
        %v2727 = vpop.f32.mrf.mxu0
        %v2728 = vadd.f32 %v1382, %v2727
        %v2729 = vpop.f32.mrf.mxu0
        %v2730 = vadd.f32 %v1386, %v2729
        %2731 = vmatprep.mubr.bf16.mxu0 %v1074
        %2732 = vmatmul.mubr.bf16.gmra.mxu0 %v1073
        %v2733 = vpop.f32.mrf.mxu0
        %v2734 = vadd.f32 %v1382, %v2733
        %v2735 = vpop.f32.mrf.mxu0
        %v2736 = vadd.f32 %v1386, %v2735
        %v2737 = vpop.f32.mrf.mxu0
        %v2738 = vadd.f32 %v1382, %v2737
        %v2739 = vpop.f32.mrf.mxu0
        %v2740 = vadd.f32 %v1386, %v2739
        %2741 = vmatprep.mubr.bf16.mxu0 %v1082
        %2742 = vmatmul.mubr.bf16.gmra.mxu0 %v1081
        %v2743 = vpop.f32.mrf.mxu0
        %v2744 = vadd.f32 %v1382, %v2743
        %v2745 = vpop.f32.mrf.mxu0
        %v2746 = vadd.f32 %v1386, %v2745
        %v2747 = vpop.f32.mrf.mxu0
        %v2748 = vadd.f32 %v1382, %v2747
        %v2749 = vpop.f32.mrf.mxu0
        %v2750 = vadd.f32 %v1386, %v2749
        %2751 = vmatprep.mubr.bf16.mxu0 %v1090
        %2752 = vmatmul.mubr.bf16.gmra.mxu0 %v1089
        %v2753 = vpop.f32.mrf.mxu0
        %v2754 = vadd.f32 %v1382, %v2753
        %v2755 = vpop.f32.mrf.mxu0
        %v2756 = vadd.f32 %v1386, %v2755
        %v2757 = vpop.f32.mrf.mxu0
        %v2758 = vadd.f32 %v1382, %v2757
        %v2759 = vpop.f32.mrf.mxu0
        %v2760 = vadd.f32 %v1386, %v2759
        %2761 = vmatprep.mubr.bf16.mxu0 %v1098
        %2762 = vmatmul.mubr.bf16.gmra.mxu0 %v1097
        %v2763 = vpop.f32.mrf.mxu0
        %v2764 = vadd.f32 %v1382, %v2763
        %v2765 = vpop.f32.mrf.mxu0
        %v2766 = vadd.f32 %v1386, %v2765
        %v2767 = vpop.f32.mrf.mxu0
        %v2768 = vadd.f32 %v1382, %v2767
        %v2769 = vpop.f32.mrf.mxu0
        %v2770 = vadd.f32 %v1386, %v2769
        %2771 = vmatprep.mubr.bf16.mxu0 %v1106
        %2772 = vmatmul.mubr.bf16.gmra.mxu0 %v1105
        %v2773 = vpop.f32.mrf.mxu0
        %v2774 = vadd.f32 %v1382, %v2773
        %v2775 = vpop.f32.mrf.mxu0
        %v2776 = vadd.f32 %v1386, %v2775
        %v2777 = vpop.f32.mrf.mxu0
        %v2778 = vadd.f32 %v1382, %v2777
        %v2779 = vpop.f32.mrf.mxu0
        %v2780 = vadd.f32 %v1386, %v2779
        %2781 = vmatprep.mubr.bf16.mxu0 %v1114
        %2782 = vmatmul.mubr.bf16.gmra.mxu0 %v1113
        %v2783 = vpop.f32.mrf.mxu0
        %v2784 = vadd.f32 %v1382, %v2783
        %v2785 = vpop.f32.mrf.mxu0
        %v2786 = vadd.f32 %v1386, %v2785
        %v2787 = vpop.f32.mrf.mxu0
        %v2788 = vadd.f32 %v1382, %v2787
        %v2789 = vpop.f32.mrf.mxu0
        %v2790 = vadd.f32 %v1386, %v2789
        %2791 = vdwg.mxu0
        %2792 = vmatprep.subr.bf16.mxu0 %v2260
        %2793 = vmatpush1.bf16.msra.mxu0 %v2259
        %2794 = vmatprep.subr.bf16.mxu0 %v2256
        %2795 = vmatpush1.bf16.msra.mxu0 %v2255
        %2796 = vmatprep.subr.bf16.mxu0 %v2252
        %2797 = vmatpush1.bf16.msra.mxu0 %v2251
        %2798 = vmatprep.subr.bf16.mxu0 %v2248
        %2799 = vmatpush1.bf16.msra.mxu0 %v2247
        %2800 = vmatprep.subr.bf16.mxu0 %v2244
        %2801 = vmatpush1.bf16.msra.mxu0 %v2243
        %2802 = vmatprep.subr.bf16.mxu0 %v2240
        %2803 = vmatpush1.bf16.msra.mxu0 %v2239
        %2804 = vmatprep.subr.bf16.mxu0 %v2236
        %2805 = vmatpush1.bf16.msra.mxu0 %v2235
        %2806 = vmatprep.subr.bf16.mxu0 %v2232
        %2807 = vmatpush1.bf16.msra.mxu0 %v2231
        %2808 = vmatprep.subr.bf16.mxu0 %v2292
        %2809 = vmatpush2.bf16.msra.mxu0 %v2291
        %2810 = vmatprep.subr.bf16.mxu0 %v2288
        %2811 = vmatpush2.bf16.msra.mxu0 %v2287
        %2812 = vmatprep.subr.bf16.mxu0 %v2284
        %2813 = vmatpush2.bf16.msra.mxu0 %v2283
        %2814 = vmatprep.subr.bf16.mxu0 %v2280
        %2815 = vmatpush2.bf16.msra.mxu0 %v2279
        %2816 = vmatprep.subr.bf16.mxu0 %v2276
        %2817 = vmatpush2.bf16.msra.mxu0 %v2275
        %2818 = vmatprep.subr.bf16.mxu0 %v2272
        %2819 = vmatpush2.bf16.msra.mxu0 %v2271
        %2820 = vmatprep.subr.bf16.mxu0 %v2268
        %2821 = vmatpush2.bf16.msra.mxu0 %v2267
        %2822 = vmatprep.subr.bf16.mxu0 %v2264
        %2823 = vmatpush2.bf16.msra.mxu0 %v2263
        %2824 = vmatprep.mubr.bf16.mxu0 %v1060
        %2825 = vmatmul.mubr.bf16.gmra.mxu0 %v1059
        %v2826 = vpop.f32.mrf.mxu0
        %v2827 = vadd.f32 %v2714, %v2826
        %v2828 = vpop.f32.mrf.mxu0
        %v2829 = vadd.f32 %v2716, %v2828
        %v2830 = vpop.f32.mrf.mxu0
        %v2831 = vadd.f32 %v2718, %v2830
        %v2832 = vpop.f32.mrf.mxu0
        %v2833 = vadd.f32 %v2720, %v2832
        %2834 = vmatprep.mubr.bf16.mxu0 %v1068
        %2835 = vmatmul.mubr.bf16.gmra.mxu0 %v1067
        %v2836 = vpop.f32.mrf.mxu0
        %v2837 = vadd.f32 %v2724, %v2836
        %v2838 = vpop.f32.mrf.mxu0
        %v2839 = vadd.f32 %v2726, %v2838
        %v2840 = vpop.f32.mrf.mxu0
        %v2841 = vadd.f32 %v2728, %v2840
        %v2842 = vpop.f32.mrf.mxu0
        %v2843 = vadd.f32 %v2730, %v2842
        %2844 = vmatprep.mubr.bf16.mxu0 %v1076
        %2845 = vmatmul.mubr.bf16.gmra.mxu0 %v1075
        %v2846 = vpop.f32.mrf.mxu0
        %v2847 = vadd.f32 %v2734, %v2846
        %v2848 = vpop.f32.mrf.mxu0
        %v2849 = vadd.f32 %v2736, %v2848
        %v2850 = vpop.f32.mrf.mxu0
        %v2851 = vadd.f32 %v2738, %v2850
        %v2852 = vpop.f32.mrf.mxu0
        %v2853 = vadd.f32 %v2740, %v2852
        %2854 = vmatprep.mubr.bf16.mxu0 %v1084
        %2855 = vmatmul.mubr.bf16.gmra.mxu0 %v1083
        %v2856 = vpop.f32.mrf.mxu0
        %v2857 = vadd.f32 %v2744, %v2856
        %v2858 = vpop.f32.mrf.mxu0
        %v2859 = vadd.f32 %v2746, %v2858
        %v2860 = vpop.f32.mrf.mxu0
        %v2861 = vadd.f32 %v2748, %v2860
        %v2862 = vpop.f32.mrf.mxu0
        %v2863 = vadd.f32 %v2750, %v2862
        %2864 = vmatprep.mubr.bf16.mxu0 %v1092
        %2865 = vmatmul.mubr.bf16.gmra.mxu0 %v1091
        %v2866 = vpop.f32.mrf.mxu0
        %v2867 = vadd.f32 %v2754, %v2866
        %v2868 = vpop.f32.mrf.mxu0
        %v2869 = vadd.f32 %v2756, %v2868
        %v2870 = vpop.f32.mrf.mxu0
        %v2871 = vadd.f32 %v2758, %v2870
        %v2872 = vpop.f32.mrf.mxu0
        %v2873 = vadd.f32 %v2760, %v2872
        %2874 = vmatprep.mubr.bf16.mxu0 %v1100
        %2875 = vmatmul.mubr.bf16.gmra.mxu0 %v1099
        %v2876 = vpop.f32.mrf.mxu0
        %v2877 = vadd.f32 %v2764, %v2876
        %v2878 = vpop.f32.mrf.mxu0
        %v2879 = vadd.f32 %v2766, %v2878
        %v2880 = vpop.f32.mrf.mxu0
        %v2881 = vadd.f32 %v2768, %v2880
        %v2882 = vpop.f32.mrf.mxu0
        %v2883 = vadd.f32 %v2770, %v2882
        %2884 = vmatprep.mubr.bf16.mxu0 %v1108
        %2885 = vmatmul.mubr.bf16.gmra.mxu0 %v1107
        %v2886 = vpop.f32.mrf.mxu0
        %v2887 = vadd.f32 %v2774, %v2886
        %v2888 = vpop.f32.mrf.mxu0
        %v2889 = vadd.f32 %v2776, %v2888
        %v2890 = vpop.f32.mrf.mxu0
        %v2891 = vadd.f32 %v2778, %v2890
        %v2892 = vpop.f32.mrf.mxu0
        %v2893 = vadd.f32 %v2780, %v2892
        %2894 = vmatprep.mubr.bf16.mxu0 %v1116
        %2895 = vmatmul.mubr.bf16.gmra.mxu0 %v1115
        %v2896 = vpop.f32.mrf.mxu0
        %v2897 = vadd.f32 %v2784, %v2896
        %v2898 = vpop.f32.mrf.mxu0
        %v2899 = vadd.f32 %v2786, %v2898
        %v2900 = vpop.f32.mrf.mxu0
        %v2901 = vadd.f32 %v2788, %v2900
        %v2902 = vpop.f32.mrf.mxu0
        %v2903 = vadd.f32 %v2790, %v2902
        %2904 = vdwg.mxu0
        %2905 = vmatprep.subr.bf16.mxu0 %v2324
        %2906 = vmatpush1.bf16.msra.mxu0 %v2323
        %2907 = vmatprep.subr.bf16.mxu0 %v2320
        %2908 = vmatpush1.bf16.msra.mxu0 %v2319
        %2909 = vmatprep.subr.bf16.mxu0 %v2316
        %2910 = vmatpush1.bf16.msra.mxu0 %v2315
        %2911 = vmatprep.subr.bf16.mxu0 %v2312
        %2912 = vmatpush1.bf16.msra.mxu0 %v2311
        %2913 = vmatprep.subr.bf16.mxu0 %v2308
        %2914 = vmatpush1.bf16.msra.mxu0 %v2307
        %2915 = vmatprep.subr.bf16.mxu0 %v2304
        %2916 = vmatpush1.bf16.msra.mxu0 %v2303
        %2917 = vmatprep.subr.bf16.mxu0 %v2300
        %2918 = vmatpush1.bf16.msra.mxu0 %v2299
        %2919 = vmatprep.subr.bf16.mxu0 %v2296
        %2920 = vmatpush1.bf16.msra.mxu0 %v2295
        %2921 = vmatprep.subr.bf16.mxu0 %v2356
        %2922 = vmatpush2.bf16.msra.mxu0 %v2355
        %2923 = vmatprep.subr.bf16.mxu0 %v2352
        %2924 = vmatpush2.bf16.msra.mxu0 %v2351
        %2925 = vmatprep.subr.bf16.mxu0 %v2348
        %2926 = vmatpush2.bf16.msra.mxu0 %v2347
        %2927 = vmatprep.subr.bf16.mxu0 %v2344
        %2928 = vmatpush2.bf16.msra.mxu0 %v2343
        %2929 = vmatprep.subr.bf16.mxu0 %v2340
        %2930 = vmatpush2.bf16.msra.mxu0 %v2339
        %2931 = vmatprep.subr.bf16.mxu0 %v2336
        %2932 = vmatpush2.bf16.msra.mxu0 %v2335
        %2933 = vmatprep.subr.bf16.mxu0 %v2332
        %2934 = vmatpush2.bf16.msra.mxu0 %v2331
        %2935 = vmatprep.subr.bf16.mxu0 %v2328
        %2936 = vmatpush2.bf16.msra.mxu0 %v2327
        %2937 = vmatprep.mubr.bf16.mxu0 %v1062
        %2938 = vmatmul.mubr.bf16.gmra.mxu0 %v1061
        %v2939 = vpop.f32.mrf.mxu0
        %v2940 = vadd.f32 %v2827, %v2939
        %v2941 = vpop.f32.mrf.mxu0
        %v2942 = vadd.f32 %v2829, %v2941
        %v2943 = vpop.f32.mrf.mxu0
        %v2944 = vadd.f32 %v2831, %v2943
        %v2945 = vpop.f32.mrf.mxu0
        %v2946 = vadd.f32 %v2833, %v2945
        %2947 = vmatprep.mubr.bf16.mxu0 %v1070
        %2948 = vmatmul.mubr.bf16.gmra.mxu0 %v1069
        %v2949 = vpop.f32.mrf.mxu0
        %v2950 = vadd.f32 %v2837, %v2949
        %v2951 = vpop.f32.mrf.mxu0
        %v2952 = vadd.f32 %v2839, %v2951
        %v2953 = vpop.f32.mrf.mxu0
        %v2954 = vadd.f32 %v2841, %v2953
        %v2955 = vpop.f32.mrf.mxu0
        %v2956 = vadd.f32 %v2843, %v2955
        %2957 = vmatprep.mubr.bf16.mxu0 %v1078
        %2958 = vmatmul.mubr.bf16.gmra.mxu0 %v1077
        %v2959 = vpop.f32.mrf.mxu0
        %v2960 = vadd.f32 %v2847, %v2959
        %v2961 = vpop.f32.mrf.mxu0
        %v2962 = vadd.f32 %v2849, %v2961
        %v2963 = vpop.f32.mrf.mxu0
        %v2964 = vadd.f32 %v2851, %v2963
        %v2965 = vpop.f32.mrf.mxu0
        %v2966 = vadd.f32 %v2853, %v2965
        %2967 = vmatprep.mubr.bf16.mxu0 %v1086
        %2968 = vmatmul.mubr.bf16.gmra.mxu0 %v1085
        %v2969 = vpop.f32.mrf.mxu0
        %v2970 = vadd.f32 %v2857, %v2969
        %v2971 = vpop.f32.mrf.mxu0
        %v2972 = vadd.f32 %v2859, %v2971
        %v2973 = vpop.f32.mrf.mxu0
        %v2974 = vadd.f32 %v2861, %v2973
        %v2975 = vpop.f32.mrf.mxu0
        %v2976 = vadd.f32 %v2863, %v2975
        %2977 = vmatprep.mubr.bf16.mxu0 %v1094
        %2978 = vmatmul.mubr.bf16.gmra.mxu0 %v1093
        %v2979 = vpop.f32.mrf.mxu0
        %v2980 = vadd.f32 %v2867, %v2979
        %v2981 = vpop.f32.mrf.mxu0
        %v2982 = vadd.f32 %v2869, %v2981
        %v2983 = vpop.f32.mrf.mxu0
        %v2984 = vadd.f32 %v2871, %v2983
        %v2985 = vpop.f32.mrf.mxu0
        %v2986 = vadd.f32 %v2873, %v2985
        %2987 = vmatprep.mubr.bf16.mxu0 %v1102
        %2988 = vmatmul.mubr.bf16.gmra.mxu0 %v1101
        %v2989 = vpop.f32.mrf.mxu0
        %v2990 = vadd.f32 %v2877, %v2989
        %v2991 = vpop.f32.mrf.mxu0
        %v2992 = vadd.f32 %v2879, %v2991
        %v2993 = vpop.f32.mrf.mxu0
        %v2994 = vadd.f32 %v2881, %v2993
        %v2995 = vpop.f32.mrf.mxu0
        %v2996 = vadd.f32 %v2883, %v2995
        %2997 = vmatprep.mubr.bf16.mxu0 %v1110
        %2998 = vmatmul.mubr.bf16.gmra.mxu0 %v1109
        %v2999 = vpop.f32.mrf.mxu0
        %v3000 = vadd.f32 %v2887, %v2999
        %v3001 = vpop.f32.mrf.mxu0
        %v3002 = vadd.f32 %v2889, %v3001
        %v3003 = vpop.f32.mrf.mxu0
        %v3004 = vadd.f32 %v2891, %v3003
        %v3005 = vpop.f32.mrf.mxu0
        %v3006 = vadd.f32 %v2893, %v3005
        %3007 = vmatprep.mubr.bf16.mxu0 %v1118
        %3008 = vmatmul.mubr.bf16.gmra.mxu0 %v1117
        %v3009 = vpop.f32.mrf.mxu0
        %v3010 = vadd.f32 %v2897, %v3009
        %v3011 = vpop.f32.mrf.mxu0
        %v3012 = vadd.f32 %v2899, %v3011
        %v3013 = vpop.f32.mrf.mxu0
        %v3014 = vadd.f32 %v2901, %v3013
        %v3015 = vpop.f32.mrf.mxu0
        %v3016 = vadd.f32 %v2903, %v3015
        %3017 = vdwg.mxu0
        %3018 = vmatprep.subr.bf16.mxu0 %v2388
        %3019 = vmatpush1.bf16.msra.mxu0 %v2387
        %3020 = vmatprep.subr.bf16.mxu0 %v2384
        %3021 = vmatpush1.bf16.msra.mxu0 %v2383
        %3022 = vmatprep.subr.bf16.mxu0 %v2380
        %3023 = vmatpush1.bf16.msra.mxu0 %v2379
        %3024 = vmatprep.subr.bf16.mxu0 %v2376
        %3025 = vmatpush1.bf16.msra.mxu0 %v2375
        %3026 = vmatprep.subr.bf16.mxu0 %v2372
        %3027 = vmatpush1.bf16.msra.mxu0 %v2371
        %3028 = vmatprep.subr.bf16.mxu0 %v2368
        %3029 = vmatpush1.bf16.msra.mxu0 %v2367
        %3030 = vmatprep.subr.bf16.mxu0 %v2364
        %3031 = vmatpush1.bf16.msra.mxu0 %v2363
        %3032 = vmatprep.subr.bf16.mxu0 %v2360
        %3033 = vmatpush1.bf16.msra.mxu0 %v2359
        %3034 = vmatprep.subr.bf16.mxu0 %v2420
        %3035 = vmatpush2.bf16.msra.mxu0 %v2419
        %3036 = vmatprep.subr.bf16.mxu0 %v2416
        %3037 = vmatpush2.bf16.msra.mxu0 %v2415
        %3038 = vmatprep.subr.bf16.mxu0 %v2412
        %3039 = vmatpush2.bf16.msra.mxu0 %v2411
        %3040 = vmatprep.subr.bf16.mxu0 %v2408
        %3041 = vmatpush2.bf16.msra.mxu0 %v2407
        %3042 = vmatprep.subr.bf16.mxu0 %v2404
        %3043 = vmatpush2.bf16.msra.mxu0 %v2403
        %3044 = vmatprep.subr.bf16.mxu0 %v2400
        %3045 = vmatpush2.bf16.msra.mxu0 %v2399
        %3046 = vmatprep.subr.bf16.mxu0 %v2396
        %3047 = vmatpush2.bf16.msra.mxu0 %v2395
        %3048 = vmatprep.subr.bf16.mxu0 %v2392
        %3049 = vmatpush2.bf16.msra.mxu0 %v2391
        %3050 = vmatprep.mubr.bf16.mxu0 %v1064
        %3051 = vmatmul.mubr.bf16.gmra.mxu0 %v1063
        %v3052 = vpop.f32.mrf.mxu0
        %v3053 = vadd.f32 %v2940, %v3052
        %v3054 = vpop.f32.mrf.mxu0
        %v3055 = vadd.f32 %v2942, %v3054
        %v3056 = vpop.f32.mrf.mxu0
        %v3057 = vadd.f32 %v2944, %v3056
        %v3058 = vpop.f32.mrf.mxu0
        %v3059 = vadd.f32 %v2946, %v3058
        %3060 = vmatprep.mubr.bf16.mxu0 %v1072
        %3061 = vmatmul.mubr.bf16.gmra.mxu0 %v1071
        %v3062 = vpop.f32.mrf.mxu0
        %v3063 = vadd.f32 %v2950, %v3062
        %v3064 = vpop.f32.mrf.mxu0
        %v3065 = vadd.f32 %v2952, %v3064
        %v3066 = vpop.f32.mrf.mxu0
        %v3067 = vadd.f32 %v2954, %v3066
        %v3068 = vpop.f32.mrf.mxu0
        %v3069 = vadd.f32 %v2956, %v3068
        %3070 = vmatprep.mubr.bf16.mxu0 %v1080
        %3071 = vmatmul.mubr.bf16.gmra.mxu0 %v1079
        %v3072 = vpop.f32.mrf.mxu0
        %v3073 = vadd.f32 %v2960, %v3072
        %v3074 = vpop.f32.mrf.mxu0
        %v3075 = vadd.f32 %v2962, %v3074
        %v3076 = vpop.f32.mrf.mxu0
        %v3077 = vadd.f32 %v2964, %v3076
        %v3078 = vpop.f32.mrf.mxu0
        %v3079 = vadd.f32 %v2966, %v3078
        %3080 = vmatprep.mubr.bf16.mxu0 %v1088
        %3081 = vmatmul.mubr.bf16.gmra.mxu0 %v1087
        %v3082 = vpop.f32.mrf.mxu0
        %v3083 = vadd.f32 %v2970, %v3082
        %v3084 = vpop.f32.mrf.mxu0
        %v3085 = vadd.f32 %v2972, %v3084
        %v3086 = vpop.f32.mrf.mxu0
        %v3087 = vadd.f32 %v2974, %v3086
        %v3088 = vpop.f32.mrf.mxu0
        %v3089 = vadd.f32 %v2976, %v3088
        %3090 = vmatprep.mubr.bf16.mxu0 %v1096
        %3091 = vmatmul.mubr.bf16.gmra.mxu0 %v1095
        %v3092 = vpop.f32.mrf.mxu0
        %v3093 = vadd.f32 %v2980, %v3092
        %v3094 = vpop.f32.mrf.mxu0
        %v3095 = vadd.f32 %v2982, %v3094
        %v3096 = vpop.f32.mrf.mxu0
        %v3097 = vadd.f32 %v2984, %v3096
        %v3098 = vpop.f32.mrf.mxu0
        %v3099 = vadd.f32 %v2986, %v3098
        %3100 = vmatprep.mubr.bf16.mxu0 %v1104
        %3101 = vmatmul.mubr.bf16.gmra.mxu0 %v1103
        %v3102 = vpop.f32.mrf.mxu0
        %v3103 = vadd.f32 %v2990, %v3102
        %v3104 = vpop.f32.mrf.mxu0
        %v3105 = vadd.f32 %v2992, %v3104
        %v3106 = vpop.f32.mrf.mxu0
        %v3107 = vadd.f32 %v2994, %v3106
        %v3108 = vpop.f32.mrf.mxu0
        %v3109 = vadd.f32 %v2996, %v3108
        %3110 = vmatprep.mubr.bf16.mxu0 %v1112
        %3111 = vmatmul.mubr.bf16.gmra.mxu0 %v1111
        %v3112 = vpop.f32.mrf.mxu0
        %v3113 = vadd.f32 %v3000, %v3112
        %v3114 = vpop.f32.mrf.mxu0
        %v3115 = vadd.f32 %v3002, %v3114
        %v3116 = vpop.f32.mrf.mxu0
        %v3117 = vadd.f32 %v3004, %v3116
        %v3118 = vpop.f32.mrf.mxu0
        %v3119 = vadd.f32 %v3006, %v3118
        %3120 = vmatprep.mubr.bf16.mxu0 %v1120
        %3121 = vmatmul.mubr.bf16.gmra.mxu0 %v1119
        %v3122 = vpop.f32.mrf.mxu0
        %v3123 = vadd.f32 %v3010, %v3122
        %v3124 = vpop.f32.mrf.mxu0
        %v3125 = vadd.f32 %v3012, %v3124
        %v3126 = vpop.f32.mrf.mxu0
        %v3127 = vadd.f32 %v3014, %v3126
        %v3128 = vpop.f32.mrf.mxu0
        %v3129 = vadd.f32 %v3016, %v3128
        %3130 = vdwg.mxu0
        %3131 = vmatprep.subr.bf16.mxu0 %v2198
        %3132 = vmatpush1.bf16.msra.mxu0 %v2197
        %3133 = vmatprep.subr.bf16.mxu0 %v2194
        %3134 = vmatpush1.bf16.msra.mxu0 %v2193
        %3135 = vmatprep.subr.bf16.mxu0 %v2190
        %3136 = vmatpush1.bf16.msra.mxu0 %v2189
        %3137 = vmatprep.subr.bf16.mxu0 %v2186
        %3138 = vmatpush1.bf16.msra.mxu0 %v2185
        %3139 = vmatprep.subr.bf16.mxu0 %v2182
        %3140 = vmatpush1.bf16.msra.mxu0 %v2181
        %3141 = vmatprep.subr.bf16.mxu0 %v2178
        %3142 = vmatpush1.bf16.msra.mxu0 %v2177
        %3143 = vmatprep.subr.bf16.mxu0 %v2174
        %3144 = vmatpush1.bf16.msra.mxu0 %v2173
        %3145 = vmatprep.subr.bf16.mxu0 %v2170
        %3146 = vmatpush1.bf16.msra.mxu0 %v2169
        %3147 = vmatprep.subr.bf16.mxu0 %v2230
        %3148 = vmatpush2.bf16.msra.mxu0 %v2229
        %3149 = vmatprep.subr.bf16.mxu0 %v2226
        %3150 = vmatpush2.bf16.msra.mxu0 %v2225
        %3151 = vmatprep.subr.bf16.mxu0 %v2222
        %3152 = vmatpush2.bf16.msra.mxu0 %v2221
        %3153 = vmatprep.subr.bf16.mxu0 %v2218
        %3154 = vmatpush2.bf16.msra.mxu0 %v2217
        %3155 = vmatprep.subr.bf16.mxu0 %v2214
        %3156 = vmatpush2.bf16.msra.mxu0 %v2213
        %3157 = vmatprep.subr.bf16.mxu0 %v2210
        %3158 = vmatpush2.bf16.msra.mxu0 %v2209
        %3159 = vmatprep.subr.bf16.mxu0 %v2206
        %3160 = vmatpush2.bf16.msra.mxu0 %v2205
        %3161 = vmatprep.subr.bf16.mxu0 %v2202
        %3162 = vmatpush2.bf16.msra.mxu0 %v2201
        %3163 = vmatprep.mubr.bf16.mxu0 %v1058
        %3164 = vmatmul.mubr.bf16.gmra.mxu0 %v1057
        %v3165 = vpop.f32.mrf.mxu0
        %v3166 = vadd.f32 %v1390, %v3165
        %v3167 = vpop.f32.mrf.mxu0
        %v3168 = vadd.f32 %v1394, %v3167
        %v3169 = vpop.f32.mrf.mxu0
        %v3170 = vadd.f32 %v1390, %v3169
        %v3171 = vpop.f32.mrf.mxu0
        %v3172 = vadd.f32 %v1394, %v3171
        %3173 = vmatprep.mubr.bf16.mxu0 %v1066
        %3174 = vmatmul.mubr.bf16.gmra.mxu0 %v1065
        %v3175 = vpop.f32.mrf.mxu0
        %v3176 = vadd.f32 %v1390, %v3175
        %v3177 = vpop.f32.mrf.mxu0
        %v3178 = vadd.f32 %v1394, %v3177
        %v3179 = vpop.f32.mrf.mxu0
        %v3180 = vadd.f32 %v1390, %v3179
        %v3181 = vpop.f32.mrf.mxu0
        %v3182 = vadd.f32 %v1394, %v3181
        %3183 = vmatprep.mubr.bf16.mxu0 %v1074
        %3184 = vmatmul.mubr.bf16.gmra.mxu0 %v1073
        %v3185 = vpop.f32.mrf.mxu0
        %v3186 = vadd.f32 %v1390, %v3185
        %v3187 = vpop.f32.mrf.mxu0
        %v3188 = vadd.f32 %v1394, %v3187
        %v3189 = vpop.f32.mrf.mxu0
        %v3190 = vadd.f32 %v1390, %v3189
        %v3191 = vpop.f32.mrf.mxu0
        %v3192 = vadd.f32 %v1394, %v3191
        %3193 = vmatprep.mubr.bf16.mxu0 %v1082
        %3194 = vmatmul.mubr.bf16.gmra.mxu0 %v1081
        %v3195 = vpop.f32.mrf.mxu0
        %v3196 = vadd.f32 %v1390, %v3195
        %v3197 = vpop.f32.mrf.mxu0
        %v3198 = vadd.f32 %v1394, %v3197
        %v3199 = vpop.f32.mrf.mxu0
        %v3200 = vadd.f32 %v1390, %v3199
        %v3201 = vpop.f32.mrf.mxu0
        %v3202 = vadd.f32 %v1394, %v3201
        %3203 = vmatprep.mubr.bf16.mxu0 %v1090
        %3204 = vmatmul.mubr.bf16.gmra.mxu0 %v1089
        %v3205 = vpop.f32.mrf.mxu0
        %v3206 = vadd.f32 %v1390, %v3205
        %v3207 = vpop.f32.mrf.mxu0
        %v3208 = vadd.f32 %v1394, %v3207
        %v3209 = vpop.f32.mrf.mxu0
        %v3210 = vadd.f32 %v1390, %v3209
        %v3211 = vpop.f32.mrf.mxu0
        %v3212 = vadd.f32 %v1394, %v3211
        %3213 = vmatprep.mubr.bf16.mxu0 %v1098
        %3214 = vmatmul.mubr.bf16.gmra.mxu0 %v1097
        %v3215 = vpop.f32.mrf.mxu0
        %v3216 = vadd.f32 %v1390, %v3215
        %v3217 = vpop.f32.mrf.mxu0
        %v3218 = vadd.f32 %v1394, %v3217
        %v3219 = vpop.f32.mrf.mxu0
        %v3220 = vadd.f32 %v1390, %v3219
        %v3221 = vpop.f32.mrf.mxu0
        %v3222 = vadd.f32 %v1394, %v3221
        %3223 = vmatprep.mubr.bf16.mxu0 %v1106
        %3224 = vmatmul.mubr.bf16.gmra.mxu0 %v1105
        %v3225 = vpop.f32.mrf.mxu0
        %v3226 = vadd.f32 %v1390, %v3225
        %v3227 = vpop.f32.mrf.mxu0
        %v3228 = vadd.f32 %v1394, %v3227
        %v3229 = vpop.f32.mrf.mxu0
        %v3230 = vadd.f32 %v1390, %v3229
        %v3231 = vpop.f32.mrf.mxu0
        %v3232 = vadd.f32 %v1394, %v3231
        %3233 = vmatprep.mubr.bf16.mxu0 %v1114
        %3234 = vmatmul.mubr.bf16.gmra.mxu0 %v1113
        %v3235 = vpop.f32.mrf.mxu0
        %v3236 = vadd.f32 %v1390, %v3235
        %v3237 = vpop.f32.mrf.mxu0
        %v3238 = vadd.f32 %v1394, %v3237
        %v3239 = vpop.f32.mrf.mxu0
        %v3240 = vadd.f32 %v1390, %v3239
        %v3241 = vpop.f32.mrf.mxu0
        %v3242 = vadd.f32 %v1394, %v3241
        %3243 = vdwg.mxu0
        %3244 = vmatprep.subr.bf16.mxu0 %v2262
        %3245 = vmatpush1.bf16.msra.mxu0 %v2261
        %3246 = vmatprep.subr.bf16.mxu0 %v2258
        %3247 = vmatpush1.bf16.msra.mxu0 %v2257
        %3248 = vmatprep.subr.bf16.mxu0 %v2254
        %3249 = vmatpush1.bf16.msra.mxu0 %v2253
        %3250 = vmatprep.subr.bf16.mxu0 %v2250
        %3251 = vmatpush1.bf16.msra.mxu0 %v2249
        %3252 = vmatprep.subr.bf16.mxu0 %v2246
        %3253 = vmatpush1.bf16.msra.mxu0 %v2245
        %3254 = vmatprep.subr.bf16.mxu0 %v2242
        %3255 = vmatpush1.bf16.msra.mxu0 %v2241
        %3256 = vmatprep.subr.bf16.mxu0 %v2238
        %3257 = vmatpush1.bf16.msra.mxu0 %v2237
        %3258 = vmatprep.subr.bf16.mxu0 %v2234
        %3259 = vmatpush1.bf16.msra.mxu0 %v2233
        %3260 = vmatprep.subr.bf16.mxu0 %v2294
        %3261 = vmatpush2.bf16.msra.mxu0 %v2293
        %3262 = vmatprep.subr.bf16.mxu0 %v2290
        %3263 = vmatpush2.bf16.msra.mxu0 %v2289
        %3264 = vmatprep.subr.bf16.mxu0 %v2286
        %3265 = vmatpush2.bf16.msra.mxu0 %v2285
        %3266 = vmatprep.subr.bf16.mxu0 %v2282
        %3267 = vmatpush2.bf16.msra.mxu0 %v2281
        %3268 = vmatprep.subr.bf16.mxu0 %v2278
        %3269 = vmatpush2.bf16.msra.mxu0 %v2277
        %3270 = vmatprep.subr.bf16.mxu0 %v2274
        %3271 = vmatpush2.bf16.msra.mxu0 %v2273
        %3272 = vmatprep.subr.bf16.mxu0 %v2270
        %3273 = vmatpush2.bf16.msra.mxu0 %v2269
        %3274 = vmatprep.subr.bf16.mxu0 %v2266
        %3275 = vmatpush2.bf16.msra.mxu0 %v2265
        %3276 = vmatprep.mubr.bf16.mxu0 %v1060
        %3277 = vmatmul.mubr.bf16.gmra.mxu0 %v1059
        %v3278 = vpop.f32.mrf.mxu0
        %v3279 = vadd.f32 %v3166, %v3278
        %v3280 = vpop.f32.mrf.mxu0
        %v3281 = vadd.f32 %v3168, %v3280
        %v3282 = vpop.f32.mrf.mxu0
        %v3283 = vadd.f32 %v3170, %v3282
        %v3284 = vpop.f32.mrf.mxu0
        %v3285 = vadd.f32 %v3172, %v3284
        %3286 = vmatprep.mubr.bf16.mxu0 %v1068
        %3287 = vmatmul.mubr.bf16.gmra.mxu0 %v1067
        %v3288 = vpop.f32.mrf.mxu0
        %v3289 = vadd.f32 %v3176, %v3288
        %v3290 = vpop.f32.mrf.mxu0
        %v3291 = vadd.f32 %v3178, %v3290
        %v3292 = vpop.f32.mrf.mxu0
        %v3293 = vadd.f32 %v3180, %v3292
        %v3294 = vpop.f32.mrf.mxu0
        %v3295 = vadd.f32 %v3182, %v3294
        %3296 = vmatprep.mubr.bf16.mxu0 %v1076
        %3297 = vmatmul.mubr.bf16.gmra.mxu0 %v1075
        %v3298 = vpop.f32.mrf.mxu0
        %v3299 = vadd.f32 %v3186, %v3298
        %v3300 = vpop.f32.mrf.mxu0
        %v3301 = vadd.f32 %v3188, %v3300
        %v3302 = vpop.f32.mrf.mxu0
        %v3303 = vadd.f32 %v3190, %v3302
        %v3304 = vpop.f32.mrf.mxu0
        %v3305 = vadd.f32 %v3192, %v3304
        %3306 = vmatprep.mubr.bf16.mxu0 %v1084
        %3307 = vmatmul.mubr.bf16.gmra.mxu0 %v1083
        %v3308 = vpop.f32.mrf.mxu0
        %v3309 = vadd.f32 %v3196, %v3308
        %v3310 = vpop.f32.mrf.mxu0
        %v3311 = vadd.f32 %v3198, %v3310
        %v3312 = vpop.f32.mrf.mxu0
        %v3313 = vadd.f32 %v3200, %v3312
        %v3314 = vpop.f32.mrf.mxu0
        %v3315 = vadd.f32 %v3202, %v3314
        %3316 = vmatprep.mubr.bf16.mxu0 %v1092
        %3317 = vmatmul.mubr.bf16.gmra.mxu0 %v1091
        %v3318 = vpop.f32.mrf.mxu0
        %v3319 = vadd.f32 %v3206, %v3318
        %v3320 = vpop.f32.mrf.mxu0
        %v3321 = vadd.f32 %v3208, %v3320
        %v3322 = vpop.f32.mrf.mxu0
        %v3323 = vadd.f32 %v3210, %v3322
        %v3324 = vpop.f32.mrf.mxu0
        %v3325 = vadd.f32 %v3212, %v3324
        %3326 = vmatprep.mubr.bf16.mxu0 %v1100
        %3327 = vmatmul.mubr.bf16.gmra.mxu0 %v1099
        %v3328 = vpop.f32.mrf.mxu0
        %v3329 = vadd.f32 %v3216, %v3328
        %v3330 = vpop.f32.mrf.mxu0
        %v3331 = vadd.f32 %v3218, %v3330
        %v3332 = vpop.f32.mrf.mxu0
        %v3333 = vadd.f32 %v3220, %v3332
        %v3334 = vpop.f32.mrf.mxu0
        %v3335 = vadd.f32 %v3222, %v3334
        %3336 = vmatprep.mubr.bf16.mxu0 %v1108
        %3337 = vmatmul.mubr.bf16.gmra.mxu0 %v1107
        %v3338 = vpop.f32.mrf.mxu0
        %v3339 = vadd.f32 %v3226, %v3338
        %v3340 = vpop.f32.mrf.mxu0
        %v3341 = vadd.f32 %v3228, %v3340
        %v3342 = vpop.f32.mrf.mxu0
        %v3343 = vadd.f32 %v3230, %v3342
        %v3344 = vpop.f32.mrf.mxu0
        %v3345 = vadd.f32 %v3232, %v3344
        %3346 = vmatprep.mubr.bf16.mxu0 %v1116
        %3347 = vmatmul.mubr.bf16.gmra.mxu0 %v1115
        %v3348 = vpop.f32.mrf.mxu0
        %v3349 = vadd.f32 %v3236, %v3348
        %v3350 = vpop.f32.mrf.mxu0
        %v3351 = vadd.f32 %v3238, %v3350
        %v3352 = vpop.f32.mrf.mxu0
        %v3353 = vadd.f32 %v3240, %v3352
        %v3354 = vpop.f32.mrf.mxu0
        %v3355 = vadd.f32 %v3242, %v3354
        %3356 = vdwg.mxu0
        %3357 = vmatprep.subr.bf16.mxu0 %v2326
        %3358 = vmatpush1.bf16.msra.mxu0 %v2325
        %3359 = vmatprep.subr.bf16.mxu0 %v2322
        %3360 = vmatpush1.bf16.msra.mxu0 %v2321
        %3361 = vmatprep.subr.bf16.mxu0 %v2318
        %3362 = vmatpush1.bf16.msra.mxu0 %v2317
        %3363 = vmatprep.subr.bf16.mxu0 %v2314
        %3364 = vmatpush1.bf16.msra.mxu0 %v2313
        %3365 = vmatprep.subr.bf16.mxu0 %v2310
        %3366 = vmatpush1.bf16.msra.mxu0 %v2309
        %3367 = vmatprep.subr.bf16.mxu0 %v2306
        %3368 = vmatpush1.bf16.msra.mxu0 %v2305
        %3369 = vmatprep.subr.bf16.mxu0 %v2302
        %3370 = vmatpush1.bf16.msra.mxu0 %v2301
        %3371 = vmatprep.subr.bf16.mxu0 %v2298
        %3372 = vmatpush1.bf16.msra.mxu0 %v2297
        %3373 = vmatprep.subr.bf16.mxu0 %v2358
        %3374 = vmatpush2.bf16.msra.mxu0 %v2357
        %3375 = vmatprep.subr.bf16.mxu0 %v2354
        %3376 = vmatpush2.bf16.msra.mxu0 %v2353
        %3377 = vmatprep.subr.bf16.mxu0 %v2350
        %3378 = vmatpush2.bf16.msra.mxu0 %v2349
        %3379 = vmatprep.subr.bf16.mxu0 %v2346
        %3380 = vmatpush2.bf16.msra.mxu0 %v2345
        %3381 = vmatprep.subr.bf16.mxu0 %v2342
        %3382 = vmatpush2.bf16.msra.mxu0 %v2341
        %3383 = vmatprep.subr.bf16.mxu0 %v2338
        %3384 = vmatpush2.bf16.msra.mxu0 %v2337
        %3385 = vmatprep.subr.bf16.mxu0 %v2334
        %3386 = vmatpush2.bf16.msra.mxu0 %v2333
        %3387 = vmatprep.subr.bf16.mxu0 %v2330
        %3388 = vmatpush2.bf16.msra.mxu0 %v2329
        %3389 = vmatprep.mubr.bf16.mxu0 %v1062
        %3390 = vmatmul.mubr.bf16.gmra.mxu0 %v1061
        %v3391 = vpop.f32.mrf.mxu0
        %v3392 = vadd.f32 %v3279, %v3391
        %v3393 = vpop.f32.mrf.mxu0
        %v3394 = vadd.f32 %v3281, %v3393
        %v3395 = vpop.f32.mrf.mxu0
        %v3396 = vadd.f32 %v3283, %v3395
        %v3397 = vpop.f32.mrf.mxu0
        %v3398 = vadd.f32 %v3285, %v3397
        %3399 = vmatprep.mubr.bf16.mxu0 %v1070
        %3400 = vmatmul.mubr.bf16.gmra.mxu0 %v1069
        %v3401 = vpop.f32.mrf.mxu0
        %v3402 = vadd.f32 %v3289, %v3401
        %v3403 = vpop.f32.mrf.mxu0
        %v3404 = vadd.f32 %v3291, %v3403
        %v3405 = vpop.f32.mrf.mxu0
        %v3406 = vadd.f32 %v3293, %v3405
        %v3407 = vpop.f32.mrf.mxu0
        %v3408 = vadd.f32 %v3295, %v3407
        %3409 = vmatprep.mubr.bf16.mxu0 %v1078
        %3410 = vmatmul.mubr.bf16.gmra.mxu0 %v1077
        %v3411 = vpop.f32.mrf.mxu0
        %v3412 = vadd.f32 %v3299, %v3411
        %v3413 = vpop.f32.mrf.mxu0
        %v3414 = vadd.f32 %v3301, %v3413
        %v3415 = vpop.f32.mrf.mxu0
        %v3416 = vadd.f32 %v3303, %v3415
        %v3417 = vpop.f32.mrf.mxu0
        %v3418 = vadd.f32 %v3305, %v3417
        %3419 = vmatprep.mubr.bf16.mxu0 %v1086
        %3420 = vmatmul.mubr.bf16.gmra.mxu0 %v1085
        %v3421 = vpop.f32.mrf.mxu0
        %v3422 = vadd.f32 %v3309, %v3421
        %v3423 = vpop.f32.mrf.mxu0
        %v3424 = vadd.f32 %v3311, %v3423
        %v3425 = vpop.f32.mrf.mxu0
        %v3426 = vadd.f32 %v3313, %v3425
        %v3427 = vpop.f32.mrf.mxu0
        %v3428 = vadd.f32 %v3315, %v3427
        %3429 = vmatprep.mubr.bf16.mxu0 %v1094
        %3430 = vmatmul.mubr.bf16.gmra.mxu0 %v1093
        %v3431 = vpop.f32.mrf.mxu0
        %v3432 = vadd.f32 %v3319, %v3431
        %v3433 = vpop.f32.mrf.mxu0
        %v3434 = vadd.f32 %v3321, %v3433
        %v3435 = vpop.f32.mrf.mxu0
        %v3436 = vadd.f32 %v3323, %v3435
        %v3437 = vpop.f32.mrf.mxu0
        %v3438 = vadd.f32 %v3325, %v3437
        %3439 = vmatprep.mubr.bf16.mxu0 %v1102
        %3440 = vmatmul.mubr.bf16.gmra.mxu0 %v1101
        %v3441 = vpop.f32.mrf.mxu0
        %v3442 = vadd.f32 %v3329, %v3441
        %v3443 = vpop.f32.mrf.mxu0
        %v3444 = vadd.f32 %v3331, %v3443
        %v3445 = vpop.f32.mrf.mxu0
        %v3446 = vadd.f32 %v3333, %v3445
        %v3447 = vpop.f32.mrf.mxu0
        %v3448 = vadd.f32 %v3335, %v3447
        %3449 = vmatprep.mubr.bf16.mxu0 %v1110
        %3450 = vmatmul.mubr.bf16.gmra.mxu0 %v1109
        %v3451 = vpop.f32.mrf.mxu0
        %v3452 = vadd.f32 %v3339, %v3451
        %v3453 = vpop.f32.mrf.mxu0
        %v3454 = vadd.f32 %v3341, %v3453
        %v3455 = vpop.f32.mrf.mxu0
        %v3456 = vadd.f32 %v3343, %v3455
        %v3457 = vpop.f32.mrf.mxu0
        %v3458 = vadd.f32 %v3345, %v3457
        %3459 = vmatprep.mubr.bf16.mxu0 %v1118
        %3460 = vmatmul.mubr.bf16.gmra.mxu0 %v1117
        %v3461 = vpop.f32.mrf.mxu0
        %v3462 = vadd.f32 %v3349, %v3461
        %v3463 = vpop.f32.mrf.mxu0
        %v3464 = vadd.f32 %v3351, %v3463
        %v3465 = vpop.f32.mrf.mxu0
        %v3466 = vadd.f32 %v3353, %v3465
        %v3467 = vpop.f32.mrf.mxu0
        %v3468 = vadd.f32 %v3355, %v3467
        %3469 = vdwg.mxu0
        %3470 = vmatprep.subr.bf16.mxu0 %v2390
        %3471 = vmatpush1.bf16.msra.mxu0 %v2389
        %3472 = vmatprep.subr.bf16.mxu0 %v2386
        %3473 = vmatpush1.bf16.msra.mxu0 %v2385
        %3474 = vmatprep.subr.bf16.mxu0 %v2382
        %3475 = vmatpush1.bf16.msra.mxu0 %v2381
        %3476 = vmatprep.subr.bf16.mxu0 %v2378
        %3477 = vmatpush1.bf16.msra.mxu0 %v2377
        %3478 = vmatprep.subr.bf16.mxu0 %v2374
        %3479 = vmatpush1.bf16.msra.mxu0 %v2373
        %3480 = vmatprep.subr.bf16.mxu0 %v2370
        %3481 = vmatpush1.bf16.msra.mxu0 %v2369
        %3482 = vmatprep.subr.bf16.mxu0 %v2366
        %3483 = vmatpush1.bf16.msra.mxu0 %v2365
        %3484 = vmatprep.subr.bf16.mxu0 %v2362
        %3485 = vmatpush1.bf16.msra.mxu0 %v2361
        %3486 = vmatprep.subr.bf16.mxu0 %v2422
        %3487 = vmatpush2.bf16.msra.mxu0 %v2421
        %3488 = vmatprep.subr.bf16.mxu0 %v2418
        %3489 = vmatpush2.bf16.msra.mxu0 %v2417
        %3490 = vmatprep.subr.bf16.mxu0 %v2414
        %3491 = vmatpush2.bf16.msra.mxu0 %v2413
        %3492 = vmatprep.subr.bf16.mxu0 %v2410
        %3493 = vmatpush2.bf16.msra.mxu0 %v2409
        %3494 = vmatprep.subr.bf16.mxu0 %v2406
        %3495 = vmatpush2.bf16.msra.mxu0 %v2405
        %3496 = vmatprep.subr.bf16.mxu0 %v2402
        %3497 = vmatpush2.bf16.msra.mxu0 %v2401
        %3498 = vmatprep.subr.bf16.mxu0 %v2398
        %3499 = vmatpush2.bf16.msra.mxu0 %v2397
        %3500 = vmatprep.subr.bf16.mxu0 %v2394
        %3501 = vmatpush2.bf16.msra.mxu0 %v2393
        %3502 = vmatprep.mubr.bf16.mxu0 %v1064
        %3503 = vmatmul.mubr.bf16.gmra.mxu0 %v1063
        %v3504 = vpop.f32.mrf.mxu0
        %v3505 = vadd.f32 %v3392, %v3504
        %v3506 = vpop.f32.mrf.mxu0
        %v3507 = vadd.f32 %v3394, %v3506
        %v3508 = vpop.f32.mrf.mxu0
        %v3509 = vadd.f32 %v3396, %v3508
        %v3510 = vpop.f32.mrf.mxu0
        %v3511 = vadd.f32 %v3398, %v3510
        %3512 = vmatprep.mubr.bf16.mxu0 %v1072
        %3513 = vmatmul.mubr.bf16.gmra.mxu0 %v1071
        %v3514 = vpop.f32.mrf.mxu0
        %v3515 = vadd.f32 %v3402, %v3514
        %v3516 = vpop.f32.mrf.mxu0
        %v3517 = vadd.f32 %v3404, %v3516
        %v3518 = vpop.f32.mrf.mxu0
        %v3519 = vadd.f32 %v3406, %v3518
        %v3520 = vpop.f32.mrf.mxu0
        %v3521 = vadd.f32 %v3408, %v3520
        %3522 = vmatprep.mubr.bf16.mxu0 %v1080
        %3523 = vmatmul.mubr.bf16.gmra.mxu0 %v1079
        %v3524 = vpop.f32.mrf.mxu0
        %v3525 = vadd.f32 %v3412, %v3524
        %v3526 = vpop.f32.mrf.mxu0
        %v3527 = vadd.f32 %v3414, %v3526
        %v3528 = vpop.f32.mrf.mxu0
        %v3529 = vadd.f32 %v3416, %v3528
        %v3530 = vpop.f32.mrf.mxu0
        %v3531 = vadd.f32 %v3418, %v3530
        %3532 = vmatprep.mubr.bf16.mxu0 %v1088
        %3533 = vmatmul.mubr.bf16.gmra.mxu0 %v1087
        %v3534 = vpop.f32.mrf.mxu0
        %v3535 = vadd.f32 %v3422, %v3534
        %v3536 = vpop.f32.mrf.mxu0
        %v3537 = vadd.f32 %v3424, %v3536
        %v3538 = vpop.f32.mrf.mxu0
        %v3539 = vadd.f32 %v3426, %v3538
        %v3540 = vpop.f32.mrf.mxu0
        %v3541 = vadd.f32 %v3428, %v3540
        %3542 = vmatprep.mubr.bf16.mxu0 %v1096
        %3543 = vmatmul.mubr.bf16.gmra.mxu0 %v1095
        %v3544 = vpop.f32.mrf.mxu0
        %v3545 = vadd.f32 %v3432, %v3544
        %v3546 = vpop.f32.mrf.mxu0
        %v3547 = vadd.f32 %v3434, %v3546
        %v3548 = vpop.f32.mrf.mxu0
        %v3549 = vadd.f32 %v3436, %v3548
        %v3550 = vpop.f32.mrf.mxu0
        %v3551 = vadd.f32 %v3438, %v3550
        %3552 = vmatprep.mubr.bf16.mxu0 %v1104
        %3553 = vmatmul.mubr.bf16.gmra.mxu0 %v1103
        %v3554 = vpop.f32.mrf.mxu0
        %v3555 = vadd.f32 %v3442, %v3554
        %v3556 = vpop.f32.mrf.mxu0
        %v3557 = vadd.f32 %v3444, %v3556
        %v3558 = vpop.f32.mrf.mxu0
        %v3559 = vadd.f32 %v3446, %v3558
        %v3560 = vpop.f32.mrf.mxu0
        %v3561 = vadd.f32 %v3448, %v3560
        %3562 = vmatprep.mubr.bf16.mxu0 %v1112
        %3563 = vmatmul.mubr.bf16.gmra.mxu0 %v1111
        %v3564 = vpop.f32.mrf.mxu0
        %v3565 = vadd.f32 %v3452, %v3564
        %v3566 = vpop.f32.mrf.mxu0
        %v3567 = vadd.f32 %v3454, %v3566
        %v3568 = vpop.f32.mrf.mxu0
        %v3569 = vadd.f32 %v3456, %v3568
        %v3570 = vpop.f32.mrf.mxu0
        %v3571 = vadd.f32 %v3458, %v3570
        %3572 = vmatprep.mubr.bf16.mxu0 %v1120
        %3573 = vmatmul.mubr.bf16.gmra.mxu0 %v1119
        %v3574 = vpop.f32.mrf.mxu0
        %v3575 = vadd.f32 %v3462, %v3574
        %v3576 = vpop.f32.mrf.mxu0
        %v3577 = vadd.f32 %v3464, %v3576
        %v3578 = vpop.f32.mrf.mxu0
        %v3579 = vadd.f32 %v3466, %v3578
        %v3580 = vpop.f32.mrf.mxu0
        %v3581 = vadd.f32 %v3468, %v3580
        %3582 = vdwg.mxu0
        %v3583 = vmax.f32 %v3053, 0.0
        %v3584 = vmax.f32 %v3055, 0.0
        %v3585 = vmax.f32 %v3505, 0.0
        %v3586 = vmax.f32 %v3507, 0.0
        %v3587 = vmax.f32 %v3057, 0.0
        %v3588 = vmax.f32 %v3059, 0.0
        %v3589 = vmax.f32 %v3509, 0.0
        %v3590 = vmax.f32 %v3511, 0.0
        %v3591 = vmax.f32 %v3063, 0.0
        %v3592 = vmax.f32 %v3065, 0.0
        %v3593 = vmax.f32 %v3515, 0.0
        %v3594 = vmax.f32 %v3517, 0.0
        %v3595 = vmax.f32 %v3067, 0.0
        %v3596 = vmax.f32 %v3069, 0.0
        %v3597 = vmax.f32 %v3519, 0.0
        %v3598 = vmax.f32 %v3521, 0.0
        %v3599 = vmax.f32 %v3073, 0.0
        %v3600 = vmax.f32 %v3075, 0.0
        %v3601 = vmax.f32 %v3525, 0.0
        %v3602 = vmax.f32 %v3527, 0.0
        %v3603 = vmax.f32 %v3077, 0.0
        %v3604 = vmax.f32 %v3079, 0.0
        %v3605 = vmax.f32 %v3529, 0.0
        %v3606 = vmax.f32 %v3531, 0.0
        %v3607 = vmax.f32 %v3083, 0.0
        %v3608 = vmax.f32 %v3085, 0.0
        %v3609 = vmax.f32 %v3535, 0.0
        %v3610 = vmax.f32 %v3537, 0.0
        %v3611 = vmax.f32 %v3087, 0.0
        %v3612 = vmax.f32 %v3089, 0.0
        %v3613 = vmax.f32 %v3539, 0.0
        %v3614 = vmax.f32 %v3541, 0.0
        %v3615 = vmax.f32 %v3093, 0.0
        %v3616 = vmax.f32 %v3095, 0.0
        %v3617 = vmax.f32 %v3545, 0.0
        %v3618 = vmax.f32 %v3547, 0.0
        %v3619 = vmax.f32 %v3097, 0.0
        %v3620 = vmax.f32 %v3099, 0.0
        %v3621 = vmax.f32 %v3549, 0.0
        %v3622 = vmax.f32 %v3551, 0.0
        %v3623 = vmax.f32 %v3103, 0.0
        %v3624 = vmax.f32 %v3105, 0.0
        %v3625 = vmax.f32 %v3555, 0.0
        %v3626 = vmax.f32 %v3557, 0.0
        %v3627 = vmax.f32 %v3107, 0.0
        %v3628 = vmax.f32 %v3109, 0.0
        %v3629 = vmax.f32 %v3559, 0.0
        %v3630 = vmax.f32 %v3561, 0.0
        %v3631 = vmax.f32 %v3113, 0.0
        %v3632 = vmax.f32 %v3115, 0.0
        %v3633 = vmax.f32 %v3565, 0.0
        %v3634 = vmax.f32 %v3567, 0.0
        %v3635 = vmax.f32 %v3117, 0.0
        %v3636 = vmax.f32 %v3119, 0.0
        %v3637 = vmax.f32 %v3569, 0.0
        %v3638 = vmax.f32 %v3571, 0.0
        %v3639 = vmax.f32 %v3123, 0.0
        %v3640 = vmax.f32 %v3125, 0.0
        %v3641 = vmax.f32 %v3575, 0.0
        %v3642 = vmax.f32 %v3577, 0.0
        %v3643 = vmax.f32 %v3127, 0.0
        %v3644 = vmax.f32 %v3129, 0.0
        %v3645 = vmax.f32 %v3579, 0.0
        %v3646 = vmax.f32 %v3581, 0.0
        %v3647 = vpack.c.bf16 %v3587, %v3583
        %v3648 = vpack.c.bf16 %v3588, %v3584
        %v3649 = vpack.c.bf16 %v3589, %v3585
        %v3650 = vpack.c.bf16 %v3590, %v3586
        %v3651 = vpack.c.bf16 %v3595, %v3591
        %v3652 = vpack.c.bf16 %v3596, %v3592
        %v3653 = vpack.c.bf16 %v3597, %v3593
        %v3654 = vpack.c.bf16 %v3598, %v3594
        %v3655 = vpack.c.bf16 %v3603, %v3599
        %v3656 = vpack.c.bf16 %v3604, %v3600
        %v3657 = vpack.c.bf16 %v3605, %v3601
        %v3658 = vpack.c.bf16 %v3606, %v3602
        %v3659 = vpack.c.bf16 %v3611, %v3607
        %v3660 = vpack.c.bf16 %v3612, %v3608
        %v3661 = vpack.c.bf16 %v3613, %v3609
        %v3662 = vpack.c.bf16 %v3614, %v3610
        %v3663 = vpack.c.bf16 %v3619, %v3615
        %v3664 = vpack.c.bf16 %v3620, %v3616
        %v3665 = vpack.c.bf16 %v3621, %v3617
        %v3666 = vpack.c.bf16 %v3622, %v3618
        %v3667 = vpack.c.bf16 %v3627, %v3623
        %v3668 = vpack.c.bf16 %v3628, %v3624
        %v3669 = vpack.c.bf16 %v3629, %v3625
        %v3670 = vpack.c.bf16 %v3630, %v3626
        %v3671 = vpack.c.bf16 %v3635, %v3631
        %v3672 = vpack.c.bf16 %v3636, %v3632
        %v3673 = vpack.c.bf16 %v3637, %v3633
        %v3674 = vpack.c.bf16 %v3638, %v3634
        %v3675 = vpack.c.bf16 %v3643, %v3639
        %v3676 = vpack.c.bf16 %v3644, %v3640
        %v3677 = vpack.c.bf16 %v3645, %v3641
        %v3678 = vpack.c.bf16 %v3646, %v3642
        %v3679 = vld [vmem:[%s5] sm:$0xf]
        %v3680 = vld [vmem:[%s5 + $0x4] sm:$0xf]
        %v3681 = vld [vmem:[%s5 + $0x8] sm:$0xf]
        %v3682 = vld [vmem:[%s5 + $0xc] sm:$0xf]
        %v3683 = vld [vmem:[%s5 + $0x10] sm:$0xf]
        %v3684 = vld [vmem:[%s5 + $0x14] sm:$0xf]
        %v3685 = vld [vmem:[%s5 + $0x18] sm:$0xf]
        %v3686 = vld [vmem:[%s5 + $0x1c] sm:$0xf]
        %v3687 = vld [vmem:[%s5 + $0x20] sm:$0xf]
        %v3688 = vld [vmem:[%s5 + $0x24] sm:$0xf]
        %v3689 = vld [vmem:[%s5 + $0x28] sm:$0xf]
        %v3690 = vld [vmem:[%s5 + $0x2c] sm:$0xf]
        %v3691 = vld [vmem:[%s5 + $0x30] sm:$0xf]
        %v3692 = vld [vmem:[%s5 + $0x34] sm:$0xf]
        %v3693 = vld [vmem:[%s5 + $0x38] sm:$0xf]
        %v3694 = vld [vmem:[%s5 + $0x3c] sm:$0xf]
        %v3695 = vld [vmem:[%s5 + $0x40] sm:$0xf]
        %v3696 = vld [vmem:[%s5 + $0x44] sm:$0xf]
        %v3697 = vld [vmem:[%s5 + $0x48] sm:$0xf]
        %v3698 = vld [vmem:[%s5 + $0x4c] sm:$0xf]
        %v3699 = vld [vmem:[%s5 + $0x50] sm:$0xf]
        %v3700 = vld [vmem:[%s5 + $0x54] sm:$0xf]
        %v3701 = vld [vmem:[%s5 + $0x58] sm:$0xf]
        %v3702 = vld [vmem:[%s5 + $0x5c] sm:$0xf]
        %v3703 = vld [vmem:[%s5 + $0x60] sm:$0xf]
        %v3704 = vld [vmem:[%s5 + $0x64] sm:$0xf]
        %v3705 = vld [vmem:[%s5 + $0x68] sm:$0xf]
        %v3706 = vld [vmem:[%s5 + $0x6c] sm:$0xf]
        %v3707 = vld [vmem:[%s5 + $0x70] sm:$0xf]
        %v3708 = vld [vmem:[%s5 + $0x74] sm:$0xf]
        %v3709 = vld [vmem:[%s5 + $0x78] sm:$0xf]
        %v3710 = vld [vmem:[%s5 + $0x7c] sm:$0xf]
        %v3711 = vld [vmem:[%s5 + $0x80] sm:$0xf]
        %v3712 = vld [vmem:[%s5 + $0x84] sm:$0xf]
        %v3713 = vld [vmem:[%s5 + $0x88] sm:$0xf]
        %v3714 = vld [vmem:[%s5 + $0x8c] sm:$0xf]
        %v3715 = vld [vmem:[%s5 + $0x90] sm:$0xf]
        %v3716 = vld [vmem:[%s5 + $0x94] sm:$0xf]
        %v3717 = vld [vmem:[%s5 + $0x98] sm:$0xf]
        %v3718 = vld [vmem:[%s5 + $0x9c] sm:$0xf]
        %v3719 = vld [vmem:[%s5 + $0xa0] sm:$0xf]
        %v3720 = vld [vmem:[%s5 + $0xa4] sm:$0xf]
        %v3721 = vld [vmem:[%s5 + $0xa8] sm:$0xf]
        %v3722 = vld [vmem:[%s5 + $0xac] sm:$0xf]
        %v3723 = vld [vmem:[%s5 + $0xb0] sm:$0xf]
        %v3724 = vld [vmem:[%s5 + $0xb4] sm:$0xf]
        %v3725 = vld [vmem:[%s5 + $0xb8] sm:$0xf]
        %v3726 = vld [vmem:[%s5 + $0xbc] sm:$0xf]
        %v3727 = vld [vmem:[%s5 + $0xc0] sm:$0xf]
        %v3728 = vld [vmem:[%s5 + $0xc4] sm:$0xf]
        %v3729 = vld [vmem:[%s5 + $0xc8] sm:$0xf]
        %v3730 = vld [vmem:[%s5 + $0xcc] sm:$0xf]
        %v3731 = vld [vmem:[%s5 + $0xd0] sm:$0xf]
        %v3732 = vld [vmem:[%s5 + $0xd4] sm:$0xf]
        %v3733 = vld [vmem:[%s5 + $0xd8] sm:$0xf]
        %v3734 = vld [vmem:[%s5 + $0xdc] sm:$0xf]
        %v3735 = vld [vmem:[%s5 + $0xe0] sm:$0xf]
        %v3736 = vld [vmem:[%s5 + $0xe4] sm:$0xf]
        %v3737 = vld [vmem:[%s5 + $0xe8] sm:$0xf]
        %v3738 = vld [vmem:[%s5 + $0xec] sm:$0xf]
        %v3739 = vld [vmem:[%s5 + $0xf0] sm:$0xf]
        %v3740 = vld [vmem:[%s5 + $0xf4] sm:$0xf]
        %v3741 = vld [vmem:[%s5 + $0xf8] sm:$0xf]
        %v3742 = vld [vmem:[%s5 + $0xfc] sm:$0xf]
        %v3743 = vld [vmem:[%s6] sm:$0x1]
        %v3745 = vlaneseq
        %v3746 = vshrl.u32 %v3745, 7
        %v3747 = vsub.s32 0, %v3746
        %v3748 = vrot.slane %v3743, %v3747
        %v3814 = vunpack.c.l.b16 %v3679
        %v3815 = vunpack.c.l.b16 %v3680
        %v3816 = vunpack.c.l.b16 %v3681
        %v3817 = vunpack.c.l.b16 %v3682
        %v3818 = vunpack.c.l.b16 %v3683
        %v3819 = vunpack.c.l.b16 %v3684
        %v3820 = vunpack.c.l.b16 %v3685
        %v3821 = vunpack.c.l.b16 %v3686
        %v3822 = vunpack.c.l.b16 %v3687
        %v3823 = vunpack.c.l.b16 %v3688
        %v3824 = vunpack.c.l.b16 %v3689
        %v3825 = vunpack.c.l.b16 %v3690
        %v3826 = vunpack.c.l.b16 %v3691
        %v3827 = vunpack.c.l.b16 %v3692
        %v3828 = vunpack.c.l.b16 %v3693
        %v3829 = vunpack.c.l.b16 %v3694
        %v3830 = vunpack.c.l.b16 %v3695
        %v3831 = vunpack.c.l.b16 %v3696
        %v3832 = vunpack.c.l.b16 %v3697
        %v3833 = vunpack.c.l.b16 %v3698
        %v3834 = vunpack.c.l.b16 %v3699
        %v3835 = vunpack.c.l.b16 %v3700
        %v3836 = vunpack.c.l.b16 %v3701
        %v3837 = vunpack.c.l.b16 %v3702
        %v3838 = vunpack.c.l.b16 %v3703
        %v3839 = vunpack.c.l.b16 %v3704
        %v3840 = vunpack.c.l.b16 %v3705
        %v3841 = vunpack.c.l.b16 %v3706
        %v3842 = vunpack.c.l.b16 %v3707
        %v3843 = vunpack.c.l.b16 %v3708
        %v3844 = vunpack.c.l.b16 %v3709
        %v3845 = vunpack.c.l.b16 %v3710
        %v3846 = vunpack.c.l.b16 %v3711
        %v3847 = vunpack.c.l.b16 %v3712
        %v3848 = vunpack.c.l.b16 %v3713
        %v3849 = vunpack.c.l.b16 %v3714
        %v3850 = vunpack.c.l.b16 %v3715
        %v3851 = vunpack.c.l.b16 %v3716
        %v3852 = vunpack.c.l.b16 %v3717
        %v3853 = vunpack.c.l.b16 %v3718
        %v3854 = vunpack.c.l.b16 %v3719
        %v3855 = vunpack.c.l.b16 %v3720
        %v3856 = vunpack.c.l.b16 %v3721
        %v3857 = vunpack.c.l.b16 %v3722
        %v3858 = vunpack.c.l.b16 %v3723
        %v3859 = vunpack.c.l.b16 %v3724
        %v3860 = vunpack.c.l.b16 %v3725
        %v3861 = vunpack.c.l.b16 %v3726
        %v3862 = vunpack.c.l.b16 %v3727
        %v3863 = vunpack.c.l.b16 %v3728
        %v3864 = vunpack.c.l.b16 %v3729
        %v3865 = vunpack.c.l.b16 %v3730
        %v3866 = vunpack.c.l.b16 %v3731
        %v3867 = vunpack.c.l.b16 %v3732
        %v3868 = vunpack.c.l.b16 %v3733
        %v3869 = vunpack.c.l.b16 %v3734
        %v3870 = vunpack.c.l.b16 %v3735
        %v3871 = vunpack.c.l.b16 %v3736
        %v3872 = vunpack.c.l.b16 %v3737
        %v3873 = vunpack.c.l.b16 %v3738
        %v3874 = vunpack.c.l.b16 %v3739
        %v3875 = vunpack.c.l.b16 %v3740
        %v3876 = vunpack.c.l.b16 %v3741
        %v3877 = vunpack.c.l.b16 %v3742
        %v3878 = vpack.c.b16 %v3815, %v3814
        %v3879 = vpack.c.b16 %v3817, %v3816
        %v3880 = vpack.c.b16 %v3819, %v3818
        %v3881 = vpack.c.b16 %v3821, %v3820
        %v3882 = vpack.c.b16 %v3823, %v3822
        %v3883 = vpack.c.b16 %v3825, %v3824
        %v3884 = vpack.c.b16 %v3827, %v3826
        %v3885 = vpack.c.b16 %v3829, %v3828
        %v3886 = vpack.c.b16 %v3831, %v3830
        %v3887 = vpack.c.b16 %v3833, %v3832
        %v3888 = vpack.c.b16 %v3835, %v3834
        %v3889 = vpack.c.b16 %v3837, %v3836
        %v3890 = vpack.c.b16 %v3839, %v3838
        %v3891 = vpack.c.b16 %v3841, %v3840
        %v3892 = vpack.c.b16 %v3843, %v3842
        %v3893 = vpack.c.b16 %v3845, %v3844
        %v3894 = vpack.c.b16 %v3847, %v3846
        %v3895 = vpack.c.b16 %v3849, %v3848
        %v3896 = vpack.c.b16 %v3851, %v3850
        %v3897 = vpack.c.b16 %v3853, %v3852
        %v3898 = vpack.c.b16 %v3855, %v3854
        %v3899 = vpack.c.b16 %v3857, %v3856
        %v3900 = vpack.c.b16 %v3859, %v3858
        %v3901 = vpack.c.b16 %v3861, %v3860
        %v3902 = vpack.c.b16 %v3863, %v3862
        %v3903 = vpack.c.b16 %v3865, %v3864
        %v3904 = vpack.c.b16 %v3867, %v3866
        %v3905 = vpack.c.b16 %v3869, %v3868
        %v3906 = vpack.c.b16 %v3871, %v3870
        %v3907 = vpack.c.b16 %v3873, %v3872
        %v3908 = vpack.c.b16 %v3875, %v3874
        %v3909 = vpack.c.b16 %v3877, %v3876
        %3942 = vmatprep.subr.bf16.mxu0 0
        %3943 = vmatpush1.bf16.msra.mxu0 %v3885
        %3944 = vmatprep.subr.bf16.mxu0 0
        %3945 = vmatpush1.bf16.msra.mxu0 %v3884
        %3946 = vmatprep.subr.bf16.mxu0 0
        %3947 = vmatpush1.bf16.msra.mxu0 %v3883
        %3948 = vmatprep.subr.bf16.mxu0 0
        %3949 = vmatpush1.bf16.msra.mxu0 %v3882
        %3950 = vmatprep.subr.bf16.mxu0 0
        %3951 = vmatpush1.bf16.msra.mxu0 %v3881
        %3952 = vmatprep.subr.bf16.mxu0 0
        %3953 = vmatpush1.bf16.msra.mxu0 %v3880
        %3954 = vmatprep.subr.bf16.mxu0 0
        %3955 = vmatpush1.bf16.msra.mxu0 %v3879
        %3956 = vmatprep.subr.bf16.mxu0 0
        %3957 = vmatpush1.bf16.msra.mxu0 %v3878
        %3958 = vmatprep.subr.bf16.mxu0 0
        %3959 = vmatpush2.bf16.msra.mxu0 %v3893
        %3960 = vmatprep.subr.bf16.mxu0 0
        %3961 = vmatpush2.bf16.msra.mxu0 %v3892
        %3962 = vmatprep.subr.bf16.mxu0 0
        %3963 = vmatpush2.bf16.msra.mxu0 %v3891
        %3964 = vmatprep.subr.bf16.mxu0 0
        %3965 = vmatpush2.bf16.msra.mxu0 %v3890
        %3966 = vmatprep.subr.bf16.mxu0 0
        %3967 = vmatpush2.bf16.msra.mxu0 %v3889
        %3968 = vmatprep.subr.bf16.mxu0 0
        %3969 = vmatpush2.bf16.msra.mxu0 %v3888
        %3970 = vmatprep.subr.bf16.mxu0 0
        %3971 = vmatpush2.bf16.msra.mxu0 %v3887
        %3972 = vmatprep.subr.bf16.mxu0 0
        %3973 = vmatpush2.bf16.msra.mxu0 %v3886
        %3974 = vmatprep.mubr.bf16.mxu0 %v3648
        %3975 = vmatmul.mubr.bf16.gmra.mxu0 %v3647
        %v3976 = vpop.f32.mrf.mxu0
        %v3977 = vadd.f32 %v3748, %v3976
        %v3978 = vpop.f32.mrf.mxu0
        %v3979 = vpop.f32.mrf.mxu0
        %v3980 = vadd.f32 %v3748, %v3979
        %v3981 = vpop.f32.mrf.mxu0
        %3982 = vmatprep.mubr.bf16.mxu0 %v3652
        %3983 = vmatmul.mubr.bf16.gmra.mxu0 %v3651
        %v3984 = vpop.f32.mrf.mxu0
        %v3985 = vadd.f32 %v3748, %v3984
        %v3986 = vpop.f32.mrf.mxu0
        %v3987 = vpop.f32.mrf.mxu0
        %v3988 = vadd.f32 %v3748, %v3987
        %v3989 = vpop.f32.mrf.mxu0
        %3990 = vmatprep.mubr.bf16.mxu0 %v3656
        %3991 = vmatmul.mubr.bf16.gmra.mxu0 %v3655
        %v3992 = vpop.f32.mrf.mxu0
        %v3993 = vadd.f32 %v3748, %v3992
        %v3994 = vpop.f32.mrf.mxu0
        %v3995 = vpop.f32.mrf.mxu0
        %v3996 = vadd.f32 %v3748, %v3995
        %v3997 = vpop.f32.mrf.mxu0
        %3998 = vmatprep.mubr.bf16.mxu0 %v3660
        %3999 = vmatmul.mubr.bf16.gmra.mxu0 %v3659
        %v4000 = vpop.f32.mrf.mxu0
        %v4001 = vadd.f32 %v3748, %v4000
        %v4002 = vpop.f32.mrf.mxu0
        %v4003 = vpop.f32.mrf.mxu0
        %v4004 = vadd.f32 %v3748, %v4003
        %v4005 = vpop.f32.mrf.mxu0
        %4006 = vmatprep.mubr.bf16.mxu0 %v3664
        %4007 = vmatmul.mubr.bf16.gmra.mxu0 %v3663
        %v4008 = vpop.f32.mrf.mxu0
        %v4009 = vadd.f32 %v3748, %v4008
        %v4010 = vpop.f32.mrf.mxu0
        %v4011 = vpop.f32.mrf.mxu0
        %v4012 = vadd.f32 %v3748, %v4011
        %v4013 = vpop.f32.mrf.mxu0
        %4014 = vmatprep.mubr.bf16.mxu0 %v3668
        %4015 = vmatmul.mubr.bf16.gmra.mxu0 %v3667
        %v4016 = vpop.f32.mrf.mxu0
        %v4017 = vadd.f32 %v3748, %v4016
        %v4018 = vpop.f32.mrf.mxu0
        %v4019 = vpop.f32.mrf.mxu0
        %v4020 = vadd.f32 %v3748, %v4019
        %v4021 = vpop.f32.mrf.mxu0
        %4022 = vmatprep.mubr.bf16.mxu0 %v3672
        %4023 = vmatmul.mubr.bf16.gmra.mxu0 %v3671
        %v4024 = vpop.f32.mrf.mxu0
        %v4025 = vadd.f32 %v3748, %v4024
        %v4026 = vpop.f32.mrf.mxu0
        %v4027 = vpop.f32.mrf.mxu0
        %v4028 = vadd.f32 %v3748, %v4027
        %v4029 = vpop.f32.mrf.mxu0
        %4030 = vmatprep.mubr.bf16.mxu0 %v3676
        %4031 = vmatmul.mubr.bf16.gmra.mxu0 %v3675
        %v4032 = vpop.f32.mrf.mxu0
        %v4033 = vadd.f32 %v3748, %v4032
        %v4034 = vpop.f32.mrf.mxu0
        %v4035 = vpop.f32.mrf.mxu0
        %v4036 = vadd.f32 %v3748, %v4035
        %v4037 = vpop.f32.mrf.mxu0
        %4038 = vdwg.mxu0
        %4039 = vmatprep.subr.bf16.mxu0 0
        %4040 = vmatpush1.bf16.msra.mxu0 %v3901
        %4041 = vmatprep.subr.bf16.mxu0 0
        %4042 = vmatpush1.bf16.msra.mxu0 %v3900
        %4043 = vmatprep.subr.bf16.mxu0 0
        %4044 = vmatpush1.bf16.msra.mxu0 %v3899
        %4045 = vmatprep.subr.bf16.mxu0 0
        %4046 = vmatpush1.bf16.msra.mxu0 %v3898
        %4047 = vmatprep.subr.bf16.mxu0 0
        %4048 = vmatpush1.bf16.msra.mxu0 %v3897
        %4049 = vmatprep.subr.bf16.mxu0 0
        %4050 = vmatpush1.bf16.msra.mxu0 %v3896
        %4051 = vmatprep.subr.bf16.mxu0 0
        %4052 = vmatpush1.bf16.msra.mxu0 %v3895
        %4053 = vmatprep.subr.bf16.mxu0 0
        %4054 = vmatpush1.bf16.msra.mxu0 %v3894
        %4055 = vmatprep.subr.bf16.mxu0 0
        %4056 = vmatpush2.bf16.msra.mxu0 %v3909
        %4057 = vmatprep.subr.bf16.mxu0 0
        %4058 = vmatpush2.bf16.msra.mxu0 %v3908
        %4059 = vmatprep.subr.bf16.mxu0 0
        %4060 = vmatpush2.bf16.msra.mxu0 %v3907
        %4061 = vmatprep.subr.bf16.mxu0 0
        %4062 = vmatpush2.bf16.msra.mxu0 %v3906
        %4063 = vmatprep.subr.bf16.mxu0 0
        %4064 = vmatpush2.bf16.msra.mxu0 %v3905
        %4065 = vmatprep.subr.bf16.mxu0 0
        %4066 = vmatpush2.bf16.msra.mxu0 %v3904
        %4067 = vmatprep.subr.bf16.mxu0 0
        %4068 = vmatpush2.bf16.msra.mxu0 %v3903
        %4069 = vmatprep.subr.bf16.mxu0 0
        %4070 = vmatpush2.bf16.msra.mxu0 %v3902
        %4071 = vmatprep.mubr.bf16.mxu0 %v3650
        %4072 = vmatmul.mubr.bf16.gmra.mxu0 %v3649
        %v4073 = vpop.f32.mrf.mxu0
        %v4074 = vadd.f32 %v3977, %v4073
        %v4075 = vpop.f32.mrf.mxu0
        %v4076 = vpop.f32.mrf.mxu0
        %v4077 = vadd.f32 %v3980, %v4076
        %v4078 = vpop.f32.mrf.mxu0
        %4079 = vmatprep.mubr.bf16.mxu0 %v3654
        %4080 = vmatmul.mubr.bf16.gmra.mxu0 %v3653
        %v4081 = vpop.f32.mrf.mxu0
        %v4082 = vadd.f32 %v3985, %v4081
        %v4083 = vpop.f32.mrf.mxu0
        %v4084 = vpop.f32.mrf.mxu0
        %v4085 = vadd.f32 %v3988, %v4084
        %v4086 = vpop.f32.mrf.mxu0
        %4087 = vmatprep.mubr.bf16.mxu0 %v3658
        %4088 = vmatmul.mubr.bf16.gmra.mxu0 %v3657
        %v4089 = vpop.f32.mrf.mxu0
        %v4090 = vadd.f32 %v3993, %v4089
        %v4091 = vpop.f32.mrf.mxu0
        %v4092 = vpop.f32.mrf.mxu0
        %v4093 = vadd.f32 %v3996, %v4092
        %v4094 = vpop.f32.mrf.mxu0
        %4095 = vmatprep.mubr.bf16.mxu0 %v3662
        %4096 = vmatmul.mubr.bf16.gmra.mxu0 %v3661
        %v4097 = vpop.f32.mrf.mxu0
        %v4098 = vadd.f32 %v4001, %v4097
        %v4099 = vpop.f32.mrf.mxu0
        %v4100 = vpop.f32.mrf.mxu0
        %v4101 = vadd.f32 %v4004, %v4100
        %v4102 = vpop.f32.mrf.mxu0
        %4103 = vmatprep.mubr.bf16.mxu0 %v3666
        %4104 = vmatmul.mubr.bf16.gmra.mxu0 %v3665
        %v4105 = vpop.f32.mrf.mxu0
        %v4106 = vadd.f32 %v4009, %v4105
        %v4107 = vpop.f32.mrf.mxu0
        %v4108 = vpop.f32.mrf.mxu0
        %v4109 = vadd.f32 %v4012, %v4108
        %v4110 = vpop.f32.mrf.mxu0
        %4111 = vmatprep.mubr.bf16.mxu0 %v3670
        %4112 = vmatmul.mubr.bf16.gmra.mxu0 %v3669
        %v4113 = vpop.f32.mrf.mxu0
        %v4114 = vadd.f32 %v4017, %v4113
        %v4115 = vpop.f32.mrf.mxu0
        %v4116 = vpop.f32.mrf.mxu0
        %v4117 = vadd.f32 %v4020, %v4116
        %v4118 = vpop.f32.mrf.mxu0
        %4119 = vmatprep.mubr.bf16.mxu0 %v3674
        %4120 = vmatmul.mubr.bf16.gmra.mxu0 %v3673
        %v4121 = vpop.f32.mrf.mxu0
        %v4122 = vadd.f32 %v4025, %v4121
        %v4123 = vpop.f32.mrf.mxu0
        %v4124 = vpop.f32.mrf.mxu0
        %v4125 = vadd.f32 %v4028, %v4124
        %v4126 = vpop.f32.mrf.mxu0
        %4127 = vmatprep.mubr.bf16.mxu0 %v3678
        %4128 = vmatmul.mubr.bf16.gmra.mxu0 %v3677
        %v4129 = vpop.f32.mrf.mxu0
        %v4130 = vadd.f32 %v4033, %v4129
        %v4131 = vpop.f32.mrf.mxu0
        %v4132 = vpop.f32.mrf.mxu0
        %v4133 = vadd.f32 %v4036, %v4132
        %v4134 = vpop.f32.mrf.mxu0
        %4135 = vdwg.mxu0
        %4136 = vst [vmem:[%s320] sm:$0xff] %v4074
        %4137 = vst [vmem:[%s320 + $0x8] sm:$0xff] %v4077
        %4138 = vst [vmem:[%s320 + $0x10] sm:$0xff] %v4082
        %4139 = vst [vmem:[%s320 + $0x18] sm:$0xff] %v4085
        %4140 = vst [vmem:[%s320 + $0x20] sm:$0xff] %v4090
        %4141 = vst [vmem:[%s320 + $0x28] sm:$0xff] %v4093
        %4142 = vst [vmem:[%s320 + $0x30] sm:$0xff] %v4098
        %4143 = vst [vmem:[%s320 + $0x38] sm:$0xff] %v4101
        %4144 = vst [vmem:[%s320 + $0x40] sm:$0xff] %v4106
        %4145 = vst [vmem:[%s320 + $0x48] sm:$0xff] %v4109
        %4146 = vst [vmem:[%s320 + $0x50] sm:$0xff] %v4114
        %4147 = vst [vmem:[%s320 + $0x58] sm:$0xff] %v4117
        %4148 = vst [vmem:[%s320 + $0x60] sm:$0xff] %v4122
        %4149 = vst [vmem:[%s320 + $0x68] sm:$0xff] %v4125
        %4150 = vst [vmem:[%s320 + $0x70] sm:$0xff] %v4130
        %4151 = vst [vmem:[%s320 + $0x78] sm:$0xff] %v4133
        %s4152 = smul.u32 16, %s20
        %p4153 = scmp.lt.s32.totalorder %s4152, 31
        %s4154 = scalar_select %p4153, %s4152, 31
        %s4155 = smul.addr %s4154, 8
        %s4156 = scalar_lea.vmem %s7, %s4155
        // Predicated region
        $region61: #{_forward_impl.1} parent=47 // pred_check
          %p4157 = pneg %p190
        $region62: #{_forward_impl.1} parent=47 // pred_check_branch
          %4159 = sbr.rel (%p4157) target = $region64
        $region63: #{_forward_impl.1} parent=47 // pred_region
          %s4160 = smul.u32 16, %s20
        $region64: #{_forward_impl.1} parent=47 // pred_fallthru
          _
      $region48: #{_forward_impl.1} parent=5 // pred_fallthru
        _
      %p4161 = scmp.le.s32.totalorder 2, %s15
      // Predicated region
      $region65: #{_forward_impl.1} parent=5 // pred_check
        %p4162 = pneg %p4161
      $region66: #{_forward_impl.1} parent=5 // pred_check_branch
        %4164 = sbr.rel (%p4162) target = $region68
      $region67: #{_forward_impl.1} parent=5 // pred_region
        %s4165 = ssub.s32 %s15, 2
        // Predicated region
        $region69: #{_forward_impl.1} parent=67 // pred_check
          %p4166 = pneg %p196
        $region70: #{_forward_impl.1} parent=67 // pred_check_branch
          %4168 = sbr.rel (%p4166) target = $region72
        $region71: #{_forward_impl.1} parent=67 // pred_region
          %s4169 = smul.u32 16, %s21
          %p4170 = scmp.lt.s32.totalorder %s4169, 31
          %s4171 = scalar_select %p4170, %s4169, 31
          %s4172 = smul.addr %s4171, 8
          %s4173 = scalar_lea.vmem %s7, %s4172
        $region72: #{_forward_impl.1} parent=67 // pred_fallthru
          _
      $region68: #{_forward_impl.1} parent=5 // pred_fallthru
        _
    $region6: #{_forward_impl.1} parent=1 // loop_footer
      %s19 = sadd.s32 1, %s15
    $region7: #{_forward_impl.1} parent=1 // loop_footer_branch
      %14 = sbr.rel target = $region3
    $region8: #{_forward_impl.1} parent=1 // loop_exit
      _
    %4174 = vsyncpa [#allocation3], 1
    %s4175 = scalar_lea.sflag [#allocation3], 1
    %4176 = vsyncpa %s4175, 1
    %4177 = vsyncpa [#allocation5], 1

</llo_original>
